<compile_context>
chip_gen: v5e
topology: v5e:2x2
jax: 0.10.0
libtpu: 0.0.40
codegen_flags: <defaults>
</compile_context>

<pallas_src>
import functools

import jax
import jax.numpy as jnp
from jax import lax
from jax.experimental import pallas as pl
from jax.experimental.pallas import tpu as pltpu

EPS = 1e-5
LANE = 128
VMEM_LIMIT = 32 * 1024 * 1024  # modest raise over v5e default, <= v6e/v7x scoped default


def round_up(x, m):
    return (x + m - 1) // m * m


def pick_tm(m):
    if m >= 512:
        return 512
    return round_up(m, 8)


# ---------------------------------------------------------------------------
# Kernel 1: fused conv-as-matmul + bias + per-tile BN partial statistics.
#   patches: (Mp, K*CinP) bf16   w: (K*CinP, CoutP) bf16   b: (1, CoutP) f32
#   outputs: y (Mp, CoutP) f32, stats (ntiles, 8, CoutP) f32
#            stats[t, 0] = sum over valid rows of tile t, stats[t, 1] = sum of squares.
# ---------------------------------------------------------------------------
def _conv_bn_stats_kernel(p_ref, w_ref, b_ref, y_ref, stats_ref, *, tm, m_valid):
    i = pl.program_id(0)
    y = jnp.dot(p_ref[...], w_ref[...], preferred_element_type=jnp.float32)
    y = y + b_ref[...]
    y_ref[...] = y

    # Mask rows beyond the true M (padding rows would otherwise contribute "bias").
    row = i * tm + lax.broadcasted_iota(jnp.int32, (tm, 1), 0)
    ym = jnp.where(row < m_valid, y, 0.0)
    ps = jnp.sum(ym, axis=0, keepdims=True)
    pq = jnp.sum(ym * ym, axis=0, keepdims=True)
    pad = jnp.zeros((6, ps.shape[1]), jnp.float32)
    stats_ref[...] = jnp.concatenate([ps, pq, pad], axis=0)


def conv_bn_stats_call(patches, w_mat, bias, *, tm, m_valid):
    Mp, KC = patches.shape
    Cp = w_mat.shape[1]
    ntiles = Mp // tm
    return pl.pallas_call(
        functools.partial(_conv_bn_stats_kernel, tm=tm, m_valid=m_valid),
        out_shape=(jax.ShapeDtypeStruct((Mp, Cp), jnp.float32),
                   jax.ShapeDtypeStruct((ntiles, 8, Cp), jnp.float32)),
        grid_spec=pltpu.PrefetchScalarGridSpec(
            num_scalar_prefetch=0,
            grid=(ntiles,),
            in_specs=[
                pl.BlockSpec((tm, KC), lambda i: (i, 0)),
                pl.BlockSpec((KC, Cp), lambda i: (0, 0)),
                pl.BlockSpec((1, Cp), lambda i: (0, 0)),
            ],
            out_specs=[
                pl.BlockSpec((tm, Cp), lambda i: (i, 0)),
                pl.BlockSpec((None, 8, Cp), lambda i: (i, 0, 0)),
            ],
        ),
        compiler_params=pltpu.CompilerParams(
            dimension_semantics=("parallel",),
            vmem_limit_bytes=VMEM_LIMIT),
    )(patches, w_mat, bias)


# ---------------------------------------------------------------------------
# Kernel 2: tiled BN-apply + ReLU:  out = relu(y * scale + shift)
# ---------------------------------------------------------------------------
def _bn_relu_kernel(y_ref, scale_ref, shift_ref, o_ref):
    o_ref[...] = jnp.maximum(y_ref[...] * scale_ref[...] + shift_ref[...], 0.0)


def bn_relu_apply(y, scale, shift, tm):
    Mp, Cp = y.shape
    ntiles = Mp // tm
    return pl.pallas_call(
        _bn_relu_kernel,
        out_shape=jax.ShapeDtypeStruct((Mp, Cp), jnp.float32),
        grid_spec=pltpu.PrefetchScalarGridSpec(
            num_scalar_prefetch=0,
            grid=(ntiles,),
            in_specs=[
                pl.BlockSpec((tm, Cp), lambda i: (i, 0)),
                pl.BlockSpec((1, Cp), lambda i: (0, 0)),
                pl.BlockSpec((1, Cp), lambda i: (0, 0)),
            ],
            out_specs=pl.BlockSpec((tm, Cp), lambda i: (i, 0)),
        ),
        compiler_params=pltpu.CompilerParams(
            dimension_semantics=("parallel",),
            vmem_limit_bytes=VMEM_LIMIT),
    )(y, scale, shift)


# ---------------------------------------------------------------------------
# Kernel 3: fused final epilogue:
#   out = relu( (y*scale + shift) + (sc*sc_scale + sc_shift) )
# Covers both the projection shortcut (sc = shortcut conv output, its BN fused here)
# and the identity shortcut (sc = x, sc_scale = 1, sc_shift = 0).
# ---------------------------------------------------------------------------
def _bn_add_relu_kernel(y_ref, scale_ref, shift_ref, sc_ref, sc_scale_ref, sc_shift_ref, o_ref):
    main = y_ref[...] * scale_ref[...] + shift_ref[...]
    sc = sc_ref[...] * sc_scale_ref[...] + sc_shift_ref[...]
    o_ref[...] = jnp.maximum(main + sc, 0.0)


def bn_add_relu_apply(y, scale, shift, sc, sc_scale, sc_shift, tm):
    Mp, Cp = y.shape
    ntiles = Mp // tm
    return pl.pallas_call(
        _bn_add_relu_kernel,
        out_shape=jax.ShapeDtypeStruct((Mp, Cp), jnp.float32),
        grid_spec=pltpu.PrefetchScalarGridSpec(
            num_scalar_prefetch=0,
            grid=(ntiles,),
            in_specs=[
                pl.BlockSpec((tm, Cp), lambda i: (i, 0)),
                pl.BlockSpec((1, Cp), lambda i: (0, 0)),
                pl.BlockSpec((1, Cp), lambda i: (0, 0)),
                pl.BlockSpec((tm, Cp), lambda i: (i, 0)),
                pl.BlockSpec((1, Cp), lambda i: (0, 0)),
                pl.BlockSpec((1, Cp), lambda i: (0, 0)),
            ],
            out_specs=pl.BlockSpec((tm, Cp), lambda i: (i, 0)),
        ),
        compiler_params=pltpu.CompilerParams(
            dimension_semantics=("parallel",),
            vmem_limit_bytes=VMEM_LIMIT),
    )(y, scale, shift, sc, sc_scale, sc_shift)


# ---------------------------------------------------------------------------
# Glue: im2col with taps concatenated along the contraction axis (layout plumbing).
# ---------------------------------------------------------------------------
def im2col_concat(x_nhwc, kh, kw, stride, padding):
    N, H, W, C = x_nhwc.shape
    if padding:
        x_nhwc = jnp.pad(x_nhwc, ((0, 0), (padding, padding), (padding, padding), (0, 0)))
    Ho = (H + 2 * padding - kh) // stride + 1
    Wo = (W + 2 * padding - kw) // stride + 1
    cols = []
    for i in range(kh):
        for j in range(kw):
            sl = x_nhwc[:, i:i + (Ho - 1) * stride + 1:stride,
                           j:j + (Wo - 1) * stride + 1:stride, :]
            cols.append(sl.reshape(N * Ho * Wo, C))
    return jnp.concatenate(cols, axis=-1), (N, Ho, Wo)


def conv_bn(x_nhwc_p, w_oihw, b, gamma, beta, *, stride, padding, cin, cout, cin_p, cout_p):
    """x_nhwc_p: channel-padded NHWC input (.., cin_p). Returns pre-BN conv output
    (row/channel padded), plus fused BN scale/shift from batch statistics."""
    kh, kw = int(w_oihw.shape[2]), int(w_oihw.shape[3])
    patches, (N, Ho, Wo) = im2col_concat(x_nhwc_p, kh, kw, stride, padding)
    M = N * Ho * Wo
    tm = pick_tm(M)
    Mp = round_up(M, tm)
    patches = jnp.pad(patches, ((0, Mp - M), (0, 0))).astype(jnp.bfloat16)

    w_taps = jnp.transpose(w_oihw, (2, 3, 1, 0))                       # (kh,kw,Cin,Cout)
    w_taps = jnp.pad(w_taps, ((0, 0), (0, 0), (0, cin_p - cin), (0, cout_p - cout)))
    w_mat = w_taps.reshape(kh * kw * cin_p, cout_p).astype(jnp.bfloat16)
    bias = jnp.pad(b, (0, cout_p - cout)).reshape(1, cout_p).astype(jnp.float32)

    y, stats = conv_bn_stats_call(patches, w_mat, bias, tm=tm, m_valid=M)

    # Finish the tiny per-channel reduction and fold BN into scale/shift.
    s = jnp.sum(stats[:, 0, :], axis=0)
    sq = jnp.sum(stats[:, 1, :], axis=0)
    mean = s / M
    var = jnp.maximum(sq / M - mean * mean, 0.0)                       # clamp (cancellation)
    gamma_p = jnp.pad(gamma, (0, cout_p - cout)).astype(jnp.float32)
    beta_p = jnp.pad(beta, (0, cout_p - cout)).astype(jnp.float32)
    inv = gamma_p * lax.rsqrt(var + EPS)
    scale = inv.reshape(1, cout_p)
    shift = (beta_p - mean * inv).reshape(1, cout_p)
    return y, scale, shift, (N, Ho, Wo), M, Mp, tm


# ---------------------------------------------------------------------------
# ResidualBlock forward (NCHW in / NCHW out).
# ---------------------------------------------------------------------------
def residual_block_forward(x_nchw, params, *, in_channels, out_channels, stride):
    N, _, H, W = x_nchw.shape
    cin_p = round_up(in_channels, LANE)
    cout_p = round_up(out_channels, LANE)

    x = jnp.transpose(x_nchw, (0, 2, 3, 1)).astype(jnp.float32)        # NCHW -> NHWC
    x_p = jnp.pad(x, ((0, 0), (0, 0), (0, 0), (0, cin_p - in_channels)))

    # out1 = relu(bn1(conv1(x)))
    y1, sc1, sh1, (N1, Ho, Wo), M, Mp, tm = conv_bn(
        x_p, params["w1"], params["b1"], params["g1"], params["be1"],
        stride=stride, padding=1, cin=in_channels, cout=out_channels,
        cin_p=cin_p, cout_p=cout_p)
    out1 = bn_relu_apply(y1, sc1, sh1, tm)                             # (Mp, cout_p)
    out1_nhwc = out1[:M].reshape(N, Ho, Wo, cout_p)                    # padded channels are 0

    # y2 = conv2(out1) (pre-BN), with fused batch stats
    y2, sc2, sh2, _, M2, Mp2, tm2 = conv_bn(
        out1_nhwc, params["w2"], params["b2"], params["g2"], params["be2"],
        stride=1, padding=1, cin=out_channels, cout=out_channels,
        cin_p=cout_p, cout_p=cout_p)

    # shortcut: either 1x1 conv + BN (fused into the final kernel) or identity.
    if stride != 1 or in_channels != out_channels:
        ys, scs, shs, _, Ms, Mps, tms = conv_bn(
            x_p, params["ws"], params["bs"], params["gs"], params["bes"],
            stride=stride, padding=0, cin=in_channels, cout=out_channels,
            cin_p=cin_p, cout_p=cout_p)
        sc_in, sc_scale, sc_shift = ys, scs, shs
    else:
        xf = x_p.reshape(N * H * W, cin_p)
        xf = jnp.pad(xf, ((0, Mp2 - xf.shape[0]), (0, 0)))
        sc_in = xf
        sc_scale = jnp.ones((1, cout_p), jnp.float32)
        sc_shift = jnp.zeros((1, cout_p), jnp.float32)

    # out = relu(bn2(y2) + shortcut)
    out = bn_add_relu_apply(y2, sc2, sh2, sc_in, sc_scale, sc_shift, tm2)
    out = out[:M2, :out_channels].reshape(N, Ho, Wo, out_channels)
    return jnp.transpose(out, (0, 3, 1, 2))                            # NHWC -> NCHW


# ---------------------------------------------------------------------------
# Pure-JAX reference (f32) for numerical verification.
# ---------------------------------------------------------------------------
def reference_forward(x, params, *, in_channels, out_channels, stride):
    def conv(x, w, b, s, p):
        y = lax.conv_general_dilated(x, w, (s, s), [(p, p), (p, p)],
                                     dimension_numbers=("NCHW", "OIHW", "NCHW"))
        return y + b.reshape(1, -1, 1, 1)

    def bn(x, g, b):
        mean = jnp.mean(x, axis=(0, 2, 3), keepdims=True)
        var = jnp.var(x, axis=(0, 2, 3), keepdims=True)
        return (x - mean) / jnp.sqrt(var + EPS) * g.reshape(1, -1, 1, 1) + b.reshape(1, -1, 1, 1)

    out = jax.nn.relu(bn(conv(x, params["w1"], params["b1"], stride, 1), params["g1"], params["be1"]))
    out = bn(conv(out, params["w2"], params["b2"], 1, 1), params["g2"], params["be2"])
    if stride != 1 or in_channels != out_channels:
        sc = bn(conv(x, params["ws"], params["bs"], stride, 0), params["gs"], params["bes"])
    else:
        sc = x
    return jax.nn.relu(out + sc)


def make_params(key, cin, cout, stride):
    k1, k2, k3 = jax.random.split(key, 3)
    p = {
        "w1": jax.random.normal(k1, (cout, cin, 3, 3), jnp.float32) * 0.1,
        "b1": jnp.zeros((cout,), jnp.float32),
        "g1": jnp.ones((cout,), jnp.float32),
        "be1": jnp.zeros((cout,), jnp.float32),
        "w2": jax.random.normal(k2, (cout, cout, 3, 3), jnp.float32) * 0.1,
        "b2": jnp.zeros((cout,), jnp.float32),
        "g2": jnp.ones((cout,), jnp.float32),
        "be2": jnp.zeros((cout,), jnp.float32),
    }
    if stride != 1 or cin != cout:
        p.update({
            "ws": jax.random.normal(k3, (cout, cin, 1, 1), jnp.float32) * 0.1,
            "bs": jnp.zeros((cout,), jnp.float32),
            "gs": jnp.ones((cout,), jnp.float32),
            "bes": jnp.zeros((cout,), jnp.float32),
        })
    return p


if __name__ == "__main__":
    key = jax.random.PRNGKey(0)
    configs = [
        # (N, Cin, Cout, H, W, stride)
        (2, 4, 8, 16, 16, 1),   # projection shortcut (channel change)
        (2, 8, 8, 16, 16, 1),   # identity shortcut
        (2, 4, 8, 16, 16, 2),   # strided projection shortcut
    ]
    for idx, (N, Cin, Cout, H, W, stride) in enumerate(configs):
        kp, kx, key = jax.random.split(key, 3)
        params = make_params(kp, Cin, Cout, stride)
        x = jax.random.normal(kx, (N, Cin, H, W), jnp.float32)

        out = residual_block_forward(x, params, in_channels=Cin,
                                     out_channels=Cout, stride=stride)
        out = jax.block_until_ready(out)

        ref = reference_forward(x, params, in_channels=Cin,
                                out_channels=Cout, stride=stride)
        assert out.shape == (N, Cout, H // stride, W // stride), (out.shape, stride)
        # bf16 MXU inputs (f32 accumulation) => slightly looser tolerance vs f32 reference.
        max_diff = jnp.max(jnp.abs(out - ref))
        assert jnp.allclose(out, ref, atol=3e-2, rtol=3e-2), \
            f"config {idx}: max abs diff {max_diff}"

    print("KERNEL_OK")
</pallas_src>

<mosaic_0001>
module attributes {stable_mosaic.version = 11 : i64} {
  func.func @_conv_bn_stats_kernel(%arg0: i32, %arg1: memref<512x1152xbf16, #tpu.memory_space<vmem>>, %arg2: memref<1152x128xbf16, #tpu.memory_space<vmem>>, %arg3: memref<1x128xf32, #tpu.memory_space<vmem>>, %arg4: memref<512x128xf32, #tpu.memory_space<vmem>>, %arg5: memref<1x8x128xf32, #tpu.memory_space<vmem>>) attributes {dimension_semantics = [#tpu.dimension_semantics<parallel>], iteration_bounds = array<i64: 1>, scalar_prefetch = 0 : i64, scratch_operands = 0 : i64, tpu.core_type = #tpu.core_type<tc>, window_params = [{transform_indices = @transform_0, window_bounds = array<i64: 512, 1152>}, {pipeline_mode = #tpu.pipeline_mode<synchronous>, transform_indices = @transform_1, window_bounds = array<i64: 1152, 128>}, {pipeline_mode = #tpu.pipeline_mode<synchronous>, transform_indices = @transform_2, window_bounds = array<i64: 1, 128>}, {transform_indices = @transform_3, window_bounds = array<i64: 512, 128>}, {transform_indices = @transform_4, window_bounds = array<i64: 1, 8, 128>}]} {
    %c0 = arith.constant 0 : index
    %c0_0 = arith.constant 0 : index
    %0 = vector.load %arg1[%c0, %c0_0] : memref<512x1152xbf16, #tpu.memory_space<vmem>>, vector<512x1152xbf16>
    %c0_1 = arith.constant 0 : index
    %c0_2 = arith.constant 0 : index
    %1 = vector.load %arg2[%c0_1, %c0_2] : memref<1152x128xbf16, #tpu.memory_space<vmem>>, vector<1152x128xbf16>
    %cst = arith.constant dense<0.000000e+00> : vector<512x128xf32>
    %2 = tpu.matmul %0, %1, %cst {dimension_numbers = #tpu.dot_dimension_numbers<[1], [0], [0], [1], [0, 0, 1, 1], [], []>} : vector<512x1152xbf16>, vector<1152x128xbf16>, vector<512x128xf32> -> vector<512x128xf32>
    %c0_3 = arith.constant 0 : index
    %c0_4 = arith.constant 0 : index
    %3 = vector.load %arg3[%c0_3, %c0_4] : memref<1x128xf32, #tpu.memory_space<vmem>>, vector<1x128xf32>
    %4 = vector.broadcast %3 : vector<1x128xf32> to vector<512x128xf32>
    %5 = arith.addf %2, %4 : vector<512x128xf32>
    %c0_5 = arith.constant 0 : index
    %c0_6 = arith.constant 0 : index
    %6 = vector.load %arg4[%c0_5, %c0_6] : memref<512x128xf32, #tpu.memory_space<vmem>>, vector<512x128xf32>
    tpu.vector_store %arg4[%c0_5, %c0_6], %5 {strides = array<i32>} : memref<512x128xf32, #tpu.memory_space<vmem>>, vector<512x128xf32>,
    %c512_i32 = arith.constant 512 : i32
    %7 = arith.muli %arg0, %c512_i32 : i32
    %8 = tpu.iota {dimensions = array<i32: 0>} : vector<512x1xi32>
    %9 = vector.broadcast %7 : i32 to vector<512x1xi32>
    %10 = arith.addi %9, %8 : vector<512x1xi32>
    %c512_i32_7 = arith.constant 512 : i32
    %11 = vector.broadcast %c512_i32_7 : i32 to vector<512x1xi32>
    %12 = arith.cmpi slt, %10, %11 : vector<512x1xi32>
    %cst_8 = arith.constant 0.000000e+00 : f32
    %13 = vector.shape_cast %12 : vector<512x1xi1> to vector<512x1xi1>
    %14 = vector.broadcast %13 : vector<512x1xi1> to vector<512x128xi1>
    %15 = vector.broadcast %cst_8 : f32 to vector<512x128xf32>
    %16 = arith.select %14, %5, %15 : vector<512x128xi1>, vector<512x128xf32>
    %cst_9 = arith.constant dense<0.000000e+00> : vector<128xf32>
    %17 = vector.multi_reduction <add>, %16, %cst_9 [0] : vector<512x128xf32> to vector<128xf32>
    %18 = vector.shape_cast %17 : vector<128xf32> to vector<1x128xf32>
    %19 = arith.mulf %16, %16 : vector<512x128xf32>
    %cst_10 = arith.constant dense<0.000000e+00> : vector<128xf32>
    %20 = vector.multi_reduction <add>, %19, %cst_10 [0] : vector<512x128xf32> to vector<128xf32>
    %21 = vector.shape_cast %20 : vector<128xf32> to vector<1x128xf32>
    %cst_11 = arith.constant 0.000000e+00 : f32
    %22 = vector.broadcast %cst_11 : f32 to vector<6x128xf32>
    %23 = tpu.concatenate %18, %21, %22 in 0 : vector<1x128xf32>, vector<1x128xf32>, vector<6x128xf32> -> vector<8x128xf32>
    %c0_12 = arith.constant 0 : index
    %c0_13 = arith.constant 0 : index
    %c0_14 = arith.constant 0 : index
    %24 = vector.load %arg5[%c0_12, %c0_13, %c0_14] : memref<1x8x128xf32, #tpu.memory_space<vmem>>, vector<1x8x128xf32>
    %25 = vector.shape_cast %24 : vector<1x8x128xf32> to vector<8x128xf32>
    %26 = vector.shape_cast %23 : vector<8x128xf32> to vector<1x8x128xf32>
    tpu.vector_store %arg5[%c0_12, %c0_13, %c0_14], %26 {strides = array<i32>} : memref<1x8x128xf32, #tpu.memory_space<vmem>>, vector<1x8x128xf32>,
    return
  }
  func.func @transform_0(%arg0: i32) -> (i32, i32) {
    %c0_i32 = arith.constant 0 : i32
    %c0_i32_0 = arith.constant 0 : i32
    return %arg0, %c0_i32 : i32, i32
  }
  func.func @transform_1(%arg0: i32) -> (i32, i32) {
    %c0_i32 = arith.constant 0 : i32
    %c0_i32_0 = arith.constant 0 : i32
    %c0_i32_1 = arith.constant 0 : i32
    return %c0_i32, %c0_i32_0 : i32, i32
  }
  func.func @transform_2(%arg0: i32) -> (i32, i32) {
    %c0_i32 = arith.constant 0 : i32
    %c0_i32_0 = arith.constant 0 : i32
    %c0_i32_1 = arith.constant 0 : i32
    return %c0_i32, %c0_i32_0 : i32, i32
  }
  func.func @transform_3(%arg0: i32) -> (i32, i32) {
    %c0_i32 = arith.constant 0 : i32
    %c0_i32_0 = arith.constant 0 : i32
    return %arg0, %c0_i32 : i32, i32
  }
  func.func @transform_4(%arg0: i32) -> (i32, i32, i32) {
    %c0_i32 = arith.constant 0 : i32
    %c0_i32_0 = arith.constant 0 : i32
    %c0_i32_1 = arith.constant 0 : i32
    return %arg0, %c0_i32, %c0_i32_0 : i32, i32, i32
  }
}

</mosaic_0001>

<llo_original>
// kernel: tpu_custom_call.1
$region0: #{tpu_custom_call.1}
  #allocation0 [shape = 'u32[]', space=smem, size = 0x4, offset = 0x4, fixed_abs, tag = 'smem constant byte address 0x4 - core index']
  #allocation1 [shape = 'u32[72,128]{1,0:T(1,128)}', space=vmem, size = 0x9000, scoped, tag = 'internal scratch']
  %s0 = inlined_call_operand.hbm [shape: bf16[512,1152], index: 0, kind: input, shape index: {}]
  %s1 = inlined_call_operand.hbm [shape: bf16[1152,128], index: 1, kind: input, shape index: {}]
  %s2 = inlined_call_operand.hbm [shape: f32[1,128], index: 2, kind: input, shape index: {}]
  %s3 = inlined_call_operand.hbm [shape: f32[512,128], index: 3, kind: output, shape index: {0}]
  %s4 = inlined_call_operand.hbm [shape: f32[1,8,128], index: 4, kind: output, shape index: {1}]
  %5 = xla_tuple %s3, %s4
  %s6 = sld [smem:[#allocation0]]
  $region42: #{tpu_custom_call.1} parent=0
    _
  %s8 = ssub.s32 1, %s6
  %s9 = scalar_select 0, %s8, %s6
  $region1: #{tpu_custom_call.1} parent=0
    #allocation2 [shape = 'u8[1179648]{0}', space=vmem, size = 0x120000, scoped, tag = 'input window, operand 0, single buffered']
    #allocation3 [shape = 's32[1]{0}', space=sflag, size = 0x4, scoped, tag = 'scoped memory for tpu_custom_call.1']
    #allocation4 [shape = 's32[1]{0}', space=sflag, size = 0x4, scoped, tag = 'scoped memory for tpu_custom_call.1']
    #allocation5 [shape = 'u8[294912]{0}', space=vmem, size = 0x48000, scoped, tag = 'input window, operand 1, single buffered']
    #allocation6 [shape = 's32[1]{0}', space=sflag, size = 0x4, scoped, tag = 'scoped memory for tpu_custom_call.1']
    #allocation7 [shape = 'u8[512]{0}', space=vmem, size = 0x400, scoped, tag = 'input window, operand 2, single buffered']
    #allocation8 [shape = 'u8[262144]{0}', space=vmem, size = 0x40000, scoped, tag = 'output window, operand 0, single buffered']
    #allocation9 [shape = 'u8[4096]{0}', space=vmem, size = 0x1000, scoped, tag = 'output window, operand 1, single buffered']
    #allocation10 [shape = 's32[1]{0}', space=sflag, size = 0x4, scoped, tag = 'scoped memory for tpu_custom_call.1']
    %10 = vsyncpa [#allocation3], 0
    %11 = vsyncpa [#allocation6], 0
    %12 = vsyncpa [#allocation4], 0
    %13 = vsyncpa [#allocation10], 0
    // Predicated region
    $region2: #{tpu_custom_call.1} parent=1 // pred_check
      _
    $region3: #{tpu_custom_call.1} parent=1 // pred_check_branch
      %15 = sbr.rel (0) target = $region5
    $region4: #{tpu_custom_call.1} parent=1 // pred_region
      %17 = vsyncadd [#allocation3], 0
      %s18 = sshll.u32 %s0, 4
      %s19 = int_to_ptr.hbm [resolvable:$true] %s18
      %s20 = sshll.u32 [#allocation2], 4
      %s21 = int_to_ptr.vmem [resolvable:$true] %s20
      %26 = dma.hbm_to_vmem [thread:$0]  %s19, 36864, %s21, [#allocation3], 576, 576, 36
    $region5: #{tpu_custom_call.1} parent=1 // pred_fallthru
      _
    // Predicated region
    $region6: #{tpu_custom_call.1} parent=1 // pred_check
      _
    $region7: #{tpu_custom_call.1} parent=1 // pred_check_branch
      %28 = sbr.rel (0) target = $region9
    $region8: #{tpu_custom_call.1} parent=1 // pred_region
      %30 = vsyncadd [#allocation6], 0
      %s31 = sshll.u32 %s1, 4
      %s32 = int_to_ptr.hbm [resolvable:$true] %s31
      %s33 = sshll.u32 [#allocation5], 4
      %s34 = int_to_ptr.vmem [resolvable:$true] %s33
      %39 = dma.hbm_to_vmem [thread:$0]  %s32, 9216, %s34, [#allocation6], 64, 64, 4
    $region9: #{tpu_custom_call.1} parent=1 // pred_fallthru
      _
    // Predicated region
    $region10: #{tpu_custom_call.1} parent=1 // pred_check
      _
    $region11: #{tpu_custom_call.1} parent=1 // pred_check_branch
      %41 = sbr.rel (0) target = $region13
    $region12: #{tpu_custom_call.1} parent=1 // pred_region
      %43 = vsyncadd [#allocation6], 0
      %s45 = sshll.u32 %s2, 4
      %s46 = int_to_ptr.hbm [resolvable:$true] %s45
      %s47 = sshll.u32 [#allocation7], 4
      %s48 = int_to_ptr.vmem [resolvable:$true] %s47
      %50 = dma.hbm_to_vmem [thread:$0]  %s46, 16, %s48, [#allocation6]
    $region13: #{tpu_custom_call.1} parent=1 // pred_fallthru
      _
    // Predicated region
    $region14: #{tpu_custom_call.1} parent=1 // pred_check
      _
    $region15: #{tpu_custom_call.1} parent=1 // pred_check_branch
      %52 = sbr.rel (0) target = $region17
    $region16: #{tpu_custom_call.1} parent=1 // pred_region
      %54 = dma.done [#allocation3], 36864
    $region17: #{tpu_custom_call.1} parent=1 // pred_fallthru
      _
    // Predicated region
    $region18: #{tpu_custom_call.1} parent=1 // pred_check
      _
    $region19: #{tpu_custom_call.1} parent=1 // pred_check_branch
      %56 = sbr.rel (0) target = $region21
    $region20: #{tpu_custom_call.1} parent=1 // pred_region
      %58 = dma.done [#allocation6], 9216
    $region21: #{tpu_custom_call.1} parent=1 // pred_fallthru
      _
    // Predicated region
    $region22: #{tpu_custom_call.1} parent=1 // pred_check
      _
    $region23: #{tpu_custom_call.1} parent=1 // pred_check_branch
      %60 = sbr.rel (0) target = $region25
    $region24: #{tpu_custom_call.1} parent=1 // pred_region
      %62 = dma.done [#allocation6], 16
    $region25: #{tpu_custom_call.1} parent=1 // pred_fallthru
      _
    %v63 = vld [vmem:[#allocation2] sm:$0xff]
    %v64 = vld [vmem:[#allocation2 + $0x8] sm:$0xff]
    %v65 = vld [vmem:[#allocation2 + $0x10] sm:$0xff]
    %v66 = vld [vmem:[#allocation2 + $0x18] sm:$0xff]
    %v67 = vld [vmem:[#allocation2 + $0x20] sm:$0xf]
    %v68 = vld [vmem:[#allocation2 + $0x24] sm:$0xff]
    %v69 = vld [vmem:[#allocation2 + $0x2c] sm:$0xff]
    %v70 = vld [vmem:[#allocation2 + $0x34] sm:$0xff]
    %v71 = vld [vmem:[#allocation2 + $0x3c] sm:$0xff]
    %v72 = vld [vmem:[#allocation2 + $0x44] sm:$0xf]
    %v73 = vld [vmem:[#allocation2 + $0x48] sm:$0xff]
    %v74 = vld [vmem:[#allocation2 + $0x50] sm:$0xff]
    %v75 = vld [vmem:[#allocation2 + $0x58] sm:$0xff]
    %v76 = vld [vmem:[#allocation2 + $0x60] sm:$0xff]
    %v77 = vld [vmem:[#allocation2 + $0x68] sm:$0xf]
    %v78 = vld [vmem:[#allocation2 + $0x6c] sm:$0xff]
    %v79 = vld [vmem:[#allocation2 + $0x74] sm:$0xff]
    %v80 = vld [vmem:[#allocation2 + $0x7c] sm:$0xff]
    %v81 = vld [vmem:[#allocation2 + $0x84] sm:$0xff]
    %v82 = vld [vmem:[#allocation2 + $0x8c] sm:$0xf]
    %v83 = vld [vmem:[#allocation2 + $0x90] sm:$0xff]
    %v84 = vld [vmem:[#allocation2 + $0x98] sm:$0xff]
    %v85 = vld [vmem:[#allocation2 + $0xa0] sm:$0xff]
    %v86 = vld [vmem:[#allocation2 + $0xa8] sm:$0xff]
    %v87 = vld [vmem:[#allocation2 + $0xb0] sm:$0xf]
    %v88 = vld [vmem:[#allocation2 + $0xb4] sm:$0xff]
    %v89 = vld [vmem:[#allocation2 + $0xbc] sm:$0xff]
    %v90 = vld [vmem:[#allocation2 + $0xc4] sm:$0xff]
    %v91 = vld [vmem:[#allocation2 + $0xcc] sm:$0xff]
    %v92 = vld [vmem:[#allocation2 + $0xd4] sm:$0xf]
    %v93 = vld [vmem:[#allocation2 + $0xd8] sm:$0xff]
    %v94 = vld [vmem:[#allocation2 + $0xe0] sm:$0xff]
    %v95 = vld [vmem:[#allocation2 + $0xe8] sm:$0xff]
    %v96 = vld [vmem:[#allocation2 + $0xf0] sm:$0xff]
    %v97 = vld [vmem:[#allocation2 + $0xf8] sm:$0xf]
    %v98 = vld [vmem:[#allocation2 + $0xfc] sm:$0xff]
    %v99 = vld [vmem:[#allocation2 + $0x104] sm:$0xff]
    %v100 = vld [vmem:[#allocation2 + $0x10c] sm:$0xff]
    %v101 = vld [vmem:[#allocation2 + $0x114] sm:$0xff]
    %v102 = vld [vmem:[#allocation2 + $0x11c] sm:$0xf]
    %v103 = vld [vmem:[#allocation2 + $0x120] sm:$0xff]
    %v104 = vld [vmem:[#allocation2 + $0x128] sm:$0xff]
    %v105 = vld [vmem:[#allocation2 + $0x130] sm:$0xff]
    %v106 = vld [vmem:[#allocation2 + $0x138] sm:$0xff]
    %v107 = vld [vmem:[#allocation2 + $0x140] sm:$0xf]
    %v108 = vld [vmem:[#allocation2 + $0x144] sm:$0xff]
    %v109 = vld [vmem:[#allocation2 + $0x14c] sm:$0xff]
    %v110 = vld [vmem:[#allocation2 + $0x154] sm:$0xff]
    %v111 = vld [vmem:[#allocation2 + $0x15c] sm:$0xff]
    %v112 = vld [vmem:[#allocation2 + $0x164] sm:$0xf]
    %v113 = vld [vmem:[#allocation2 + $0x168] sm:$0xff]
    %v114 = vld [vmem:[#allocation2 + $0x170] sm:$0xff]
    %v115 = vld [vmem:[#allocation2 + $0x178] sm:$0xff]
    %v116 = vld [vmem:[#allocation2 + $0x180] sm:$0xff]
    %v117 = vld [vmem:[#allocation2 + $0x188] sm:$0xf]
    %v118 = vld [vmem:[#allocation2 + $0x18c] sm:$0xff]
    %v119 = vld [vmem:[#allocation2 + $0x194] sm:$0xff]
    %v120 = vld [vmem:[#allocation2 + $0x19c] sm:$0xff]
    %v121 = vld [vmem:[#allocation2 + $0x1a4] sm:$0xff]
    %v122 = vld [vmem:[#allocation2 + $0x1ac] sm:$0xf]
    %v123 = vld [vmem:[#allocation2 + $0x1b0] sm:$0xff]
    %v124 = vld [vmem:[#allocation2 + $0x1b8] sm:$0xff]
    %v125 = vld [vmem:[#allocation2 + $0x1c0] sm:$0xff]
    %v126 = vld [vmem:[#allocation2 + $0x1c8] sm:$0xff]
    %v127 = vld [vmem:[#allocation2 + $0x1d0] sm:$0xf]
    %v128 = vld [vmem:[#allocation2 + $0x1d4] sm:$0xff]
    %v129 = vld [vmem:[#allocation2 + $0x1dc] sm:$0xff]
    %v130 = vld [vmem:[#allocation2 + $0x1e4] sm:$0xff]
    %v131 = vld [vmem:[#allocation2 + $0x1ec] sm:$0xff]
    %v132 = vld [vmem:[#allocation2 + $0x1f4] sm:$0xf]
    %v133 = vld [vmem:[#allocation2 + $0x1f8] sm:$0xff]
    %v134 = vld [vmem:[#allocation2 + $0x200] sm:$0xff]
    %v135 = vld [vmem:[#allocation2 + $0x208] sm:$0xff]
    %v136 = vld [vmem:[#allocation2 + $0x210] sm:$0xff]
    %v137 = vld [vmem:[#allocation2 + $0x218] sm:$0xf]
    %v138 = vld [vmem:[#allocation2 + $0x21c] sm:$0xff]
    %v139 = vld [vmem:[#allocation2 + $0x224] sm:$0xff]
    %v140 = vld [vmem:[#allocation2 + $0x22c] sm:$0xff]
    %v141 = vld [vmem:[#allocation2 + $0x234] sm:$0xff]
    %v142 = vld [vmem:[#allocation2 + $0x23c] sm:$0xf]
    %v143 = vld [vmem:[#allocation2 + $0x240] sm:$0xff]
    %v144 = vld [vmem:[#allocation2 + $0x248] sm:$0xff]
    %v145 = vld [vmem:[#allocation2 + $0x250] sm:$0xff]
    %v146 = vld [vmem:[#allocation2 + $0x258] sm:$0xff]
    %v147 = vld [vmem:[#allocation2 + $0x260] sm:$0xf]
    %v148 = vld [vmem:[#allocation2 + $0x264] sm:$0xff]
    %v149 = vld [vmem:[#allocation2 + $0x26c] sm:$0xff]
    %v150 = vld [vmem:[#allocation2 + $0x274] sm:$0xff]
    %v151 = vld [vmem:[#allocation2 + $0x27c] sm:$0xff]
    %v152 = vld [vmem:[#allocation2 + $0x284] sm:$0xf]
    %v153 = vld [vmem:[#allocation2 + $0x288] sm:$0xff]
    %v154 = vld [vmem:[#allocation2 + $0x290] sm:$0xff]
    %v155 = vld [vmem:[#allocation2 + $0x298] sm:$0xff]
    %v156 = vld [vmem:[#allocation2 + $0x2a0] sm:$0xff]
    %v157 = vld [vmem:[#allocation2 + $0x2a8] sm:$0xf]
    %v158 = vld [vmem:[#allocation2 + $0x2ac] sm:$0xff]
    %v159 = vld [vmem:[#allocation2 + $0x2b4] sm:$0xff]
    %v160 = vld [vmem:[#allocation2 + $0x2bc] sm:$0xff]
    %v161 = vld [vmem:[#allocation2 + $0x2c4] sm:$0xff]
    %v162 = vld [vmem:[#allocation2 + $0x2cc] sm:$0xf]
    %v163 = vld [vmem:[#allocation2 + $0x2d0] sm:$0xff]
    %v164 = vld [vmem:[#allocation2 + $0x2d8] sm:$0xff]
    %v165 = vld [vmem:[#allocation2 + $0x2e0] sm:$0xff]
    %v166 = vld [vmem:[#allocation2 + $0x2e8] sm:$0xff]
    %v167 = vld [vmem:[#allocation2 + $0x2f0] sm:$0xf]
    %v168 = vld [vmem:[#allocation2 + $0x2f4] sm:$0xff]
    %v169 = vld [vmem:[#allocation2 + $0x2fc] sm:$0xff]
    %v170 = vld [vmem:[#allocation2 + $0x304] sm:$0xff]
    %v171 = vld [vmem:[#allocation2 + $0x30c] sm:$0xff]
    %v172 = vld [vmem:[#allocation2 + $0x314] sm:$0xf]
    %v173 = vld [vmem:[#allocation2 + $0x318] sm:$0xff]
    %v174 = vld [vmem:[#allocation2 + $0x320] sm:$0xff]
    %v175 = vld [vmem:[#allocation2 + $0x328] sm:$0xff]
    %v176 = vld [vmem:[#allocation2 + $0x330] sm:$0xff]
    %v177 = vld [vmem:[#allocation2 + $0x338] sm:$0xf]
    %v178 = vld [vmem:[#allocation2 + $0x33c] sm:$0xff]
    %v179 = vld [vmem:[#allocation2 + $0x344] sm:$0xff]
    %v180 = vld [vmem:[#allocation2 + $0x34c] sm:$0xff]
    %v181 = vld [vmem:[#allocation2 + $0x354] sm:$0xff]
    %v182 = vld [vmem:[#allocation2 + $0x35c] sm:$0xf]
    %v183 = vld [vmem:[#allocation2 + $0x360] sm:$0xff]
    %v184 = vld [vmem:[#allocation2 + $0x368] sm:$0xff]
    %v185 = vld [vmem:[#allocation2 + $0x370] sm:$0xff]
    %v186 = vld [vmem:[#allocation2 + $0x378] sm:$0xff]
    %v187 = vld [vmem:[#allocation2 + $0x380] sm:$0xf]
    %v188 = vld [vmem:[#allocation2 + $0x384] sm:$0xff]
    %v189 = vld [vmem:[#allocation2 + $0x38c] sm:$0xff]
    %v190 = vld [vmem:[#allocation2 + $0x394] sm:$0xff]
    %v191 = vld [vmem:[#allocation2 + $0x39c] sm:$0xff]
    %v192 = vld [vmem:[#allocation2 + $0x3a4] sm:$0xf]
    %v193 = vld [vmem:[#allocation2 + $0x3a8] sm:$0xff]
    %v194 = vld [vmem:[#allocation2 + $0x3b0] sm:$0xff]
    %v195 = vld [vmem:[#allocation2 + $0x3b8] sm:$0xff]
    %v196 = vld [vmem:[#allocation2 + $0x3c0] sm:$0xff]
    %v197 = vld [vmem:[#allocation2 + $0x3c8] sm:$0xf]
    %v198 = vld [vmem:[#allocation2 + $0x3cc] sm:$0xff]
    %v199 = vld [vmem:[#allocation2 + $0x3d4] sm:$0xff]
    %v200 = vld [vmem:[#allocation2 + $0x3dc] sm:$0xff]
    %v201 = vld [vmem:[#allocation2 + $0x3e4] sm:$0xff]
    %v202 = vld [vmem:[#allocation2 + $0x3ec] sm:$0xf]
    %v203 = vld [vmem:[#allocation2 + $0x3f0] sm:$0xff]
    %v204 = vld [vmem:[#allocation2 + $0x3f8] sm:$0xff]
    %v205 = vld [vmem:[#allocation2 + $0x400] sm:$0xff]
    %v206 = vld [vmem:[#allocation2 + $0x408] sm:$0xff]
    %v207 = vld [vmem:[#allocation2 + $0x410] sm:$0xf]
    %v208 = vld [vmem:[#allocation2 + $0x414] sm:$0xff]
    %v209 = vld [vmem:[#allocation2 + $0x41c] sm:$0xff]
    %v210 = vld [vmem:[#allocation2 + $0x424] sm:$0xff]
    %v211 = vld [vmem:[#allocation2 + $0x42c] sm:$0xff]
    %v212 = vld [vmem:[#allocation2 + $0x434] sm:$0xf]
    %v213 = vld [vmem:[#allocation2 + $0x438] sm:$0xff]
    %v214 = vld [vmem:[#allocation2 + $0x440] sm:$0xff]
    %v215 = vld [vmem:[#allocation2 + $0x448] sm:$0xff]
    %v216 = vld [vmem:[#allocation2 + $0x450] sm:$0xff]
    %v217 = vld [vmem:[#allocation2 + $0x458] sm:$0xf]
    %v218 = vld [vmem:[#allocation2 + $0x45c] sm:$0xff]
    %v219 = vld [vmem:[#allocation2 + $0x464] sm:$0xff]
    %v220 = vld [vmem:[#allocation2 + $0x46c] sm:$0xff]
    %v221 = vld [vmem:[#allocation2 + $0x474] sm:$0xff]
    %v222 = vld [vmem:[#allocation2 + $0x47c] sm:$0xf]
    %v223 = vld [vmem:[#allocation2 + $0x480] sm:$0xff]
    %v224 = vld [vmem:[#allocation2 + $0x488] sm:$0xff]
    %v225 = vld [vmem:[#allocation2 + $0x490] sm:$0xff]
    %v226 = vld [vmem:[#allocation2 + $0x498] sm:$0xff]
    %v227 = vld [vmem:[#allocation2 + $0x4a0] sm:$0xf]
    %v228 = vld [vmem:[#allocation2 + $0x4a4] sm:$0xff]
    %v229 = vld [vmem:[#allocation2 + $0x4ac] sm:$0xff]
    %v230 = vld [vmem:[#allocation2 + $0x4b4] sm:$0xff]
    %v231 = vld [vmem:[#allocation2 + $0x4bc] sm:$0xff]
    %v232 = vld [vmem:[#allocation2 + $0x4c4] sm:$0xf]
    %v233 = vld [vmem:[#allocation2 + $0x4c8] sm:$0xff]
    %v234 = vld [vmem:[#allocation2 + $0x4d0] sm:$0xff]
    %v235 = vld [vmem:[#allocation2 + $0x4d8] sm:$0xff]
    %v236 = vld [vmem:[#allocation2 + $0x4e0] sm:$0xff]
    %v237 = vld [vmem:[#allocation2 + $0x4e8] sm:$0xf]
    %v238 = vld [vmem:[#allocation2 + $0x4ec] sm:$0xff]
    %v239 = vld [vmem:[#allocation2 + $0x4f4] sm:$0xff]
    %v240 = vld [vmem:[#allocation2 + $0x4fc] sm:$0xff]
    %v241 = vld [vmem:[#allocation2 + $0x504] sm:$0xff]
    %v242 = vld [vmem:[#allocation2 + $0x50c] sm:$0xf]
    %v243 = vld [vmem:[#allocation2 + $0x510] sm:$0xff]
    %v244 = vld [vmem:[#allocation2 + $0x518] sm:$0xff]
    %v245 = vld [vmem:[#allocation2 + $0x520] sm:$0xff]
    %v246 = vld [vmem:[#allocation2 + $0x528] sm:$0xff]
    %v247 = vld [vmem:[#allocation2 + $0x530] sm:$0xf]
    %v248 = vld [vmem:[#allocation2 + $0x534] sm:$0xff]
    %v249 = vld [vmem:[#allocation2 + $0x53c] sm:$0xff]
    %v250 = vld [vmem:[#allocation2 + $0x544] sm:$0xff]
    %v251 = vld [vmem:[#allocation2 + $0x54c] sm:$0xff]
    %v252 = vld [vmem:[#allocation2 + $0x554] sm:$0xf]
    %v253 = vld [vmem:[#allocation2 + $0x558] sm:$0xff]
    %v254 = vld [vmem:[#allocation2 + $0x560] sm:$0xff]
    %v255 = vld [vmem:[#allocation2 + $0x568] sm:$0xff]
    %v256 = vld [vmem:[#allocation2 + $0x570] sm:$0xff]
    %v257 = vld [vmem:[#allocation2 + $0x578] sm:$0xf]
    %v258 = vld [vmem:[#allocation2 + $0x57c] sm:$0xff]
    %v259 = vld [vmem:[#allocation2 + $0x584] sm:$0xff]
    %v260 = vld [vmem:[#allocation2 + $0x58c] sm:$0xff]
    %v261 = vld [vmem:[#allocation2 + $0x594] sm:$0xff]
    %v262 = vld [vmem:[#allocation2 + $0x59c] sm:$0xf]
    %v263 = vld [vmem:[#allocation2 + $0x5a0] sm:$0xff]
    %v264 = vld [vmem:[#allocation2 + $0x5a8] sm:$0xff]
    %v265 = vld [vmem:[#allocation2 + $0x5b0] sm:$0xff]
    %v266 = vld [vmem:[#allocation2 + $0x5b8] sm:$0xff]
    %v267 = vld [vmem:[#allocation2 + $0x5c0] sm:$0xf]
    %v268 = vld [vmem:[#allocation2 + $0x5c4] sm:$0xff]
    %v269 = vld [vmem:[#allocation2 + $0x5cc] sm:$0xff]
    %v270 = vld [vmem:[#allocation2 + $0x5d4] sm:$0xff]
    %v271 = vld [vmem:[#allocation2 + $0x5dc] sm:$0xff]
    %v272 = vld [vmem:[#allocation2 + $0x5e4] sm:$0xf]
    %v273 = vld [vmem:[#allocation2 + $0x5e8] sm:$0xff]
    %v274 = vld [vmem:[#allocation2 + $0x5f0] sm:$0xff]
    %v275 = vld [vmem:[#allocation2 + $0x5f8] sm:$0xff]
    %v276 = vld [vmem:[#allocation2 + $0x600] sm:$0xff]
    %v277 = vld [vmem:[#allocation2 + $0x608] sm:$0xf]
    %v278 = vld [vmem:[#allocation2 + $0x60c] sm:$0xff]
    %v279 = vld [vmem:[#allocation2 + $0x614] sm:$0xff]
    %v280 = vld [vmem:[#allocation2 + $0x61c] sm:$0xff]
    %v281 = vld [vmem:[#allocation2 + $0x624] sm:$0xff]
    %v282 = vld [vmem:[#allocation2 + $0x62c] sm:$0xf]
    %v283 = vld [vmem:[#allocation2 + $0x630] sm:$0xff]
    %v284 = vld [vmem:[#allocation2 + $0x638] sm:$0xff]
    %v285 = vld [vmem:[#allocation2 + $0x640] sm:$0xff]
    %v286 = vld [vmem:[#allocation2 + $0x648] sm:$0xff]
    %v287 = vld [vmem:[#allocation2 + $0x650] sm:$0xf]
    %v288 = vld [vmem:[#allocation2 + $0x654] sm:$0xff]
    %v289 = vld [vmem:[#allocation2 + $0x65c] sm:$0xff]
    %v290 = vld [vmem:[#allocation2 + $0x664] sm:$0xff]
    %v291 = vld [vmem:[#allocation2 + $0x66c] sm:$0xff]
    %v292 = vld [vmem:[#allocation2 + $0x674] sm:$0xf]
    %v293 = vld [vmem:[#allocation2 + $0x678] sm:$0xff]
    %v294 = vld [vmem:[#allocation2 + $0x680] sm:$0xff]
    %v295 = vld [vmem:[#allocation2 + $0x688] sm:$0xff]
    %v296 = vld [vmem:[#allocation2 + $0x690] sm:$0xff]
    %v297 = vld [vmem:[#allocation2 + $0x698] sm:$0xf]
    %v298 = vld [vmem:[#allocation2 + $0x69c] sm:$0xff]
    %v299 = vld [vmem:[#allocation2 + $0x6a4] sm:$0xff]
    %v300 = vld [vmem:[#allocation2 + $0x6ac] sm:$0xff]
    %v301 = vld [vmem:[#allocation2 + $0x6b4] sm:$0xff]
    %v302 = vld [vmem:[#allocation2 + $0x6bc] sm:$0xf]
    %v303 = vld [vmem:[#allocation2 + $0x6c0] sm:$0xff]
    %v304 = vld [vmem:[#allocation2 + $0x6c8] sm:$0xff]
    %v305 = vld [vmem:[#allocation2 + $0x6d0] sm:$0xff]
    %v306 = vld [vmem:[#allocation2 + $0x6d8] sm:$0xff]
    %v307 = vld [vmem:[#allocation2 + $0x6e0] sm:$0xf]
    %v308 = vld [vmem:[#allocation2 + $0x6e4] sm:$0xff]
    %v309 = vld [vmem:[#allocation2 + $0x6ec] sm:$0xff]
    %v310 = vld [vmem:[#allocation2 + $0x6f4] sm:$0xff]
    %v311 = vld [vmem:[#allocation2 + $0x6fc] sm:$0xff]
    %v312 = vld [vmem:[#allocation2 + $0x704] sm:$0xf]
    %v313 = vld [vmem:[#allocation2 + $0x708] sm:$0xff]
    %v314 = vld [vmem:[#allocation2 + $0x710] sm:$0xff]
    %v315 = vld [vmem:[#allocation2 + $0x718] sm:$0xff]
    %v316 = vld [vmem:[#allocation2 + $0x720] sm:$0xff]
    %v317 = vld [vmem:[#allocation2 + $0x728] sm:$0xf]
    %v318 = vld [vmem:[#allocation2 + $0x72c] sm:$0xff]
    %v319 = vld [vmem:[#allocation2 + $0x734] sm:$0xff]
    %v320 = vld [vmem:[#allocation2 + $0x73c] sm:$0xff]
    %v321 = vld [vmem:[#allocation2 + $0x744] sm:$0xff]
    %v322 = vld [vmem:[#allocation2 + $0x74c] sm:$0xf]
    %v323 = vld [vmem:[#allocation2 + $0x750] sm:$0xff]
    %v324 = vld [vmem:[#allocation2 + $0x758] sm:$0xff]
    %v325 = vld [vmem:[#allocation2 + $0x760] sm:$0xff]
    %v326 = vld [vmem:[#allocation2 + $0x768] sm:$0xff]
    %v327 = vld [vmem:[#allocation2 + $0x770] sm:$0xf]
    %v328 = vld [vmem:[#allocation2 + $0x774] sm:$0xff]
    %v329 = vld [vmem:[#allocation2 + $0x77c] sm:$0xff]
    %v330 = vld [vmem:[#allocation2 + $0x784] sm:$0xff]
    %v331 = vld [vmem:[#allocation2 + $0x78c] sm:$0xff]
    %v332 = vld [vmem:[#allocation2 + $0x794] sm:$0xf]
    %v333 = vld [vmem:[#allocation2 + $0x798] sm:$0xff]
    %v334 = vld [vmem:[#allocation2 + $0x7a0] sm:$0xff]
    %v335 = vld [vmem:[#allocation2 + $0x7a8] sm:$0xff]
    %v336 = vld [vmem:[#allocation2 + $0x7b0] sm:$0xff]
    %v337 = vld [vmem:[#allocation2 + $0x7b8] sm:$0xf]
    %v338 = vld [vmem:[#allocation2 + $0x7bc] sm:$0xff]
    %v339 = vld [vmem:[#allocation2 + $0x7c4] sm:$0xff]
    %v340 = vld [vmem:[#allocation2 + $0x7cc] sm:$0xff]
    %v341 = vld [vmem:[#allocation2 + $0x7d4] sm:$0xff]
    %v342 = vld [vmem:[#allocation2 + $0x7dc] sm:$0xf]
    %v343 = vld [vmem:[#allocation2 + $0x7e0] sm:$0xff]
    %v344 = vld [vmem:[#allocation2 + $0x7e8] sm:$0xff]
    %v345 = vld [vmem:[#allocation2 + $0x7f0] sm:$0xff]
    %v346 = vld [vmem:[#allocation2 + $0x7f8] sm:$0xff]
    %v347 = vld [vmem:[#allocation2 + $0x800] sm:$0xf]
    %v348 = vld [vmem:[#allocation2 + $0x804] sm:$0xff]
    %v349 = vld [vmem:[#allocation2 + $0x80c] sm:$0xff]
    %v350 = vld [vmem:[#allocation2 + $0x814] sm:$0xff]
    %v351 = vld [vmem:[#allocation2 + $0x81c] sm:$0xff]
    %v352 = vld [vmem:[#allocation2 + $0x824] sm:$0xf]
    %v353 = vld [vmem:[#allocation2 + $0x828] sm:$0xff]
    %v354 = vld [vmem:[#allocation2 + $0x830] sm:$0xff]
    %v355 = vld [vmem:[#allocation2 + $0x838] sm:$0xff]
    %v356 = vld [vmem:[#allocation2 + $0x840] sm:$0xff]
    %v357 = vld [vmem:[#allocation2 + $0x848] sm:$0xf]
    %v358 = vld [vmem:[#allocation2 + $0x84c] sm:$0xff]
    %v359 = vld [vmem:[#allocation2 + $0x854] sm:$0xff]
    %v360 = vld [vmem:[#allocation2 + $0x85c] sm:$0xff]
    %v361 = vld [vmem:[#allocation2 + $0x864] sm:$0xff]
    %v362 = vld [vmem:[#allocation2 + $0x86c] sm:$0xf]
    %v363 = vld [vmem:[#allocation2 + $0x870] sm:$0xff]
    %v364 = vld [vmem:[#allocation2 + $0x878] sm:$0xff]
    %v365 = vld [vmem:[#allocation2 + $0x880] sm:$0xff]
    %v366 = vld [vmem:[#allocation2 + $0x888] sm:$0xff]
    %v367 = vld [vmem:[#allocation2 + $0x890] sm:$0xf]
    %v368 = vld [vmem:[#allocation2 + $0x894] sm:$0xff]
    %v369 = vld [vmem:[#allocation2 + $0x89c] sm:$0xff]
    %v370 = vld [vmem:[#allocation2 + $0x8a4] sm:$0xff]
    %v371 = vld [vmem:[#allocation2 + $0x8ac] sm:$0xff]
    %v372 = vld [vmem:[#allocation2 + $0x8b4] sm:$0xf]
    %v373 = vld [vmem:[#allocation2 + $0x8b8] sm:$0xff]
    %v374 = vld [vmem:[#allocation2 + $0x8c0] sm:$0xff]
    %v375 = vld [vmem:[#allocation2 + $0x8c8] sm:$0xff]
    %v376 = vld [vmem:[#allocation2 + $0x8d0] sm:$0xff]
    %v377 = vld [vmem:[#allocation2 + $0x8d8] sm:$0xf]
    %v378 = vld [vmem:[#allocation2 + $0x8dc] sm:$0xff]
    %v379 = vld [vmem:[#allocation2 + $0x8e4] sm:$0xff]
    %v380 = vld [vmem:[#allocation2 + $0x8ec] sm:$0xff]
    %v381 = vld [vmem:[#allocation2 + $0x8f4] sm:$0xff]
    %v382 = vld [vmem:[#allocation2 + $0x8fc] sm:$0xf]
    %v383 = vld [vmem:[#allocation5] sm:$0xf]
    %v384 = vld [vmem:[#allocation5 + $0x4] sm:$0xf]
    %v385 = vld [vmem:[#allocation5 + $0x8] sm:$0xf]
    %v386 = vld [vmem:[#allocation5 + $0xc] sm:$0xf]
    %v387 = vld [vmem:[#allocation5 + $0x10] sm:$0xf]
    %v388 = vld [vmem:[#allocation5 + $0x14] sm:$0xf]
    %v389 = vld [vmem:[#allocation5 + $0x18] sm:$0xf]
    %v390 = vld [vmem:[#allocation5 + $0x1c] sm:$0xf]
    %v391 = vld [vmem:[#allocation5 + $0x20] sm:$0xf]
    %v392 = vld [vmem:[#allocation5 + $0x24] sm:$0xf]
    %v393 = vld [vmem:[#allocation5 + $0x28] sm:$0xf]
    %v394 = vld [vmem:[#allocation5 + $0x2c] sm:$0xf]
    %v395 = vld [vmem:[#allocation5 + $0x30] sm:$0xf]
    %v396 = vld [vmem:[#allocation5 + $0x34] sm:$0xf]
    %v397 = vld [vmem:[#allocation5 + $0x38] sm:$0xf]
    %v398 = vld [vmem:[#allocation5 + $0x3c] sm:$0xf]
    %v399 = vld [vmem:[#allocation5 + $0x40] sm:$0xf]
    %v400 = vld [vmem:[#allocation5 + $0x44] sm:$0xf]
    %v401 = vld [vmem:[#allocation5 + $0x48] sm:$0xf]
    %v402 = vld [vmem:[#allocation5 + $0x4c] sm:$0xf]
    %v403 = vld [vmem:[#allocation5 + $0x50] sm:$0xf]
    %v404 = vld [vmem:[#allocation5 + $0x54] sm:$0xf]
    %v405 = vld [vmem:[#allocation5 + $0x58] sm:$0xf]
    %v406 = vld [vmem:[#allocation5 + $0x5c] sm:$0xf]
    %v407 = vld [vmem:[#allocation5 + $0x60] sm:$0xf]
    %v408 = vld [vmem:[#allocation5 + $0x64] sm:$0xf]
    %v409 = vld [vmem:[#allocation5 + $0x68] sm:$0xf]
    %v410 = vld [vmem:[#allocation5 + $0x6c] sm:$0xf]
    %v411 = vld [vmem:[#allocation5 + $0x70] sm:$0xf]
    %v412 = vld [vmem:[#allocation5 + $0x74] sm:$0xf]
    %v413 = vld [vmem:[#allocation5 + $0x78] sm:$0xf]
    %v414 = vld [vmem:[#allocation5 + $0x7c] sm:$0xf]
    %v415 = vld [vmem:[#allocation5 + $0x80] sm:$0xf]
    %v416 = vld [vmem:[#allocation5 + $0x84] sm:$0xf]
    %v417 = vld [vmem:[#allocation5 + $0x88] sm:$0xf]
    %v418 = vld [vmem:[#allocation5 + $0x8c] sm:$0xf]
    %v419 = vld [vmem:[#allocation5 + $0x90] sm:$0xf]
    %v420 = vld [vmem:[#allocation5 + $0x94] sm:$0xf]
    %v421 = vld [vmem:[#allocation5 + $0x98] sm:$0xf]
    %v422 = vld [vmem:[#allocation5 + $0x9c] sm:$0xf]
    %v423 = vld [vmem:[#allocation5 + $0xa0] sm:$0xf]
    %v424 = vld [vmem:[#allocation5 + $0xa4] sm:$0xf]
    %v425 = vld [vmem:[#allocation5 + $0xa8] sm:$0xf]
    %v426 = vld [vmem:[#allocation5 + $0xac] sm:$0xf]
    %v427 = vld [vmem:[#allocation5 + $0xb0] sm:$0xf]
    %v428 = vld [vmem:[#allocation5 + $0xb4] sm:$0xf]
    %v429 = vld [vmem:[#allocation5 + $0xb8] sm:$0xf]
    %v430 = vld [vmem:[#allocation5 + $0xbc] sm:$0xf]
    %v431 = vld [vmem:[#allocation5 + $0xc0] sm:$0xf]
    %v432 = vld [vmem:[#allocation5 + $0xc4] sm:$0xf]
    %v433 = vld [vmem:[#allocation5 + $0xc8] sm:$0xf]
    %v434 = vld [vmem:[#allocation5 + $0xcc] sm:$0xf]
    %v435 = vld [vmem:[#allocation5 + $0xd0] sm:$0xf]
    %v436 = vld [vmem:[#allocation5 + $0xd4] sm:$0xf]
    %v437 = vld [vmem:[#allocation5 + $0xd8] sm:$0xf]
    %v438 = vld [vmem:[#allocation5 + $0xdc] sm:$0xf]
    %v439 = vld [vmem:[#allocation5 + $0xe0] sm:$0xf]
    %v440 = vld [vmem:[#allocation5 + $0xe4] sm:$0xf]
    %v441 = vld [vmem:[#allocation5 + $0xe8] sm:$0xf]
    %v442 = vld [vmem:[#allocation5 + $0xec] sm:$0xf]
    %v443 = vld [vmem:[#allocation5 + $0xf0] sm:$0xf]
    %v444 = vld [vmem:[#allocation5 + $0xf4] sm:$0xf]
    %v445 = vld [vmem:[#allocation5 + $0xf8] sm:$0xf]
    %v446 = vld [vmem:[#allocation5 + $0xfc] sm:$0xf]
    %v447 = vld [vmem:[#allocation5 + $0x100] sm:$0xf]
    %v448 = vld [vmem:[#allocation5 + $0x104] sm:$0xf]
    %v449 = vld [vmem:[#allocation5 + $0x108] sm:$0xf]
    %v450 = vld [vmem:[#allocation5 + $0x10c] sm:$0xf]
    %v451 = vld [vmem:[#allocation5 + $0x110] sm:$0xf]
    %v452 = vld [vmem:[#allocation5 + $0x114] sm:$0xf]
    %v453 = vld [vmem:[#allocation5 + $0x118] sm:$0xf]
    %v454 = vld [vmem:[#allocation5 + $0x11c] sm:$0xf]
    %v455 = vld [vmem:[#allocation5 + $0x120] sm:$0xf]
    %v456 = vld [vmem:[#allocation5 + $0x124] sm:$0xf]
    %v457 = vld [vmem:[#allocation5 + $0x128] sm:$0xf]
    %v458 = vld [vmem:[#allocation5 + $0x12c] sm:$0xf]
    %v459 = vld [vmem:[#allocation5 + $0x130] sm:$0xf]
    %v460 = vld [vmem:[#allocation5 + $0x134] sm:$0xf]
    %v461 = vld [vmem:[#allocation5 + $0x138] sm:$0xf]
    %v462 = vld [vmem:[#allocation5 + $0x13c] sm:$0xf]
    %v463 = vld [vmem:[#allocation5 + $0x140] sm:$0xf]
    %v464 = vld [vmem:[#allocation5 + $0x144] sm:$0xf]
    %v465 = vld [vmem:[#allocation5 + $0x148] sm:$0xf]
    %v466 = vld [vmem:[#allocation5 + $0x14c] sm:$0xf]
    %v467 = vld [vmem:[#allocation5 + $0x150] sm:$0xf]
    %v468 = vld [vmem:[#allocation5 + $0x154] sm:$0xf]
    %v469 = vld [vmem:[#allocation5 + $0x158] sm:$0xf]
    %v470 = vld [vmem:[#allocation5 + $0x15c] sm:$0xf]
    %v471 = vld [vmem:[#allocation5 + $0x160] sm:$0xf]
    %v472 = vld [vmem:[#allocation5 + $0x164] sm:$0xf]
    %v473 = vld [vmem:[#allocation5 + $0x168] sm:$0xf]
    %v474 = vld [vmem:[#allocation5 + $0x16c] sm:$0xf]
    %v475 = vld [vmem:[#allocation5 + $0x170] sm:$0xf]
    %v476 = vld [vmem:[#allocation5 + $0x174] sm:$0xf]
    %v477 = vld [vmem:[#allocation5 + $0x178] sm:$0xf]
    %v478 = vld [vmem:[#allocation5 + $0x17c] sm:$0xf]
    %v479 = vld [vmem:[#allocation5 + $0x180] sm:$0xf]
    %v480 = vld [vmem:[#allocation5 + $0x184] sm:$0xf]
    %v481 = vld [vmem:[#allocation5 + $0x188] sm:$0xf]
    %v482 = vld [vmem:[#allocation5 + $0x18c] sm:$0xf]
    %v483 = vld [vmem:[#allocation5 + $0x190] sm:$0xf]
    %v484 = vld [vmem:[#allocation5 + $0x194] sm:$0xf]
    %v485 = vld [vmem:[#allocation5 + $0x198] sm:$0xf]
    %v486 = vld [vmem:[#allocation5 + $0x19c] sm:$0xf]
    %v487 = vld [vmem:[#allocation5 + $0x1a0] sm:$0xf]
    %v488 = vld [vmem:[#allocation5 + $0x1a4] sm:$0xf]
    %v489 = vld [vmem:[#allocation5 + $0x1a8] sm:$0xf]
    %v490 = vld [vmem:[#allocation5 + $0x1ac] sm:$0xf]
    %v491 = vld [vmem:[#allocation5 + $0x1b0] sm:$0xf]
    %v492 = vld [vmem:[#allocation5 + $0x1b4] sm:$0xf]
    %v493 = vld [vmem:[#allocation5 + $0x1b8] sm:$0xf]
    %v494 = vld [vmem:[#allocation5 + $0x1bc] sm:$0xf]
    %v495 = vld [vmem:[#allocation5 + $0x1c0] sm:$0xf]
    %v496 = vld [vmem:[#allocation5 + $0x1c4] sm:$0xf]
    %v497 = vld [vmem:[#allocation5 + $0x1c8] sm:$0xf]
    %v498 = vld [vmem:[#allocation5 + $0x1cc] sm:$0xf]
    %v499 = vld [vmem:[#allocation5 + $0x1d0] sm:$0xf]
    %v500 = vld [vmem:[#allocation5 + $0x1d4] sm:$0xf]
    %v501 = vld [vmem:[#allocation5 + $0x1d8] sm:$0xf]
    %v502 = vld [vmem:[#allocation5 + $0x1dc] sm:$0xf]
    %v503 = vld [vmem:[#allocation5 + $0x1e0] sm:$0xf]
    %v504 = vld [vmem:[#allocation5 + $0x1e4] sm:$0xf]
    %v505 = vld [vmem:[#allocation5 + $0x1e8] sm:$0xf]
    %v506 = vld [vmem:[#allocation5 + $0x1ec] sm:$0xf]
    %v507 = vld [vmem:[#allocation5 + $0x1f0] sm:$0xf]
    %v508 = vld [vmem:[#allocation5 + $0x1f4] sm:$0xf]
    %v509 = vld [vmem:[#allocation5 + $0x1f8] sm:$0xf]
    %v510 = vld [vmem:[#allocation5 + $0x1fc] sm:$0xf]
    %v511 = vld [vmem:[#allocation5 + $0x200] sm:$0xf]
    %v512 = vld [vmem:[#allocation5 + $0x204] sm:$0xf]
    %v513 = vld [vmem:[#allocation5 + $0x208] sm:$0xf]
    %v514 = vld [vmem:[#allocation5 + $0x20c] sm:$0xf]
    %v515 = vld [vmem:[#allocation5 + $0x210] sm:$0xf]
    %v516 = vld [vmem:[#allocation5 + $0x214] sm:$0xf]
    %v517 = vld [vmem:[#allocation5 + $0x218] sm:$0xf]
    %v518 = vld [vmem:[#allocation5 + $0x21c] sm:$0xf]
    %v519 = vld [vmem:[#allocation5 + $0x220] sm:$0xf]
    %v520 = vld [vmem:[#allocation5 + $0x224] sm:$0xf]
    %v521 = vld [vmem:[#allocation5 + $0x228] sm:$0xf]
    %v522 = vld [vmem:[#allocation5 + $0x22c] sm:$0xf]
    %v523 = vld [vmem:[#allocation5 + $0x230] sm:$0xf]
    %v524 = vld [vmem:[#allocation5 + $0x234] sm:$0xf]
    %v525 = vld [vmem:[#allocation5 + $0x238] sm:$0xf]
    %v526 = vld [vmem:[#allocation5 + $0x23c] sm:$0xf]
    %v527 = vld [vmem:[#allocation7] sm:$0x1]
    %v529 = vperm.slane %v527, 0
    %v851 = vunpack.c.l.b16 %v63
    %v852 = vunpack.c.h.b16 %v63
    %v853 = vunpack.c.l.b16 %v64
    %v854 = vunpack.c.h.b16 %v64
    %v855 = vunpack.c.l.b16 %v65
    %v856 = vunpack.c.h.b16 %v65
    %v857 = vunpack.c.l.b16 %v66
    %v858 = vunpack.c.h.b16 %v66
    %v859 = vunpack.c.l.b16 %v67
    %v860 = vunpack.c.l.b16 %v68
    %v861 = vunpack.c.h.b16 %v68
    %v862 = vunpack.c.l.b16 %v69
    %v863 = vunpack.c.h.b16 %v69
    %v864 = vunpack.c.l.b16 %v70
    %v865 = vunpack.c.h.b16 %v70
    %v866 = vunpack.c.l.b16 %v71
    %v867 = vunpack.c.h.b16 %v71
    %v868 = vunpack.c.l.b16 %v72
    %v869 = vunpack.c.l.b16 %v73
    %v870 = vunpack.c.h.b16 %v73
    %v871 = vunpack.c.l.b16 %v74
    %v872 = vunpack.c.h.b16 %v74
    %v873 = vunpack.c.l.b16 %v75
    %v874 = vunpack.c.h.b16 %v75
    %v875 = vunpack.c.l.b16 %v76
    %v876 = vunpack.c.h.b16 %v76
    %v877 = vunpack.c.l.b16 %v77
    %v878 = vunpack.c.l.b16 %v78
    %v879 = vunpack.c.h.b16 %v78
    %v880 = vunpack.c.l.b16 %v79
    %v881 = vunpack.c.h.b16 %v79
    %v882 = vunpack.c.l.b16 %v80
    %v883 = vunpack.c.h.b16 %v80
    %v884 = vunpack.c.l.b16 %v81
    %v885 = vunpack.c.h.b16 %v81
    %v886 = vunpack.c.l.b16 %v82
    %v887 = vunpack.c.l.b16 %v83
    %v888 = vunpack.c.h.b16 %v83
    %v889 = vunpack.c.l.b16 %v84
    %v890 = vunpack.c.h.b16 %v84
    %v891 = vunpack.c.l.b16 %v85
    %v892 = vunpack.c.h.b16 %v85
    %v893 = vunpack.c.l.b16 %v86
    %v894 = vunpack.c.h.b16 %v86
    %v895 = vunpack.c.l.b16 %v87
    %v896 = vunpack.c.l.b16 %v88
    %v897 = vunpack.c.h.b16 %v88
    %v898 = vunpack.c.l.b16 %v89
    %v899 = vunpack.c.h.b16 %v89
    %v900 = vunpack.c.l.b16 %v90
    %v901 = vunpack.c.h.b16 %v90
    %v902 = vunpack.c.l.b16 %v91
    %v903 = vunpack.c.h.b16 %v91
    %v904 = vunpack.c.l.b16 %v92
    %v905 = vunpack.c.l.b16 %v93
    %v906 = vunpack.c.h.b16 %v93
    %v907 = vunpack.c.l.b16 %v94
    %v908 = vunpack.c.h.b16 %v94
    %v909 = vunpack.c.l.b16 %v95
    %v910 = vunpack.c.h.b16 %v95
    %v911 = vunpack.c.l.b16 %v96
    %v912 = vunpack.c.h.b16 %v96
    %v913 = vunpack.c.l.b16 %v97
    %v914 = vunpack.c.l.b16 %v98
    %v915 = vunpack.c.h.b16 %v98
    %v916 = vunpack.c.l.b16 %v99
    %v917 = vunpack.c.h.b16 %v99
    %v918 = vunpack.c.l.b16 %v100
    %v919 = vunpack.c.h.b16 %v100
    %v920 = vunpack.c.l.b16 %v101
    %v921 = vunpack.c.h.b16 %v101
    %v922 = vunpack.c.l.b16 %v102
    %v923 = vunpack.c.l.b16 %v103
    %v924 = vunpack.c.h.b16 %v103
    %v925 = vunpack.c.l.b16 %v104
    %v926 = vunpack.c.h.b16 %v104
    %v927 = vunpack.c.l.b16 %v105
    %v928 = vunpack.c.h.b16 %v105
    %v929 = vunpack.c.l.b16 %v106
    %v930 = vunpack.c.h.b16 %v106
    %v931 = vunpack.c.l.b16 %v107
    %v932 = vunpack.c.l.b16 %v108
    %v933 = vunpack.c.h.b16 %v108
    %v934 = vunpack.c.l.b16 %v109
    %v935 = vunpack.c.h.b16 %v109
    %v936 = vunpack.c.l.b16 %v110
    %v937 = vunpack.c.h.b16 %v110
    %v938 = vunpack.c.l.b16 %v111
    %v939 = vunpack.c.h.b16 %v111
    %v940 = vunpack.c.l.b16 %v112
    %v941 = vunpack.c.l.b16 %v113
    %v942 = vunpack.c.h.b16 %v113
    %v943 = vunpack.c.l.b16 %v114
    %v944 = vunpack.c.h.b16 %v114
    %v945 = vunpack.c.l.b16 %v115
    %v946 = vunpack.c.h.b16 %v115
    %v947 = vunpack.c.l.b16 %v116
    %v948 = vunpack.c.h.b16 %v116
    %v949 = vunpack.c.l.b16 %v117
    %v950 = vunpack.c.l.b16 %v118
    %v951 = vunpack.c.h.b16 %v118
    %v952 = vunpack.c.l.b16 %v119
    %v953 = vunpack.c.h.b16 %v119
    %v954 = vunpack.c.l.b16 %v120
    %v955 = vunpack.c.h.b16 %v120
    %v956 = vunpack.c.l.b16 %v121
    %v957 = vunpack.c.h.b16 %v121
    %v958 = vunpack.c.l.b16 %v122
    %v959 = vunpack.c.l.b16 %v123
    %v960 = vunpack.c.h.b16 %v123
    %v961 = vunpack.c.l.b16 %v124
    %v962 = vunpack.c.h.b16 %v124
    %v963 = vunpack.c.l.b16 %v125
    %v964 = vunpack.c.h.b16 %v125
    %v965 = vunpack.c.l.b16 %v126
    %v966 = vunpack.c.h.b16 %v126
    %v967 = vunpack.c.l.b16 %v127
    %v968 = vunpack.c.l.b16 %v128
    %v969 = vunpack.c.h.b16 %v128
    %v970 = vunpack.c.l.b16 %v129
    %v971 = vunpack.c.h.b16 %v129
    %v972 = vunpack.c.l.b16 %v130
    %v973 = vunpack.c.h.b16 %v130
    %v974 = vunpack.c.l.b16 %v131
    %v975 = vunpack.c.h.b16 %v131
    %v976 = vunpack.c.l.b16 %v132
    %v977 = vunpack.c.l.b16 %v133
    %v978 = vunpack.c.h.b16 %v133
    %v979 = vunpack.c.l.b16 %v134
    %v980 = vunpack.c.h.b16 %v134
    %v981 = vunpack.c.l.b16 %v135
    %v982 = vunpack.c.h.b16 %v135
    %v983 = vunpack.c.l.b16 %v136
    %v984 = vunpack.c.h.b16 %v136
    %v985 = vunpack.c.l.b16 %v137
    %v986 = vunpack.c.l.b16 %v138
    %v987 = vunpack.c.h.b16 %v138
    %v988 = vunpack.c.l.b16 %v139
    %v989 = vunpack.c.h.b16 %v139
    %v990 = vunpack.c.l.b16 %v140
    %v991 = vunpack.c.h.b16 %v140
    %v992 = vunpack.c.l.b16 %v141
    %v993 = vunpack.c.h.b16 %v141
    %v994 = vunpack.c.l.b16 %v142
    %v995 = vunpack.c.l.b16 %v143
    %v996 = vunpack.c.h.b16 %v143
    %v997 = vunpack.c.l.b16 %v144
    %v998 = vunpack.c.h.b16 %v144
    %v999 = vunpack.c.l.b16 %v145
    %v1000 = vunpack.c.h.b16 %v145
    %v1001 = vunpack.c.l.b16 %v146
    %v1002 = vunpack.c.h.b16 %v146
    %v1003 = vunpack.c.l.b16 %v147
    %v1004 = vunpack.c.l.b16 %v148
    %v1005 = vunpack.c.h.b16 %v148
    %v1006 = vunpack.c.l.b16 %v149
    %v1007 = vunpack.c.h.b16 %v149
    %v1008 = vunpack.c.l.b16 %v150
    %v1009 = vunpack.c.h.b16 %v150
    %v1010 = vunpack.c.l.b16 %v151
    %v1011 = vunpack.c.h.b16 %v151
    %v1012 = vunpack.c.l.b16 %v152
    %v1013 = vunpack.c.l.b16 %v153
    %v1014 = vunpack.c.h.b16 %v153
    %v1015 = vunpack.c.l.b16 %v154
    %v1016 = vunpack.c.h.b16 %v154
    %v1017 = vunpack.c.l.b16 %v155
    %v1018 = vunpack.c.h.b16 %v155
    %v1019 = vunpack.c.l.b16 %v156
    %v1020 = vunpack.c.h.b16 %v156
    %v1021 = vunpack.c.l.b16 %v157
    %v1022 = vunpack.c.l.b16 %v158
    %v1023 = vunpack.c.h.b16 %v158
    %v1024 = vunpack.c.l.b16 %v159
    %v1025 = vunpack.c.h.b16 %v159
    %v1026 = vunpack.c.l.b16 %v160
    %v1027 = vunpack.c.h.b16 %v160
    %v1028 = vunpack.c.l.b16 %v161
    %v1029 = vunpack.c.h.b16 %v161
    %v1030 = vunpack.c.l.b16 %v162
    %v1031 = vunpack.c.l.b16 %v163
    %v1032 = vunpack.c.h.b16 %v163
    %v1033 = vunpack.c.l.b16 %v164
    %v1034 = vunpack.c.h.b16 %v164
    %v1035 = vunpack.c.l.b16 %v165
    %v1036 = vunpack.c.h.b16 %v165
    %v1037 = vunpack.c.l.b16 %v166
    %v1038 = vunpack.c.h.b16 %v166
    %v1039 = vunpack.c.l.b16 %v167
    %v1040 = vunpack.c.l.b16 %v168
    %v1041 = vunpack.c.h.b16 %v168
    %v1042 = vunpack.c.l.b16 %v169
    %v1043 = vunpack.c.h.b16 %v169
    %v1044 = vunpack.c.l.b16 %v170
    %v1045 = vunpack.c.h.b16 %v170
    %v1046 = vunpack.c.l.b16 %v171
    %v1047 = vunpack.c.h.b16 %v171
    %v1048 = vunpack.c.l.b16 %v172
    %v1049 = vunpack.c.l.b16 %v173
    %v1050 = vunpack.c.h.b16 %v173
    %v1051 = vunpack.c.l.b16 %v174
    %v1052 = vunpack.c.h.b16 %v174
    %v1053 = vunpack.c.l.b16 %v175
    %v1054 = vunpack.c.h.b16 %v175
    %v1055 = vunpack.c.l.b16 %v176
    %v1056 = vunpack.c.h.b16 %v176
    %v1057 = vunpack.c.l.b16 %v177
    %v1058 = vunpack.c.l.b16 %v178
    %v1059 = vunpack.c.h.b16 %v178
    %v1060 = vunpack.c.l.b16 %v179
    %v1061 = vunpack.c.h.b16 %v179
    %v1062 = vunpack.c.l.b16 %v180
    %v1063 = vunpack.c.h.b16 %v180
    %v1064 = vunpack.c.l.b16 %v181
    %v1065 = vunpack.c.h.b16 %v181
    %v1066 = vunpack.c.l.b16 %v182
    %v1067 = vunpack.c.l.b16 %v183
    %v1068 = vunpack.c.h.b16 %v183
    %v1069 = vunpack.c.l.b16 %v184
    %v1070 = vunpack.c.h.b16 %v184
    %v1071 = vunpack.c.l.b16 %v185
    %v1072 = vunpack.c.h.b16 %v185
    %v1073 = vunpack.c.l.b16 %v186
    %v1074 = vunpack.c.h.b16 %v186
    %v1075 = vunpack.c.l.b16 %v187
    %v1076 = vunpack.c.l.b16 %v188
    %v1077 = vunpack.c.h.b16 %v188
    %v1078 = vunpack.c.l.b16 %v189
    %v1079 = vunpack.c.h.b16 %v189
    %v1080 = vunpack.c.l.b16 %v190
    %v1081 = vunpack.c.h.b16 %v190
    %v1082 = vunpack.c.l.b16 %v191
    %v1083 = vunpack.c.h.b16 %v191
    %v1084 = vunpack.c.l.b16 %v192
    %v1085 = vunpack.c.l.b16 %v193
    %v1086 = vunpack.c.h.b16 %v193
    %v1087 = vunpack.c.l.b16 %v194
    %v1088 = vunpack.c.h.b16 %v194
    %v1089 = vunpack.c.l.b16 %v195
    %v1090 = vunpack.c.h.b16 %v195
    %v1091 = vunpack.c.l.b16 %v196
    %v1092 = vunpack.c.h.b16 %v196
    %v1093 = vunpack.c.l.b16 %v197
    %v1094 = vunpack.c.l.b16 %v198
    %v1095 = vunpack.c.h.b16 %v198
    %v1096 = vunpack.c.l.b16 %v199
    %v1097 = vunpack.c.h.b16 %v199
    %v1098 = vunpack.c.l.b16 %v200
    %v1099 = vunpack.c.h.b16 %v200
    %v1100 = vunpack.c.l.b16 %v201
    %v1101 = vunpack.c.h.b16 %v201
    %v1102 = vunpack.c.l.b16 %v202
    %v1103 = vunpack.c.l.b16 %v203
    %v1104 = vunpack.c.h.b16 %v203
    %v1105 = vunpack.c.l.b16 %v204
    %v1106 = vunpack.c.h.b16 %v204
    %v1107 = vunpack.c.l.b16 %v205
    %v1108 = vunpack.c.h.b16 %v205
    %v1109 = vunpack.c.l.b16 %v206
    %v1110 = vunpack.c.h.b16 %v206
    %v1111 = vunpack.c.l.b16 %v207
    %v1112 = vunpack.c.l.b16 %v208
    %v1113 = vunpack.c.h.b16 %v208
    %v1114 = vunpack.c.l.b16 %v209
    %v1115 = vunpack.c.h.b16 %v209
    %v1116 = vunpack.c.l.b16 %v210
    %v1117 = vunpack.c.h.b16 %v210
    %v1118 = vunpack.c.l.b16 %v211
    %v1119 = vunpack.c.h.b16 %v211
    %v1120 = vunpack.c.l.b16 %v212
    %v1121 = vunpack.c.l.b16 %v213
    %v1122 = vunpack.c.h.b16 %v213
    %v1123 = vunpack.c.l.b16 %v214
    %v1124 = vunpack.c.h.b16 %v214
    %v1125 = vunpack.c.l.b16 %v215
    %v1126 = vunpack.c.h.b16 %v215
    %v1127 = vunpack.c.l.b16 %v216
    %v1128 = vunpack.c.h.b16 %v216
    %v1129 = vunpack.c.l.b16 %v217
    %v1130 = vunpack.c.l.b16 %v218
    %v1131 = vunpack.c.h.b16 %v218
    %v1132 = vunpack.c.l.b16 %v219
    %v1133 = vunpack.c.h.b16 %v219
    %v1134 = vunpack.c.l.b16 %v220
    %v1135 = vunpack.c.h.b16 %v220
    %v1136 = vunpack.c.l.b16 %v221
    %v1137 = vunpack.c.h.b16 %v221
    %v1138 = vunpack.c.l.b16 %v222
    %v1139 = vunpack.c.l.b16 %v223
    %v1140 = vunpack.c.h.b16 %v223
    %v1141 = vunpack.c.l.b16 %v224
    %v1142 = vunpack.c.h.b16 %v224
    %v1143 = vunpack.c.l.b16 %v225
    %v1144 = vunpack.c.h.b16 %v225
    %v1145 = vunpack.c.l.b16 %v226
    %v1146 = vunpack.c.h.b16 %v226
    %v1147 = vunpack.c.l.b16 %v227
    %v1148 = vunpack.c.l.b16 %v228
    %v1149 = vunpack.c.h.b16 %v228
    %v1150 = vunpack.c.l.b16 %v229
    %v1151 = vunpack.c.h.b16 %v229
    %v1152 = vunpack.c.l.b16 %v230
    %v1153 = vunpack.c.h.b16 %v230
    %v1154 = vunpack.c.l.b16 %v231
    %v1155 = vunpack.c.h.b16 %v231
    %v1156 = vunpack.c.l.b16 %v232
    %v1157 = vunpack.c.l.b16 %v233
    %v1158 = vunpack.c.h.b16 %v233
    %v1159 = vunpack.c.l.b16 %v234
    %v1160 = vunpack.c.h.b16 %v234
    %v1161 = vunpack.c.l.b16 %v235
    %v1162 = vunpack.c.h.b16 %v235
    %v1163 = vunpack.c.l.b16 %v236
    %v1164 = vunpack.c.h.b16 %v236
    %v1165 = vunpack.c.l.b16 %v237
    %v1166 = vunpack.c.l.b16 %v238
    %v1167 = vunpack.c.h.b16 %v238
    %v1168 = vunpack.c.l.b16 %v239
    %v1169 = vunpack.c.h.b16 %v239
    %v1170 = vunpack.c.l.b16 %v240
    %v1171 = vunpack.c.h.b16 %v240
    %v1172 = vunpack.c.l.b16 %v241
    %v1173 = vunpack.c.h.b16 %v241
    %v1174 = vunpack.c.l.b16 %v242
    %v1175 = vunpack.c.l.b16 %v243
    %v1176 = vunpack.c.h.b16 %v243
    %v1177 = vunpack.c.l.b16 %v244
    %v1178 = vunpack.c.h.b16 %v244
    %v1179 = vunpack.c.l.b16 %v245
    %v1180 = vunpack.c.h.b16 %v245
    %v1181 = vunpack.c.l.b16 %v246
    %v1182 = vunpack.c.h.b16 %v246
    %v1183 = vunpack.c.l.b16 %v247
    %v1184 = vunpack.c.l.b16 %v248
    %v1185 = vunpack.c.h.b16 %v248
    %v1186 = vunpack.c.l.b16 %v249
    %v1187 = vunpack.c.h.b16 %v249
    %v1188 = vunpack.c.l.b16 %v250
    %v1189 = vunpack.c.h.b16 %v250
    %v1190 = vunpack.c.l.b16 %v251
    %v1191 = vunpack.c.h.b16 %v251
    %v1192 = vunpack.c.l.b16 %v252
    %v1193 = vunpack.c.l.b16 %v253
    %v1194 = vunpack.c.h.b16 %v253
    %v1195 = vunpack.c.l.b16 %v254
    %v1196 = vunpack.c.h.b16 %v254
    %v1197 = vunpack.c.l.b16 %v255
    %v1198 = vunpack.c.h.b16 %v255
    %v1199 = vunpack.c.l.b16 %v256
    %v1200 = vunpack.c.h.b16 %v256
    %v1201 = vunpack.c.l.b16 %v257
    %v1202 = vunpack.c.l.b16 %v258
    %v1203 = vunpack.c.h.b16 %v258
    %v1204 = vunpack.c.l.b16 %v259
    %v1205 = vunpack.c.h.b16 %v259
    %v1206 = vunpack.c.l.b16 %v260
    %v1207 = vunpack.c.h.b16 %v260
    %v1208 = vunpack.c.l.b16 %v261
    %v1209 = vunpack.c.h.b16 %v261
    %v1210 = vunpack.c.l.b16 %v262
    %v1211 = vunpack.c.l.b16 %v263
    %v1212 = vunpack.c.h.b16 %v263
    %v1213 = vunpack.c.l.b16 %v264
    %v1214 = vunpack.c.h.b16 %v264
    %v1215 = vunpack.c.l.b16 %v265
    %v1216 = vunpack.c.h.b16 %v265
    %v1217 = vunpack.c.l.b16 %v266
    %v1218 = vunpack.c.h.b16 %v266
    %v1219 = vunpack.c.l.b16 %v267
    %v1220 = vunpack.c.l.b16 %v268
    %v1221 = vunpack.c.h.b16 %v268
    %v1222 = vunpack.c.l.b16 %v269
    %v1223 = vunpack.c.h.b16 %v269
    %v1224 = vunpack.c.l.b16 %v270
    %v1225 = vunpack.c.h.b16 %v270
    %v1226 = vunpack.c.l.b16 %v271
    %v1227 = vunpack.c.h.b16 %v271
    %v1228 = vunpack.c.l.b16 %v272
    %v1229 = vunpack.c.l.b16 %v273
    %v1230 = vunpack.c.h.b16 %v273
    %v1231 = vunpack.c.l.b16 %v274
    %v1232 = vunpack.c.h.b16 %v274
    %v1233 = vunpack.c.l.b16 %v275
    %v1234 = vunpack.c.h.b16 %v275
    %v1235 = vunpack.c.l.b16 %v276
    %v1236 = vunpack.c.h.b16 %v276
    %v1237 = vunpack.c.l.b16 %v277
    %v1238 = vunpack.c.l.b16 %v278
    %v1239 = vunpack.c.h.b16 %v278
    %v1240 = vunpack.c.l.b16 %v279
    %v1241 = vunpack.c.h.b16 %v279
    %v1242 = vunpack.c.l.b16 %v280
    %v1243 = vunpack.c.h.b16 %v280
    %v1244 = vunpack.c.l.b16 %v281
    %v1245 = vunpack.c.h.b16 %v281
    %v1246 = vunpack.c.l.b16 %v282
    %v1247 = vunpack.c.l.b16 %v283
    %v1248 = vunpack.c.h.b16 %v283
    %v1249 = vunpack.c.l.b16 %v284
    %v1250 = vunpack.c.h.b16 %v284
    %v1251 = vunpack.c.l.b16 %v285
    %v1252 = vunpack.c.h.b16 %v285
    %v1253 = vunpack.c.l.b16 %v286
    %v1254 = vunpack.c.h.b16 %v286
    %v1255 = vunpack.c.l.b16 %v287
    %v1256 = vunpack.c.l.b16 %v288
    %v1257 = vunpack.c.h.b16 %v288
    %v1258 = vunpack.c.l.b16 %v289
    %v1259 = vunpack.c.h.b16 %v289
    %v1260 = vunpack.c.l.b16 %v290
    %v1261 = vunpack.c.h.b16 %v290
    %v1262 = vunpack.c.l.b16 %v291
    %v1263 = vunpack.c.h.b16 %v291
    %v1264 = vunpack.c.l.b16 %v292
    %v1265 = vunpack.c.l.b16 %v293
    %v1266 = vunpack.c.h.b16 %v293
    %v1267 = vunpack.c.l.b16 %v294
    %v1268 = vunpack.c.h.b16 %v294
    %v1269 = vunpack.c.l.b16 %v295
    %v1270 = vunpack.c.h.b16 %v295
    %v1271 = vunpack.c.l.b16 %v296
    %v1272 = vunpack.c.h.b16 %v296
    %v1273 = vunpack.c.l.b16 %v297
    %v1274 = vunpack.c.l.b16 %v298
    %v1275 = vunpack.c.h.b16 %v298
    %v1276 = vunpack.c.l.b16 %v299
    %v1277 = vunpack.c.h.b16 %v299
    %v1278 = vunpack.c.l.b16 %v300
    %v1279 = vunpack.c.h.b16 %v300
    %v1280 = vunpack.c.l.b16 %v301
    %v1281 = vunpack.c.h.b16 %v301
    %v1282 = vunpack.c.l.b16 %v302
    %v1283 = vunpack.c.l.b16 %v303
    %v1284 = vunpack.c.h.b16 %v303
    %v1285 = vunpack.c.l.b16 %v304
    %v1286 = vunpack.c.h.b16 %v304
    %v1287 = vunpack.c.l.b16 %v305
    %v1288 = vunpack.c.h.b16 %v305
    %v1289 = vunpack.c.l.b16 %v306
    %v1290 = vunpack.c.h.b16 %v306
    %v1291 = vunpack.c.l.b16 %v307
    %v1292 = vunpack.c.l.b16 %v308
    %v1293 = vunpack.c.h.b16 %v308
    %v1294 = vunpack.c.l.b16 %v309
    %v1295 = vunpack.c.h.b16 %v309
    %v1296 = vunpack.c.l.b16 %v310
    %v1297 = vunpack.c.h.b16 %v310
    %v1298 = vunpack.c.l.b16 %v311
    %v1299 = vunpack.c.h.b16 %v311
    %v1300 = vunpack.c.l.b16 %v312
    %v1301 = vunpack.c.l.b16 %v313
    %v1302 = vunpack.c.h.b16 %v313
    %v1303 = vunpack.c.l.b16 %v314
    %v1304 = vunpack.c.h.b16 %v314
    %v1305 = vunpack.c.l.b16 %v315
    %v1306 = vunpack.c.h.b16 %v315
    %v1307 = vunpack.c.l.b16 %v316
    %v1308 = vunpack.c.h.b16 %v316
    %v1309 = vunpack.c.l.b16 %v317
    %v1310 = vunpack.c.l.b16 %v318
    %v1311 = vunpack.c.h.b16 %v318
    %v1312 = vunpack.c.l.b16 %v319
    %v1313 = vunpack.c.h.b16 %v319
    %v1314 = vunpack.c.l.b16 %v320
    %v1315 = vunpack.c.h.b16 %v320
    %v1316 = vunpack.c.l.b16 %v321
    %v1317 = vunpack.c.h.b16 %v321
    %v1318 = vunpack.c.l.b16 %v322
    %v1319 = vunpack.c.l.b16 %v323
    %v1320 = vunpack.c.h.b16 %v323
    %v1321 = vunpack.c.l.b16 %v324
    %v1322 = vunpack.c.h.b16 %v324
    %v1323 = vunpack.c.l.b16 %v325
    %v1324 = vunpack.c.h.b16 %v325
    %v1325 = vunpack.c.l.b16 %v326
    %v1326 = vunpack.c.h.b16 %v326
    %v1327 = vunpack.c.l.b16 %v327
    %v1328 = vunpack.c.l.b16 %v328
    %v1329 = vunpack.c.h.b16 %v328
    %v1330 = vunpack.c.l.b16 %v329
    %v1331 = vunpack.c.h.b16 %v329
    %v1332 = vunpack.c.l.b16 %v330
    %v1333 = vunpack.c.h.b16 %v330
    %v1334 = vunpack.c.l.b16 %v331
    %v1335 = vunpack.c.h.b16 %v331
    %v1336 = vunpack.c.l.b16 %v332
    %v1337 = vunpack.c.l.b16 %v333
    %v1338 = vunpack.c.h.b16 %v333
    %v1339 = vunpack.c.l.b16 %v334
    %v1340 = vunpack.c.h.b16 %v334
    %v1341 = vunpack.c.l.b16 %v335
    %v1342 = vunpack.c.h.b16 %v335
    %v1343 = vunpack.c.l.b16 %v336
    %v1344 = vunpack.c.h.b16 %v336
    %v1345 = vunpack.c.l.b16 %v337
    %v1346 = vunpack.c.l.b16 %v338
    %v1347 = vunpack.c.h.b16 %v338
    %v1348 = vunpack.c.l.b16 %v339
    %v1349 = vunpack.c.h.b16 %v339
    %v1350 = vunpack.c.l.b16 %v340
    %v1351 = vunpack.c.h.b16 %v340
    %v1352 = vunpack.c.l.b16 %v341
    %v1353 = vunpack.c.h.b16 %v341
    %v1354 = vunpack.c.l.b16 %v342
    %v1355 = vunpack.c.l.b16 %v343
    %v1356 = vunpack.c.h.b16 %v343
    %v1357 = vunpack.c.l.b16 %v344
    %v1358 = vunpack.c.h.b16 %v344
    %v1359 = vunpack.c.l.b16 %v345
    %v1360 = vunpack.c.h.b16 %v345
    %v1361 = vunpack.c.l.b16 %v346
    %v1362 = vunpack.c.h.b16 %v346
    %v1363 = vunpack.c.l.b16 %v347
    %v1364 = vunpack.c.l.b16 %v348
    %v1365 = vunpack.c.h.b16 %v348
    %v1366 = vunpack.c.l.b16 %v349
    %v1367 = vunpack.c.h.b16 %v349
    %v1368 = vunpack.c.l.b16 %v350
    %v1369 = vunpack.c.h.b16 %v350
    %v1370 = vunpack.c.l.b16 %v351
    %v1371 = vunpack.c.h.b16 %v351
    %v1372 = vunpack.c.l.b16 %v352
    %v1373 = vunpack.c.l.b16 %v353
    %v1374 = vunpack.c.h.b16 %v353
    %v1375 = vunpack.c.l.b16 %v354
    %v1376 = vunpack.c.h.b16 %v354
    %v1377 = vunpack.c.l.b16 %v355
    %v1378 = vunpack.c.h.b16 %v355
    %v1379 = vunpack.c.l.b16 %v356
    %v1380 = vunpack.c.h.b16 %v356
    %v1381 = vunpack.c.l.b16 %v357
    %v1382 = vunpack.c.l.b16 %v358
    %v1383 = vunpack.c.h.b16 %v358
    %v1384 = vunpack.c.l.b16 %v359
    %v1385 = vunpack.c.h.b16 %v359
    %v1386 = vunpack.c.l.b16 %v360
    %v1387 = vunpack.c.h.b16 %v360
    %v1388 = vunpack.c.l.b16 %v361
    %v1389 = vunpack.c.h.b16 %v361
    %v1390 = vunpack.c.l.b16 %v362
    %v1391 = vunpack.c.l.b16 %v363
    %v1392 = vunpack.c.h.b16 %v363
    %v1393 = vunpack.c.l.b16 %v364
    %v1394 = vunpack.c.h.b16 %v364
    %v1395 = vunpack.c.l.b16 %v365
    %v1396 = vunpack.c.h.b16 %v365
    %v1397 = vunpack.c.l.b16 %v366
    %v1398 = vunpack.c.h.b16 %v366
    %v1399 = vunpack.c.l.b16 %v367
    %v1400 = vunpack.c.l.b16 %v368
    %v1401 = vunpack.c.h.b16 %v368
    %v1402 = vunpack.c.l.b16 %v369
    %v1403 = vunpack.c.h.b16 %v369
    %v1404 = vunpack.c.l.b16 %v370
    %v1405 = vunpack.c.h.b16 %v370
    %v1406 = vunpack.c.l.b16 %v371
    %v1407 = vunpack.c.h.b16 %v371
    %v1408 = vunpack.c.l.b16 %v372
    %v1409 = vunpack.c.l.b16 %v373
    %v1410 = vunpack.c.h.b16 %v373
    %v1411 = vunpack.c.l.b16 %v374
    %v1412 = vunpack.c.h.b16 %v374
    %v1413 = vunpack.c.l.b16 %v375
    %v1414 = vunpack.c.h.b16 %v375
    %v1415 = vunpack.c.l.b16 %v376
    %v1416 = vunpack.c.h.b16 %v376
    %v1417 = vunpack.c.l.b16 %v377
    %v1418 = vunpack.c.l.b16 %v378
    %v1419 = vunpack.c.h.b16 %v378
    %v1420 = vunpack.c.l.b16 %v379
    %v1421 = vunpack.c.h.b16 %v379
    %v1422 = vunpack.c.l.b16 %v380
    %v1423 = vunpack.c.h.b16 %v380
    %v1424 = vunpack.c.l.b16 %v381
    %v1425 = vunpack.c.h.b16 %v381
    %v1426 = vunpack.c.l.b16 %v382
    %v1427 = vpack.c.b16 %v860, %v851
    %v1428 = vpack.c.b16 %v861, %v852
    %v1429 = vpack.c.b16 %v862, %v853
    %v1430 = vpack.c.b16 %v863, %v854
    %v1431 = vpack.c.b16 %v864, %v855
    %v1432 = vpack.c.b16 %v865, %v856
    %v1433 = vpack.c.b16 %v866, %v857
    %v1434 = vpack.c.b16 %v867, %v858
    %v1435 = vpack.c.b16 %v868, %v859
    %v1436 = vpack.c.b16 %v878, %v869
    %v1437 = vpack.c.b16 %v879, %v870
    %v1438 = vpack.c.b16 %v880, %v871
    %v1439 = vpack.c.b16 %v881, %v872
    %v1440 = vpack.c.b16 %v882, %v873
    %v1441 = vpack.c.b16 %v883, %v874
    %v1442 = vpack.c.b16 %v884, %v875
    %v1443 = vpack.c.b16 %v885, %v876
    %v1444 = vpack.c.b16 %v886, %v877
    %v1445 = vpack.c.b16 %v896, %v887
    %v1446 = vpack.c.b16 %v897, %v888
    %v1447 = vpack.c.b16 %v898, %v889
    %v1448 = vpack.c.b16 %v899, %v890
    %v1449 = vpack.c.b16 %v900, %v891
    %v1450 = vpack.c.b16 %v901, %v892
    %v1451 = vpack.c.b16 %v902, %v893
    %v1452 = vpack.c.b16 %v903, %v894
    %v1453 = vpack.c.b16 %v904, %v895
    %v1454 = vpack.c.b16 %v914, %v905
    %v1455 = vpack.c.b16 %v915, %v906
    %v1456 = vpack.c.b16 %v916, %v907
    %v1457 = vpack.c.b16 %v917, %v908
    %v1458 = vpack.c.b16 %v918, %v909
    %v1459 = vpack.c.b16 %v919, %v910
    %v1460 = vpack.c.b16 %v920, %v911
    %v1461 = vpack.c.b16 %v921, %v912
    %v1462 = vpack.c.b16 %v922, %v913
    %v1463 = vpack.c.b16 %v932, %v923
    %v1464 = vpack.c.b16 %v933, %v924
    %v1465 = vpack.c.b16 %v934, %v925
    %v1466 = vpack.c.b16 %v935, %v926
    %v1467 = vpack.c.b16 %v936, %v927
    %v1468 = vpack.c.b16 %v937, %v928
    %v1469 = vpack.c.b16 %v938, %v929
    %v1470 = vpack.c.b16 %v939, %v930
    %v1471 = vpack.c.b16 %v940, %v931
    %v1472 = vpack.c.b16 %v950, %v941
    %v1473 = vpack.c.b16 %v951, %v942
    %v1474 = vpack.c.b16 %v952, %v943
    %v1475 = vpack.c.b16 %v953, %v944
    %v1476 = vpack.c.b16 %v954, %v945
    %v1477 = vpack.c.b16 %v955, %v946
    %v1478 = vpack.c.b16 %v956, %v947
    %v1479 = vpack.c.b16 %v957, %v948
    %v1480 = vpack.c.b16 %v958, %v949
    %v1481 = vpack.c.b16 %v968, %v959
    %v1482 = vpack.c.b16 %v969, %v960
    %v1483 = vpack.c.b16 %v970, %v961
    %v1484 = vpack.c.b16 %v971, %v962
    %v1485 = vpack.c.b16 %v972, %v963
    %v1486 = vpack.c.b16 %v973, %v964
    %v1487 = vpack.c.b16 %v974, %v965
    %v1488 = vpack.c.b16 %v975, %v966
    %v1489 = vpack.c.b16 %v976, %v967
    %v1490 = vpack.c.b16 %v986, %v977
    %v1491 = vpack.c.b16 %v987, %v978
    %v1492 = vpack.c.b16 %v988, %v979
    %v1493 = vpack.c.b16 %v989, %v980
    %v1494 = vpack.c.b16 %v990, %v981
    %v1495 = vpack.c.b16 %v991, %v982
    %v1496 = vpack.c.b16 %v992, %v983
    %v1497 = vpack.c.b16 %v993, %v984
    %v1498 = vpack.c.b16 %v994, %v985
    %v1499 = vpack.c.b16 %v1004, %v995
    %v1500 = vpack.c.b16 %v1005, %v996
    %v1501 = vpack.c.b16 %v1006, %v997
    %v1502 = vpack.c.b16 %v1007, %v998
    %v1503 = vpack.c.b16 %v1008, %v999
    %v1504 = vpack.c.b16 %v1009, %v1000
    %v1505 = vpack.c.b16 %v1010, %v1001
    %v1506 = vpack.c.b16 %v1011, %v1002
    %v1507 = vpack.c.b16 %v1012, %v1003
    %v1508 = vpack.c.b16 %v1022, %v1013
    %v1509 = vpack.c.b16 %v1023, %v1014
    %v1510 = vpack.c.b16 %v1024, %v1015
    %v1511 = vpack.c.b16 %v1025, %v1016
    %v1512 = vpack.c.b16 %v1026, %v1017
    %v1513 = vpack.c.b16 %v1027, %v1018
    %v1514 = vpack.c.b16 %v1028, %v1019
    %v1515 = vpack.c.b16 %v1029, %v1020
    %v1516 = vpack.c.b16 %v1030, %v1021
    %v1517 = vpack.c.b16 %v1040, %v1031
    %v1518 = vpack.c.b16 %v1041, %v1032
    %v1519 = vpack.c.b16 %v1042, %v1033
    %v1520 = vpack.c.b16 %v1043, %v1034
    %v1521 = vpack.c.b16 %v1044, %v1035
    %v1522 = vpack.c.b16 %v1045, %v1036
    %v1523 = vpack.c.b16 %v1046, %v1037
    %v1524 = vpack.c.b16 %v1047, %v1038
    %v1525 = vpack.c.b16 %v1048, %v1039
    %v1526 = vpack.c.b16 %v1058, %v1049
    %v1527 = vpack.c.b16 %v1059, %v1050
    %v1528 = vpack.c.b16 %v1060, %v1051
    %v1529 = vpack.c.b16 %v1061, %v1052
    %v1530 = vpack.c.b16 %v1062, %v1053
    %v1531 = vpack.c.b16 %v1063, %v1054
    %v1532 = vpack.c.b16 %v1064, %v1055
    %v1533 = vpack.c.b16 %v1065, %v1056
    %v1534 = vpack.c.b16 %v1066, %v1057
    %v1535 = vpack.c.b16 %v1076, %v1067
    %v1536 = vpack.c.b16 %v1077, %v1068
    %v1537 = vpack.c.b16 %v1078, %v1069
    %v1538 = vpack.c.b16 %v1079, %v1070
    %v1539 = vpack.c.b16 %v1080, %v1071
    %v1540 = vpack.c.b16 %v1081, %v1072
    %v1541 = vpack.c.b16 %v1082, %v1073
    %v1542 = vpack.c.b16 %v1083, %v1074
    %v1543 = vpack.c.b16 %v1084, %v1075
    %v1544 = vpack.c.b16 %v1094, %v1085
    %v1545 = vpack.c.b16 %v1095, %v1086
    %v1546 = vpack.c.b16 %v1096, %v1087
    %v1547 = vpack.c.b16 %v1097, %v1088
    %v1548 = vpack.c.b16 %v1098, %v1089
    %v1549 = vpack.c.b16 %v1099, %v1090
    %v1550 = vpack.c.b16 %v1100, %v1091
    %v1551 = vpack.c.b16 %v1101, %v1092
    %v1552 = vpack.c.b16 %v1102, %v1093
    %v1553 = vpack.c.b16 %v1112, %v1103
    %v1554 = vpack.c.b16 %v1113, %v1104
    %v1555 = vpack.c.b16 %v1114, %v1105
    %v1556 = vpack.c.b16 %v1115, %v1106
    %v1557 = vpack.c.b16 %v1116, %v1107
    %v1558 = vpack.c.b16 %v1117, %v1108
    %v1559 = vpack.c.b16 %v1118, %v1109
    %v1560 = vpack.c.b16 %v1119, %v1110
    %v1561 = vpack.c.b16 %v1120, %v1111
    %v1562 = vpack.c.b16 %v1130, %v1121
    %v1563 = vpack.c.b16 %v1131, %v1122
    %v1564 = vpack.c.b16 %v1132, %v1123
    %v1565 = vpack.c.b16 %v1133, %v1124
    %v1566 = vpack.c.b16 %v1134, %v1125
    %v1567 = vpack.c.b16 %v1135, %v1126
    %v1568 = vpack.c.b16 %v1136, %v1127
    %v1569 = vpack.c.b16 %v1137, %v1128
    %v1570 = vpack.c.b16 %v1138, %v1129
    %v1571 = vpack.c.b16 %v1148, %v1139
    %v1572 = vpack.c.b16 %v1149, %v1140
    %v1573 = vpack.c.b16 %v1150, %v1141
    %v1574 = vpack.c.b16 %v1151, %v1142
    %v1575 = vpack.c.b16 %v1152, %v1143
    %v1576 = vpack.c.b16 %v1153, %v1144
    %v1577 = vpack.c.b16 %v1154, %v1145
    %v1578 = vpack.c.b16 %v1155, %v1146
    %v1579 = vpack.c.b16 %v1156, %v1147
    %v1580 = vpack.c.b16 %v1166, %v1157
    %v1581 = vpack.c.b16 %v1167, %v1158
    %v1582 = vpack.c.b16 %v1168, %v1159
    %v1583 = vpack.c.b16 %v1169, %v1160
    %v1584 = vpack.c.b16 %v1170, %v1161
    %v1585 = vpack.c.b16 %v1171, %v1162
    %v1586 = vpack.c.b16 %v1172, %v1163
    %v1587 = vpack.c.b16 %v1173, %v1164
    %v1588 = vpack.c.b16 %v1174, %v1165
    %v1589 = vpack.c.b16 %v1184, %v1175
    %v1590 = vpack.c.b16 %v1185, %v1176
    %v1591 = vpack.c.b16 %v1186, %v1177
    %v1592 = vpack.c.b16 %v1187, %v1178
    %v1593 = vpack.c.b16 %v1188, %v1179
    %v1594 = vpack.c.b16 %v1189, %v1180
    %v1595 = vpack.c.b16 %v1190, %v1181
    %v1596 = vpack.c.b16 %v1191, %v1182
    %v1597 = vpack.c.b16 %v1192, %v1183
    %v1598 = vpack.c.b16 %v1202, %v1193
    %v1599 = vpack.c.b16 %v1203, %v1194
    %v1600 = vpack.c.b16 %v1204, %v1195
    %v1601 = vpack.c.b16 %v1205, %v1196
    %v1602 = vpack.c.b16 %v1206, %v1197
    %v1603 = vpack.c.b16 %v1207, %v1198
    %v1604 = vpack.c.b16 %v1208, %v1199
    %v1605 = vpack.c.b16 %v1209, %v1200
    %v1606 = vpack.c.b16 %v1210, %v1201
    %v1607 = vpack.c.b16 %v1220, %v1211
    %v1608 = vpack.c.b16 %v1221, %v1212
    %v1609 = vpack.c.b16 %v1222, %v1213
    %v1610 = vpack.c.b16 %v1223, %v1214
    %v1611 = vpack.c.b16 %v1224, %v1215
    %v1612 = vpack.c.b16 %v1225, %v1216
    %v1613 = vpack.c.b16 %v1226, %v1217
    %v1614 = vpack.c.b16 %v1227, %v1218
    %v1615 = vpack.c.b16 %v1228, %v1219
    %v1616 = vpack.c.b16 %v1238, %v1229
    %v1617 = vpack.c.b16 %v1239, %v1230
    %v1618 = vpack.c.b16 %v1240, %v1231
    %v1619 = vpack.c.b16 %v1241, %v1232
    %v1620 = vpack.c.b16 %v1242, %v1233
    %v1621 = vpack.c.b16 %v1243, %v1234
    %v1622 = vpack.c.b16 %v1244, %v1235
    %v1623 = vpack.c.b16 %v1245, %v1236
    %v1624 = vpack.c.b16 %v1246, %v1237
    %v1625 = vpack.c.b16 %v1256, %v1247
    %v1626 = vpack.c.b16 %v1257, %v1248
    %v1627 = vpack.c.b16 %v1258, %v1249
    %v1628 = vpack.c.b16 %v1259, %v1250
    %v1629 = vpack.c.b16 %v1260, %v1251
    %v1630 = vpack.c.b16 %v1261, %v1252
    %v1631 = vpack.c.b16 %v1262, %v1253
    %v1632 = vpack.c.b16 %v1263, %v1254
    %v1633 = vpack.c.b16 %v1264, %v1255
    %v1634 = vpack.c.b16 %v1274, %v1265
    %v1635 = vpack.c.b16 %v1275, %v1266
    %v1636 = vpack.c.b16 %v1276, %v1267
    %v1637 = vpack.c.b16 %v1277, %v1268
    %v1638 = vpack.c.b16 %v1278, %v1269
    %v1639 = vpack.c.b16 %v1279, %v1270
    %v1640 = vpack.c.b16 %v1280, %v1271
    %v1641 = vpack.c.b16 %v1281, %v1272
    %v1642 = vpack.c.b16 %v1282, %v1273
    %v1643 = vpack.c.b16 %v1292, %v1283
    %v1644 = vpack.c.b16 %v1293, %v1284
    %v1645 = vpack.c.b16 %v1294, %v1285
    %v1646 = vpack.c.b16 %v1295, %v1286
    %v1647 = vpack.c.b16 %v1296, %v1287
    %v1648 = vpack.c.b16 %v1297, %v1288
    %v1649 = vpack.c.b16 %v1298, %v1289
    %v1650 = vpack.c.b16 %v1299, %v1290
    %v1651 = vpack.c.b16 %v1300, %v1291
    %v1652 = vpack.c.b16 %v1310, %v1301
    %v1653 = vpack.c.b16 %v1311, %v1302
    %v1654 = vpack.c.b16 %v1312, %v1303
    %v1655 = vpack.c.b16 %v1313, %v1304
    %v1656 = vpack.c.b16 %v1314, %v1305
    %v1657 = vpack.c.b16 %v1315, %v1306
    %v1658 = vpack.c.b16 %v1316, %v1307
    %v1659 = vpack.c.b16 %v1317, %v1308
    %v1660 = vpack.c.b16 %v1318, %v1309
    %v1661 = vpack.c.b16 %v1328, %v1319
    %v1662 = vpack.c.b16 %v1329, %v1320
    %v1663 = vpack.c.b16 %v1330, %v1321
    %v1664 = vpack.c.b16 %v1331, %v1322
    %v1665 = vpack.c.b16 %v1332, %v1323
    %v1666 = vpack.c.b16 %v1333, %v1324
    %v1667 = vpack.c.b16 %v1334, %v1325
    %v1668 = vpack.c.b16 %v1335, %v1326
    %v1669 = vpack.c.b16 %v1336, %v1327
    %v1670 = vpack.c.b16 %v1346, %v1337
    %v1671 = vpack.c.b16 %v1347, %v1338
    %v1672 = vpack.c.b16 %v1348, %v1339
    %v1673 = vpack.c.b16 %v1349, %v1340
    %v1674 = vpack.c.b16 %v1350, %v1341
    %v1675 = vpack.c.b16 %v1351, %v1342
    %v1676 = vpack.c.b16 %v1352, %v1343
    %v1677 = vpack.c.b16 %v1353, %v1344
    %v1678 = vpack.c.b16 %v1354, %v1345
    %v1679 = vpack.c.b16 %v1364, %v1355
    %v1680 = vpack.c.b16 %v1365, %v1356
    %v1681 = vpack.c.b16 %v1366, %v1357
    %v1682 = vpack.c.b16 %v1367, %v1358
    %v1683 = vpack.c.b16 %v1368, %v1359
    %v1684 = vpack.c.b16 %v1369, %v1360
    %v1685 = vpack.c.b16 %v1370, %v1361
    %v1686 = vpack.c.b16 %v1371, %v1362
    %v1687 = vpack.c.b16 %v1372, %v1363
    %v1688 = vpack.c.b16 %v1382, %v1373
    %v1689 = vpack.c.b16 %v1383, %v1374
    %v1690 = vpack.c.b16 %v1384, %v1375
    %v1691 = vpack.c.b16 %v1385, %v1376
    %v1692 = vpack.c.b16 %v1386, %v1377
    %v1693 = vpack.c.b16 %v1387, %v1378
    %v1694 = vpack.c.b16 %v1388, %v1379
    %v1695 = vpack.c.b16 %v1389, %v1380
    %v1696 = vpack.c.b16 %v1390, %v1381
    %v1697 = vpack.c.b16 %v1400, %v1391
    %v1698 = vpack.c.b16 %v1401, %v1392
    %v1699 = vpack.c.b16 %v1402, %v1393
    %v1700 = vpack.c.b16 %v1403, %v1394
    %v1701 = vpack.c.b16 %v1404, %v1395
    %v1702 = vpack.c.b16 %v1405, %v1396
    %v1703 = vpack.c.b16 %v1406, %v1397
    %v1704 = vpack.c.b16 %v1407, %v1398
    %v1705 = vpack.c.b16 %v1408, %v1399
    %v1706 = vpack.c.b16 %v1418, %v1409
    %v1707 = vpack.c.b16 %v1419, %v1410
    %v1708 = vpack.c.b16 %v1420, %v1411
    %v1709 = vpack.c.b16 %v1421, %v1412
    %v1710 = vpack.c.b16 %v1422, %v1413
    %v1711 = vpack.c.b16 %v1423, %v1414
    %v1712 = vpack.c.b16 %v1424, %v1415
    %v1713 = vpack.c.b16 %v1425, %v1416
    %v1714 = vpack.c.b16 %v1426, %v1417
    %v2147 = vunpack.c.l.b16 %v383
    %v2148 = vunpack.c.l.b16 %v384
    %v2149 = vunpack.c.l.b16 %v385
    %v2150 = vunpack.c.l.b16 %v386
    %v2151 = vunpack.c.l.b16 %v387
    %v2152 = vunpack.c.l.b16 %v388
    %v2153 = vunpack.c.l.b16 %v389
    %v2154 = vunpack.c.l.b16 %v390
    %v2155 = vunpack.c.l.b16 %v391
    %v2156 = vunpack.c.l.b16 %v392
    %v2157 = vunpack.c.l.b16 %v393
    %v2158 = vunpack.c.l.b16 %v394
    %v2159 = vunpack.c.l.b16 %v395
    %v2160 = vunpack.c.l.b16 %v396
    %v2161 = vunpack.c.l.b16 %v397
    %v2162 = vunpack.c.l.b16 %v398
    %v2163 = vunpack.c.l.b16 %v399
    %v2164 = vunpack.c.l.b16 %v400
    %v2165 = vunpack.c.l.b16 %v401
    %v2166 = vunpack.c.l.b16 %v402
    %v2167 = vunpack.c.l.b16 %v403
    %v2168 = vunpack.c.l.b16 %v404
    %v2169 = vunpack.c.l.b16 %v405
    %v2170 = vunpack.c.l.b16 %v406
    %v2171 = vunpack.c.l.b16 %v407
    %v2172 = vunpack.c.l.b16 %v408
    %v2173 = vunpack.c.l.b16 %v409
    %v2174 = vunpack.c.l.b16 %v410
    %v2175 = vunpack.c.l.b16 %v411
    %v2176 = vunpack.c.l.b16 %v412
    %v2177 = vunpack.c.l.b16 %v413
    %v2178 = vunpack.c.l.b16 %v414
    %v2179 = vunpack.c.l.b16 %v415
    %v2180 = vunpack.c.l.b16 %v416
    %v2181 = vunpack.c.l.b16 %v417
    %v2182 = vunpack.c.l.b16 %v418
    %v2183 = vunpack.c.l.b16 %v419
    %v2184 = vunpack.c.l.b16 %v420
    %v2185 = vunpack.c.l.b16 %v421
    %v2186 = vunpack.c.l.b16 %v422
    %v2187 = vunpack.c.l.b16 %v423
    %v2188 = vunpack.c.l.b16 %v424
    %v2189 = vunpack.c.l.b16 %v425
    %v2190 = vunpack.c.l.b16 %v426
    %v2191 = vunpack.c.l.b16 %v427
    %v2192 = vunpack.c.l.b16 %v428
    %v2193 = vunpack.c.l.b16 %v429
    %v2194 = vunpack.c.l.b16 %v430
    %v2195 = vunpack.c.l.b16 %v431
    %v2196 = vunpack.c.l.b16 %v432
    %v2197 = vunpack.c.l.b16 %v433
    %v2198 = vunpack.c.l.b16 %v434
    %v2199 = vunpack.c.l.b16 %v435
    %v2200 = vunpack.c.l.b16 %v436
    %v2201 = vunpack.c.l.b16 %v437
    %v2202 = vunpack.c.l.b16 %v438
    %v2203 = vunpack.c.l.b16 %v439
    %v2204 = vunpack.c.l.b16 %v440
    %v2205 = vunpack.c.l.b16 %v441
    %v2206 = vunpack.c.l.b16 %v442
    %v2207 = vunpack.c.l.b16 %v443
    %v2208 = vunpack.c.l.b16 %v444
    %v2209 = vunpack.c.l.b16 %v445
    %v2210 = vunpack.c.l.b16 %v446
    %v2211 = vunpack.c.l.b16 %v447
    %v2212 = vunpack.c.l.b16 %v448
    %v2213 = vunpack.c.l.b16 %v449
    %v2214 = vunpack.c.l.b16 %v450
    %v2215 = vunpack.c.l.b16 %v451
    %v2216 = vunpack.c.l.b16 %v452
    %v2217 = vunpack.c.l.b16 %v453
    %v2218 = vunpack.c.l.b16 %v454
    %v2219 = vunpack.c.l.b16 %v455
    %v2220 = vunpack.c.l.b16 %v456
    %v2221 = vunpack.c.l.b16 %v457
    %v2222 = vunpack.c.l.b16 %v458
    %v2223 = vunpack.c.l.b16 %v459
    %v2224 = vunpack.c.l.b16 %v460
    %v2225 = vunpack.c.l.b16 %v461
    %v2226 = vunpack.c.l.b16 %v462
    %v2227 = vunpack.c.l.b16 %v463
    %v2228 = vunpack.c.l.b16 %v464
    %v2229 = vunpack.c.l.b16 %v465
    %v2230 = vunpack.c.l.b16 %v466
    %v2231 = vunpack.c.l.b16 %v467
    %v2232 = vunpack.c.l.b16 %v468
    %v2233 = vunpack.c.l.b16 %v469
    %v2234 = vunpack.c.l.b16 %v470
    %v2235 = vunpack.c.l.b16 %v471
    %v2236 = vunpack.c.l.b16 %v472
    %v2237 = vunpack.c.l.b16 %v473
    %v2238 = vunpack.c.l.b16 %v474
    %v2239 = vunpack.c.l.b16 %v475
    %v2240 = vunpack.c.l.b16 %v476
    %v2241 = vunpack.c.l.b16 %v477
    %v2242 = vunpack.c.l.b16 %v478
    %v2243 = vunpack.c.l.b16 %v479
    %v2244 = vunpack.c.l.b16 %v480
    %v2245 = vunpack.c.l.b16 %v481
    %v2246 = vunpack.c.l.b16 %v482
    %v2247 = vunpack.c.l.b16 %v483
    %v2248 = vunpack.c.l.b16 %v484
    %v2249 = vunpack.c.l.b16 %v485
    %v2250 = vunpack.c.l.b16 %v486
    %v2251 = vunpack.c.l.b16 %v487
    %v2252 = vunpack.c.l.b16 %v488
    %v2253 = vunpack.c.l.b16 %v489
    %v2254 = vunpack.c.l.b16 %v490
    %v2255 = vunpack.c.l.b16 %v491
    %v2256 = vunpack.c.l.b16 %v492
    %v2257 = vunpack.c.l.b16 %v493
    %v2258 = vunpack.c.l.b16 %v494
    %v2259 = vunpack.c.l.b16 %v495
    %v2260 = vunpack.c.l.b16 %v496
    %v2261 = vunpack.c.l.b16 %v497
    %v2262 = vunpack.c.l.b16 %v498
    %v2263 = vunpack.c.l.b16 %v499
    %v2264 = vunpack.c.l.b16 %v500
    %v2265 = vunpack.c.l.b16 %v501
    %v2266 = vunpack.c.l.b16 %v502
    %v2267 = vunpack.c.l.b16 %v503
    %v2268 = vunpack.c.l.b16 %v504
    %v2269 = vunpack.c.l.b16 %v505
    %v2270 = vunpack.c.l.b16 %v506
    %v2271 = vunpack.c.l.b16 %v507
    %v2272 = vunpack.c.l.b16 %v508
    %v2273 = vunpack.c.l.b16 %v509
    %v2274 = vunpack.c.l.b16 %v510
    %v2275 = vunpack.c.l.b16 %v511
    %v2276 = vunpack.c.l.b16 %v512
    %v2277 = vunpack.c.l.b16 %v513
    %v2278 = vunpack.c.l.b16 %v514
    %v2279 = vunpack.c.l.b16 %v515
    %v2280 = vunpack.c.l.b16 %v516
    %v2281 = vunpack.c.l.b16 %v517
    %v2282 = vunpack.c.l.b16 %v518
    %v2283 = vunpack.c.l.b16 %v519
    %v2284 = vunpack.c.l.b16 %v520
    %v2285 = vunpack.c.l.b16 %v521
    %v2286 = vunpack.c.l.b16 %v522
    %v2287 = vunpack.c.l.b16 %v523
    %v2288 = vunpack.c.l.b16 %v524
    %v2289 = vunpack.c.l.b16 %v525
    %v2290 = vunpack.c.l.b16 %v526
    %v2291 = vpack.c.b16 %v2148, %v2147
    %v2292 = vpack.c.b16 %v2150, %v2149
    %v2293 = vpack.c.b16 %v2152, %v2151
    %v2294 = vpack.c.b16 %v2154, %v2153
    %v2295 = vpack.c.b16 %v2156, %v2155
    %v2296 = vpack.c.b16 %v2158, %v2157
    %v2297 = vpack.c.b16 %v2160, %v2159
    %v2298 = vpack.c.b16 %v2162, %v2161
    %v2299 = vpack.c.b16 %v2164, %v2163
    %v2300 = vpack.c.b16 %v2166, %v2165
    %v2301 = vpack.c.b16 %v2168, %v2167
    %v2302 = vpack.c.b16 %v2170, %v2169
    %v2303 = vpack.c.b16 %v2172, %v2171
    %v2304 = vpack.c.b16 %v2174, %v2173
    %v2305 = vpack.c.b16 %v2176, %v2175
    %v2306 = vpack.c.b16 %v2178, %v2177
    %v2307 = vpack.c.b16 %v2180, %v2179
    %v2308 = vpack.c.b16 %v2182, %v2181
    %v2309 = vpack.c.b16 %v2184, %v2183
    %v2310 = vpack.c.b16 %v2186, %v2185
    %v2311 = vpack.c.b16 %v2188, %v2187
    %v2312 = vpack.c.b16 %v2190, %v2189
    %v2313 = vpack.c.b16 %v2192, %v2191
    %v2314 = vpack.c.b16 %v2194, %v2193
    %v2315 = vpack.c.b16 %v2196, %v2195
    %v2316 = vpack.c.b16 %v2198, %v2197
    %v2317 = vpack.c.b16 %v2200, %v2199
    %v2318 = vpack.c.b16 %v2202, %v2201
    %v2319 = vpack.c.b16 %v2204, %v2203
    %v2320 = vpack.c.b16 %v2206, %v2205
    %v2321 = vpack.c.b16 %v2208, %v2207
    %v2322 = vpack.c.b16 %v2210, %v2209
    %v2323 = vpack.c.b16 %v2212, %v2211
    %v2324 = vpack.c.b16 %v2214, %v2213
    %v2325 = vpack.c.b16 %v2216, %v2215
    %v2326 = vpack.c.b16 %v2218, %v2217
    %v2327 = vpack.c.b16 %v2220, %v2219
    %v2328 = vpack.c.b16 %v2222, %v2221
    %v2329 = vpack.c.b16 %v2224, %v2223
    %v2330 = vpack.c.b16 %v2226, %v2225
    %v2331 = vpack.c.b16 %v2228, %v2227
    %v2332 = vpack.c.b16 %v2230, %v2229
    %v2333 = vpack.c.b16 %v2232, %v2231
    %v2334 = vpack.c.b16 %v2234, %v2233
    %v2335 = vpack.c.b16 %v2236, %v2235
    %v2336 = vpack.c.b16 %v2238, %v2237
    %v2337 = vpack.c.b16 %v2240, %v2239
    %v2338 = vpack.c.b16 %v2242, %v2241
    %v2339 = vpack.c.b16 %v2244, %v2243
    %v2340 = vpack.c.b16 %v2246, %v2245
    %v2341 = vpack.c.b16 %v2248, %v2247
    %v2342 = vpack.c.b16 %v2250, %v2249
    %v2343 = vpack.c.b16 %v2252, %v2251
    %v2344 = vpack.c.b16 %v2254, %v2253
    %v2345 = vpack.c.b16 %v2256, %v2255
    %v2346 = vpack.c.b16 %v2258, %v2257
    %v2347 = vpack.c.b16 %v2260, %v2259
    %v2348 = vpack.c.b16 %v2262, %v2261
    %v2349 = vpack.c.b16 %v2264, %v2263
    %v2350 = vpack.c.b16 %v2266, %v2265
    %v2351 = vpack.c.b16 %v2268, %v2267
    %v2352 = vpack.c.b16 %v2270, %v2269
    %v2353 = vpack.c.b16 %v2272, %v2271
    %v2354 = vpack.c.b16 %v2274, %v2273
    %v2355 = vpack.c.b16 %v2276, %v2275
    %v2356 = vpack.c.b16 %v2278, %v2277
    %v2357 = vpack.c.b16 %v2280, %v2279
    %v2358 = vpack.c.b16 %v2282, %v2281
    %v2359 = vpack.c.b16 %v2284, %v2283
    %v2360 = vpack.c.b16 %v2286, %v2285
    %v2361 = vpack.c.b16 %v2288, %v2287
    %v2362 = vpack.c.b16 %v2290, %v2289
    %2435 = vmatpush.bf16.msra.mxu0 %v2298
    %2436 = vmatpush.bf16.msra.mxu0 %v2297
    %2437 = vmatpush.bf16.msra.mxu0 %v2296
    %2438 = vmatpush.bf16.msra.mxu0 %v2295
    %2439 = vmatpush.bf16.msra.mxu0 %v2294
    %2440 = vmatpush.bf16.msra.mxu0 %v2293
    %2441 = vmatpush.bf16.msra.mxu0 %v2292
    %2442 = vmatpush.bf16.msra.mxu0 %v2291
    %2443 = vmatmul.bf16.gmra.mxu0 %v1427
    %v2444 = vpop.f32.mrf.mxu0
    %v2445 = vadd.f32 %v529, %v2444
    %v2446 = vpop.f32.mrf.mxu0
    %v2447 = vadd.f32 %v529, %v2446
    %2448 = vmatmul.bf16.gmra.mxu0 %v1436
    %v2449 = vpop.f32.mrf.mxu0
    %v2450 = vadd.f32 %v529, %v2449
    %v2451 = vpop.f32.mrf.mxu0
    %v2452 = vadd.f32 %v529, %v2451
    %2453 = vmatmul.bf16.gmra.mxu0 %v1445
    %v2454 = vpop.f32.mrf.mxu0
    %v2455 = vadd.f32 %v529, %v2454
    %v2456 = vpop.f32.mrf.mxu0
    %v2457 = vadd.f32 %v529, %v2456
    %2458 = vmatmul.bf16.gmra.mxu0 %v1454
    %v2459 = vpop.f32.mrf.mxu0
    %v2460 = vadd.f32 %v529, %v2459
    %v2461 = vpop.f32.mrf.mxu0
    %v2462 = vadd.f32 %v529, %v2461
    %2463 = vmatmul.bf16.gmra.mxu0 %v1463
    %v2464 = vpop.f32.mrf.mxu0
    %v2465 = vadd.f32 %v529, %v2464
    %v2466 = vpop.f32.mrf.mxu0
    %v2467 = vadd.f32 %v529, %v2466
    %2468 = vmatmul.bf16.gmra.mxu0 %v1472
    %v2469 = vpop.f32.mrf.mxu0
    %v2470 = vadd.f32 %v529, %v2469
    %v2471 = vpop.f32.mrf.mxu0
    %v2472 = vadd.f32 %v529, %v2471
    %2473 = vmatmul.bf16.gmra.mxu0 %v1481
    %v2474 = vpop.f32.mrf.mxu0
    %v2475 = vadd.f32 %v529, %v2474
    %v2476 = vpop.f32.mrf.mxu0
    %v2477 = vadd.f32 %v529, %v2476
    %2478 = vmatmul.bf16.gmra.mxu0 %v1490
    %v2479 = vpop.f32.mrf.mxu0
    %v2480 = vadd.f32 %v529, %v2479
    %v2481 = vpop.f32.mrf.mxu0
    %v2482 = vadd.f32 %v529, %v2481
    %2483 = vmatmul.bf16.gmra.mxu0 %v1499
    %v2484 = vpop.f32.mrf.mxu0
    %v2485 = vadd.f32 %v529, %v2484
    %v2486 = vpop.f32.mrf.mxu0
    %v2487 = vadd.f32 %v529, %v2486
    %2488 = vmatmul.bf16.gmra.mxu0 %v1508
    %v2489 = vpop.f32.mrf.mxu0
    %v2490 = vadd.f32 %v529, %v2489
    %v2491 = vpop.f32.mrf.mxu0
    %v2492 = vadd.f32 %v529, %v2491
    %2493 = vmatmul.bf16.gmra.mxu0 %v1517
    %v2494 = vpop.f32.mrf.mxu0
    %v2495 = vadd.f32 %v529, %v2494
    %v2496 = vpop.f32.mrf.mxu0
    %v2497 = vadd.f32 %v529, %v2496
    %2498 = vmatmul.bf16.gmra.mxu0 %v1526
    %v2499 = vpop.f32.mrf.mxu0
    %v2500 = vadd.f32 %v529, %v2499
    %v2501 = vpop.f32.mrf.mxu0
    %v2502 = vadd.f32 %v529, %v2501
    %2503 = vmatmul.bf16.gmra.mxu0 %v1535
    %v2504 = vpop.f32.mrf.mxu0
    %v2505 = vadd.f32 %v529, %v2504
    %v2506 = vpop.f32.mrf.mxu0
    %v2507 = vadd.f32 %v529, %v2506
    %2508 = vmatmul.bf16.gmra.mxu0 %v1544
    %v2509 = vpop.f32.mrf.mxu0
    %v2510 = vadd.f32 %v529, %v2509
    %v2511 = vpop.f32.mrf.mxu0
    %v2512 = vadd.f32 %v529, %v2511
    %2513 = vmatmul.bf16.gmra.mxu0 %v1553
    %v2514 = vpop.f32.mrf.mxu0
    %v2515 = vadd.f32 %v529, %v2514
    %v2516 = vpop.f32.mrf.mxu0
    %v2517 = vadd.f32 %v529, %v2516
    %2518 = vmatmul.bf16.gmra.mxu0 %v1562
    %v2519 = vpop.f32.mrf.mxu0
    %v2520 = vadd.f32 %v529, %v2519
    %v2521 = vpop.f32.mrf.mxu0
    %v2522 = vadd.f32 %v529, %v2521
    %2523 = vmatmul.bf16.gmra.mxu0 %v1571
    %v2524 = vpop.f32.mrf.mxu0
    %v2525 = vadd.f32 %v529, %v2524
    %v2526 = vpop.f32.mrf.mxu0
    %v2527 = vadd.f32 %v529, %v2526
    %2528 = vmatmul.bf16.gmra.mxu0 %v1580
    %v2529 = vpop.f32.mrf.mxu0
    %v2530 = vadd.f32 %v529, %v2529
    %v2531 = vpop.f32.mrf.mxu0
    %v2532 = vadd.f32 %v529, %v2531
    %2533 = vmatmul.bf16.gmra.mxu0 %v1589
    %v2534 = vpop.f32.mrf.mxu0
    %v2535 = vadd.f32 %v529, %v2534
    %v2536 = vpop.f32.mrf.mxu0
    %v2537 = vadd.f32 %v529, %v2536
    %2538 = vmatmul.bf16.gmra.mxu0 %v1598
    %v2539 = vpop.f32.mrf.mxu0
    %v2540 = vadd.f32 %v529, %v2539
    %v2541 = vpop.f32.mrf.mxu0
    %v2542 = vadd.f32 %v529, %v2541
    %2543 = vmatmul.bf16.gmra.mxu0 %v1607
    %v2544 = vpop.f32.mrf.mxu0
    %v2545 = vadd.f32 %v529, %v2544
    %v2546 = vpop.f32.mrf.mxu0
    %v2547 = vadd.f32 %v529, %v2546
    %2548 = vmatmul.bf16.gmra.mxu0 %v1616
    %v2549 = vpop.f32.mrf.mxu0
    %v2550 = vadd.f32 %v529, %v2549
    %v2551 = vpop.f32.mrf.mxu0
    %v2552 = vadd.f32 %v529, %v2551
    %2553 = vmatmul.bf16.gmra.mxu0 %v1625
    %v2554 = vpop.f32.mrf.mxu0
    %v2555 = vadd.f32 %v529, %v2554
    %v2556 = vpop.f32.mrf.mxu0
    %v2557 = vadd.f32 %v529, %v2556
    %2558 = vmatmul.bf16.gmra.mxu0 %v1634
    %v2559 = vpop.f32.mrf.mxu0
    %v2560 = vadd.f32 %v529, %v2559
    %v2561 = vpop.f32.mrf.mxu0
    %v2562 = vadd.f32 %v529, %v2561
    %2563 = vmatmul.bf16.gmra.mxu0 %v1643
    %v2564 = vpop.f32.mrf.mxu0
    %v2565 = vadd.f32 %v529, %v2564
    %v2566 = vpop.f32.mrf.mxu0
    %v2567 = vadd.f32 %v529, %v2566
    %2568 = vmatmul.bf16.gmra.mxu0 %v1652
    %v2569 = vpop.f32.mrf.mxu0
    %v2570 = vadd.f32 %v529, %v2569
    %v2571 = vpop.f32.mrf.mxu0
    %v2572 = vadd.f32 %v529, %v2571
    %2573 = vmatmul.bf16.gmra.mxu0 %v1661
    %v2574 = vpop.f32.mrf.mxu0
    %v2575 = vadd.f32 %v529, %v2574
    %v2576 = vpop.f32.mrf.mxu0
    %v2577 = vadd.f32 %v529, %v2576
    %2578 = vmatmul.bf16.gmra.mxu0 %v1670
    %v2579 = vpop.f32.mrf.mxu0
    %v2580 = vadd.f32 %v529, %v2579
    %v2581 = vpop.f32.mrf.mxu0
    %v2582 = vadd.f32 %v529, %v2581
    %2583 = vmatmul.bf16.gmra.mxu0 %v1679
    %v2584 = vpop.f32.mrf.mxu0
    %v2585 = vadd.f32 %v529, %v2584
    %v2586 = vpop.f32.mrf.mxu0
    %v2587 = vadd.f32 %v529, %v2586
    %2588 = vmatmul.bf16.gmra.mxu0 %v1688
    %v2589 = vpop.f32.mrf.mxu0
    %v2590 = vadd.f32 %v529, %v2589
    %v2591 = vpop.f32.mrf.mxu0
    %v2592 = vadd.f32 %v529, %v2591
    %2593 = vmatmul.bf16.gmra.mxu0 %v1697
    %v2594 = vpop.f32.mrf.mxu0
    %v2595 = vadd.f32 %v529, %v2594
    %v2596 = vpop.f32.mrf.mxu0
    %v2597 = vadd.f32 %v529, %v2596
    %2598 = vmatmul.bf16.gmra.mxu0 %v1706
    %v2599 = vpop.f32.mrf.mxu0
    %v2600 = vadd.f32 %v529, %v2599
    %v2601 = vpop.f32.mrf.mxu0
    %v2602 = vadd.f32 %v529, %v2601
    %2603 = vdwg.mxu0
    %2604 = vmatpush.bf16.msra.mxu0 %v2306
    %2605 = vmatpush.bf16.msra.mxu0 %v2305
    %2606 = vmatpush.bf16.msra.mxu0 %v2304
    %2607 = vmatpush.bf16.msra.mxu0 %v2303
    %2608 = vmatpush.bf16.msra.mxu0 %v2302
    %2609 = vmatpush.bf16.msra.mxu0 %v2301
    %2610 = vmatpush.bf16.msra.mxu0 %v2300
    %2611 = vmatpush.bf16.msra.mxu0 %v2299
    %2612 = vmatmul.bf16.gmra.mxu0 %v1428
    %v2613 = vpop.f32.mrf.mxu0
    %v2614 = vadd.f32 %v2445, %v2613
    %v2615 = vpop.f32.mrf.mxu0
    %v2616 = vadd.f32 %v2447, %v2615
    %2617 = vmatmul.bf16.gmra.mxu0 %v1437
    %v2618 = vpop.f32.mrf.mxu0
    %v2619 = vadd.f32 %v2450, %v2618
    %v2620 = vpop.f32.mrf.mxu0
    %v2621 = vadd.f32 %v2452, %v2620
    %2622 = vmatmul.bf16.gmra.mxu0 %v1446
    %v2623 = vpop.f32.mrf.mxu0
    %v2624 = vadd.f32 %v2455, %v2623
    %v2625 = vpop.f32.mrf.mxu0
    %v2626 = vadd.f32 %v2457, %v2625
    %2627 = vmatmul.bf16.gmra.mxu0 %v1455
    %v2628 = vpop.f32.mrf.mxu0
    %v2629 = vadd.f32 %v2460, %v2628
    %v2630 = vpop.f32.mrf.mxu0
    %v2631 = vadd.f32 %v2462, %v2630
    %2632 = vmatmul.bf16.gmra.mxu0 %v1464
    %v2633 = vpop.f32.mrf.mxu0
    %v2634 = vadd.f32 %v2465, %v2633
    %v2635 = vpop.f32.mrf.mxu0
    %v2636 = vadd.f32 %v2467, %v2635
    %2637 = vmatmul.bf16.gmra.mxu0 %v1473
    %v2638 = vpop.f32.mrf.mxu0
    %v2639 = vadd.f32 %v2470, %v2638
    %v2640 = vpop.f32.mrf.mxu0
    %v2641 = vadd.f32 %v2472, %v2640
    %2642 = vmatmul.bf16.gmra.mxu0 %v1482
    %v2643 = vpop.f32.mrf.mxu0
    %v2644 = vadd.f32 %v2475, %v2643
    %v2645 = vpop.f32.mrf.mxu0
    %v2646 = vadd.f32 %v2477, %v2645
    %2647 = vmatmul.bf16.gmra.mxu0 %v1491
    %v2648 = vpop.f32.mrf.mxu0
    %v2649 = vadd.f32 %v2480, %v2648
    %v2650 = vpop.f32.mrf.mxu0
    %v2651 = vadd.f32 %v2482, %v2650
    %2652 = vmatmul.bf16.gmra.mxu0 %v1500
    %v2653 = vpop.f32.mrf.mxu0
    %v2654 = vadd.f32 %v2485, %v2653
    %v2655 = vpop.f32.mrf.mxu0
    %v2656 = vadd.f32 %v2487, %v2655
    %2657 = vmatmul.bf16.gmra.mxu0 %v1509
    %v2658 = vpop.f32.mrf.mxu0
    %v2659 = vadd.f32 %v2490, %v2658
    %v2660 = vpop.f32.mrf.mxu0
    %v2661 = vadd.f32 %v2492, %v2660
    %2662 = vmatmul.bf16.gmra.mxu0 %v1518
    %v2663 = vpop.f32.mrf.mxu0
    %v2664 = vadd.f32 %v2495, %v2663
    %v2665 = vpop.f32.mrf.mxu0
    %v2666 = vadd.f32 %v2497, %v2665
    %2667 = vmatmul.bf16.gmra.mxu0 %v1527
    %v2668 = vpop.f32.mrf.mxu0
    %v2669 = vadd.f32 %v2500, %v2668
    %v2670 = vpop.f32.mrf.mxu0
    %v2671 = vadd.f32 %v2502, %v2670
    %2672 = vmatmul.bf16.gmra.mxu0 %v1536
    %v2673 = vpop.f32.mrf.mxu0
    %v2674 = vadd.f32 %v2505, %v2673
    %v2675 = vpop.f32.mrf.mxu0
    %v2676 = vadd.f32 %v2507, %v2675
    %2677 = vmatmul.bf16.gmra.mxu0 %v1545
    %v2678 = vpop.f32.mrf.mxu0
    %v2679 = vadd.f32 %v2510, %v2678
    %v2680 = vpop.f32.mrf.mxu0
    %v2681 = vadd.f32 %v2512, %v2680
    %2682 = vmatmul.bf16.gmra.mxu0 %v1554
    %v2683 = vpop.f32.mrf.mxu0
    %v2684 = vadd.f32 %v2515, %v2683
    %v2685 = vpop.f32.mrf.mxu0
    %v2686 = vadd.f32 %v2517, %v2685
    %2687 = vmatmul.bf16.gmra.mxu0 %v1563
    %v2688 = vpop.f32.mrf.mxu0
    %v2689 = vadd.f32 %v2520, %v2688
    %v2690 = vpop.f32.mrf.mxu0
    %v2691 = vadd.f32 %v2522, %v2690
    %2692 = vmatmul.bf16.gmra.mxu0 %v1572
    %v2693 = vpop.f32.mrf.mxu0
    %v2694 = vadd.f32 %v2525, %v2693
    %v2695 = vpop.f32.mrf.mxu0
    %v2696 = vadd.f32 %v2527, %v2695
    %2697 = vmatmul.bf16.gmra.mxu0 %v1581
    %v2698 = vpop.f32.mrf.mxu0
    %v2699 = vadd.f32 %v2530, %v2698
    %v2700 = vpop.f32.mrf.mxu0
    %v2701 = vadd.f32 %v2532, %v2700
    %2702 = vmatmul.bf16.gmra.mxu0 %v1590
    %v2703 = vpop.f32.mrf.mxu0
    %v2704 = vadd.f32 %v2535, %v2703
    %v2705 = vpop.f32.mrf.mxu0
    %v2706 = vadd.f32 %v2537, %v2705
    %2707 = vmatmul.bf16.gmra.mxu0 %v1599
    %v2708 = vpop.f32.mrf.mxu0
    %v2709 = vadd.f32 %v2540, %v2708
    %v2710 = vpop.f32.mrf.mxu0
    %v2711 = vadd.f32 %v2542, %v2710
    %2712 = vmatmul.bf16.gmra.mxu0 %v1608
    %v2713 = vpop.f32.mrf.mxu0
    %v2714 = vadd.f32 %v2545, %v2713
    %v2715 = vpop.f32.mrf.mxu0
    %v2716 = vadd.f32 %v2547, %v2715
    %2717 = vmatmul.bf16.gmra.mxu0 %v1617
    %v2718 = vpop.f32.mrf.mxu0
    %v2719 = vadd.f32 %v2550, %v2718
    %v2720 = vpop.f32.mrf.mxu0
    %v2721 = vadd.f32 %v2552, %v2720
    %2722 = vmatmul.bf16.gmra.mxu0 %v1626
    %v2723 = vpop.f32.mrf.mxu0
    %v2724 = vadd.f32 %v2555, %v2723
    %v2725 = vpop.f32.mrf.mxu0
    %v2726 = vadd.f32 %v2557, %v2725
    %2727 = vmatmul.bf16.gmra.mxu0 %v1635
    %v2728 = vpop.f32.mrf.mxu0
    %v2729 = vadd.f32 %v2560, %v2728
    %v2730 = vpop.f32.mrf.mxu0
    %v2731 = vadd.f32 %v2562, %v2730
    %2732 = vmatmul.bf16.gmra.mxu0 %v1644
    %v2733 = vpop.f32.mrf.mxu0
    %v2734 = vadd.f32 %v2565, %v2733
    %v2735 = vpop.f32.mrf.mxu0
    %v2736 = vadd.f32 %v2567, %v2735
    %2737 = vmatmul.bf16.gmra.mxu0 %v1653
    %v2738 = vpop.f32.mrf.mxu0
    %v2739 = vadd.f32 %v2570, %v2738
    %v2740 = vpop.f32.mrf.mxu0
    %v2741 = vadd.f32 %v2572, %v2740
    %2742 = vmatmul.bf16.gmra.mxu0 %v1662
    %v2743 = vpop.f32.mrf.mxu0
    %v2744 = vadd.f32 %v2575, %v2743
    %v2745 = vpop.f32.mrf.mxu0
    %v2746 = vadd.f32 %v2577, %v2745
    %2747 = vmatmul.bf16.gmra.mxu0 %v1671
    %v2748 = vpop.f32.mrf.mxu0
    %v2749 = vadd.f32 %v2580, %v2748
    %v2750 = vpop.f32.mrf.mxu0
    %v2751 = vadd.f32 %v2582, %v2750
    %2752 = vmatmul.bf16.gmra.mxu0 %v1680
    %v2753 = vpop.f32.mrf.mxu0
    %v2754 = vadd.f32 %v2585, %v2753
    %v2755 = vpop.f32.mrf.mxu0
    %v2756 = vadd.f32 %v2587, %v2755
    %2757 = vmatmul.bf16.gmra.mxu0 %v1689
    %v2758 = vpop.f32.mrf.mxu0
    %v2759 = vadd.f32 %v2590, %v2758
    %v2760 = vpop.f32.mrf.mxu0
    %v2761 = vadd.f32 %v2592, %v2760
    %2762 = vmatmul.bf16.gmra.mxu0 %v1698
    %v2763 = vpop.f32.mrf.mxu0
    %v2764 = vadd.f32 %v2595, %v2763
    %v2765 = vpop.f32.mrf.mxu0
    %v2766 = vadd.f32 %v2597, %v2765
    %2767 = vmatmul.bf16.gmra.mxu0 %v1707
    %v2768 = vpop.f32.mrf.mxu0
    %v2769 = vadd.f32 %v2600, %v2768
    %v2770 = vpop.f32.mrf.mxu0
    %v2771 = vadd.f32 %v2602, %v2770
    %2772 = vdwg.mxu0
    %2773 = vmatpush.bf16.msra.mxu0 %v2314
    %2774 = vmatpush.bf16.msra.mxu0 %v2313
    %2775 = vmatpush.bf16.msra.mxu0 %v2312
    %2776 = vmatpush.bf16.msra.mxu0 %v2311
    %2777 = vmatpush.bf16.msra.mxu0 %v2310
    %2778 = vmatpush.bf16.msra.mxu0 %v2309
    %2779 = vmatpush.bf16.msra.mxu0 %v2308
    %2780 = vmatpush.bf16.msra.mxu0 %v2307
    %2781 = vmatmul.bf16.gmra.mxu0 %v1429
    %v2782 = vpop.f32.mrf.mxu0
    %v2783 = vadd.f32 %v2614, %v2782
    %v2784 = vpop.f32.mrf.mxu0
    %v2785 = vadd.f32 %v2616, %v2784
    %2786 = vmatmul.bf16.gmra.mxu0 %v1438
    %v2787 = vpop.f32.mrf.mxu0
    %v2788 = vadd.f32 %v2619, %v2787
    %v2789 = vpop.f32.mrf.mxu0
    %v2790 = vadd.f32 %v2621, %v2789
    %2791 = vmatmul.bf16.gmra.mxu0 %v1447
    %v2792 = vpop.f32.mrf.mxu0
    %v2793 = vadd.f32 %v2624, %v2792
    %v2794 = vpop.f32.mrf.mxu0
    %v2795 = vadd.f32 %v2626, %v2794
    %2796 = vmatmul.bf16.gmra.mxu0 %v1456
    %v2797 = vpop.f32.mrf.mxu0
    %v2798 = vadd.f32 %v2629, %v2797
    %v2799 = vpop.f32.mrf.mxu0
    %v2800 = vadd.f32 %v2631, %v2799
    %2801 = vmatmul.bf16.gmra.mxu0 %v1465
    %v2802 = vpop.f32.mrf.mxu0
    %v2803 = vadd.f32 %v2634, %v2802
    %v2804 = vpop.f32.mrf.mxu0
    %v2805 = vadd.f32 %v2636, %v2804
    %2806 = vmatmul.bf16.gmra.mxu0 %v1474
    %v2807 = vpop.f32.mrf.mxu0
    %v2808 = vadd.f32 %v2639, %v2807
    %v2809 = vpop.f32.mrf.mxu0
    %v2810 = vadd.f32 %v2641, %v2809
    %2811 = vmatmul.bf16.gmra.mxu0 %v1483
    %v2812 = vpop.f32.mrf.mxu0
    %v2813 = vadd.f32 %v2644, %v2812
    %v2814 = vpop.f32.mrf.mxu0
    %v2815 = vadd.f32 %v2646, %v2814
    %2816 = vmatmul.bf16.gmra.mxu0 %v1492
    %v2817 = vpop.f32.mrf.mxu0
    %v2818 = vadd.f32 %v2649, %v2817
    %v2819 = vpop.f32.mrf.mxu0
    %v2820 = vadd.f32 %v2651, %v2819
    %2821 = vmatmul.bf16.gmra.mxu0 %v1501
    %v2822 = vpop.f32.mrf.mxu0
    %v2823 = vadd.f32 %v2654, %v2822
    %v2824 = vpop.f32.mrf.mxu0
    %v2825 = vadd.f32 %v2656, %v2824
    %2826 = vmatmul.bf16.gmra.mxu0 %v1510
    %v2827 = vpop.f32.mrf.mxu0
    %v2828 = vadd.f32 %v2659, %v2827
    %v2829 = vpop.f32.mrf.mxu0
    %v2830 = vadd.f32 %v2661, %v2829
    %2831 = vmatmul.bf16.gmra.mxu0 %v1519
    %v2832 = vpop.f32.mrf.mxu0
    %v2833 = vadd.f32 %v2664, %v2832
    %v2834 = vpop.f32.mrf.mxu0
    %v2835 = vadd.f32 %v2666, %v2834
    %2836 = vmatmul.bf16.gmra.mxu0 %v1528
    %v2837 = vpop.f32.mrf.mxu0
    %v2838 = vadd.f32 %v2669, %v2837
    %v2839 = vpop.f32.mrf.mxu0
    %v2840 = vadd.f32 %v2671, %v2839
    %2841 = vmatmul.bf16.gmra.mxu0 %v1537
    %v2842 = vpop.f32.mrf.mxu0
    %v2843 = vadd.f32 %v2674, %v2842
    %v2844 = vpop.f32.mrf.mxu0
    %v2845 = vadd.f32 %v2676, %v2844
    %2846 = vmatmul.bf16.gmra.mxu0 %v1546
    %v2847 = vpop.f32.mrf.mxu0
    %v2848 = vadd.f32 %v2679, %v2847
    %v2849 = vpop.f32.mrf.mxu0
    %v2850 = vadd.f32 %v2681, %v2849
    %2851 = vmatmul.bf16.gmra.mxu0 %v1555
    %v2852 = vpop.f32.mrf.mxu0
    %v2853 = vadd.f32 %v2684, %v2852
    %v2854 = vpop.f32.mrf.mxu0
    %v2855 = vadd.f32 %v2686, %v2854
    %2856 = vmatmul.bf16.gmra.mxu0 %v1564
    %v2857 = vpop.f32.mrf.mxu0
    %v2858 = vadd.f32 %v2689, %v2857
    %v2859 = vpop.f32.mrf.mxu0
    %v2860 = vadd.f32 %v2691, %v2859
    %2861 = vmatmul.bf16.gmra.mxu0 %v1573
    %v2862 = vpop.f32.mrf.mxu0
    %v2863 = vadd.f32 %v2694, %v2862
    %v2864 = vpop.f32.mrf.mxu0
    %v2865 = vadd.f32 %v2696, %v2864
    %2866 = vmatmul.bf16.gmra.mxu0 %v1582
    %v2867 = vpop.f32.mrf.mxu0
    %v2868 = vadd.f32 %v2699, %v2867
    %v2869 = vpop.f32.mrf.mxu0
    %v2870 = vadd.f32 %v2701, %v2869
    %2871 = vmatmul.bf16.gmra.mxu0 %v1591
    %v2872 = vpop.f32.mrf.mxu0
    %v2873 = vadd.f32 %v2704, %v2872
    %v2874 = vpop.f32.mrf.mxu0
    %v2875 = vadd.f32 %v2706, %v2874
    %2876 = vmatmul.bf16.gmra.mxu0 %v1600
    %v2877 = vpop.f32.mrf.mxu0
    %v2878 = vadd.f32 %v2709, %v2877
    %v2879 = vpop.f32.mrf.mxu0
    %v2880 = vadd.f32 %v2711, %v2879
    %2881 = vmatmul.bf16.gmra.mxu0 %v1609
    %v2882 = vpop.f32.mrf.mxu0
    %v2883 = vadd.f32 %v2714, %v2882
    %v2884 = vpop.f32.mrf.mxu0
    %v2885 = vadd.f32 %v2716, %v2884
    %2886 = vmatmul.bf16.gmra.mxu0 %v1618
    %v2887 = vpop.f32.mrf.mxu0
    %v2888 = vadd.f32 %v2719, %v2887
    %v2889 = vpop.f32.mrf.mxu0
    %v2890 = vadd.f32 %v2721, %v2889
    %2891 = vmatmul.bf16.gmra.mxu0 %v1627
    %v2892 = vpop.f32.mrf.mxu0
    %v2893 = vadd.f32 %v2724, %v2892
    %v2894 = vpop.f32.mrf.mxu0
    %v2895 = vadd.f32 %v2726, %v2894
    %2896 = vmatmul.bf16.gmra.mxu0 %v1636
    %v2897 = vpop.f32.mrf.mxu0
    %v2898 = vadd.f32 %v2729, %v2897
    %v2899 = vpop.f32.mrf.mxu0
    %v2900 = vadd.f32 %v2731, %v2899
    %2901 = vmatmul.bf16.gmra.mxu0 %v1645
    %v2902 = vpop.f32.mrf.mxu0
    %v2903 = vadd.f32 %v2734, %v2902
    %v2904 = vpop.f32.mrf.mxu0
    %v2905 = vadd.f32 %v2736, %v2904
    %2906 = vmatmul.bf16.gmra.mxu0 %v1654
    %v2907 = vpop.f32.mrf.mxu0
    %v2908 = vadd.f32 %v2739, %v2907
    %v2909 = vpop.f32.mrf.mxu0
    %v2910 = vadd.f32 %v2741, %v2909
    %2911 = vmatmul.bf16.gmra.mxu0 %v1663
    %v2912 = vpop.f32.mrf.mxu0
    %v2913 = vadd.f32 %v2744, %v2912
    %v2914 = vpop.f32.mrf.mxu0
    %v2915 = vadd.f32 %v2746, %v2914
    %2916 = vmatmul.bf16.gmra.mxu0 %v1672
    %v2917 = vpop.f32.mrf.mxu0
    %v2918 = vadd.f32 %v2749, %v2917
    %v2919 = vpop.f32.mrf.mxu0
    %v2920 = vadd.f32 %v2751, %v2919
    %2921 = vmatmul.bf16.gmra.mxu0 %v1681
    %v2922 = vpop.f32.mrf.mxu0
    %v2923 = vadd.f32 %v2754, %v2922
    %v2924 = vpop.f32.mrf.mxu0
    %v2925 = vadd.f32 %v2756, %v2924
    %2926 = vmatmul.bf16.gmra.mxu0 %v1690
    %v2927 = vpop.f32.mrf.mxu0
    %v2928 = vadd.f32 %v2759, %v2927
    %v2929 = vpop.f32.mrf.mxu0
    %v2930 = vadd.f32 %v2761, %v2929
    %2931 = vmatmul.bf16.gmra.mxu0 %v1699
    %v2932 = vpop.f32.mrf.mxu0
    %v2933 = vadd.f32 %v2764, %v2932
    %v2934 = vpop.f32.mrf.mxu0
    %v2935 = vadd.f32 %v2766, %v2934
    %2936 = vmatmul.bf16.gmra.mxu0 %v1708
    %v2937 = vpop.f32.mrf.mxu0
    %v2938 = vadd.f32 %v2769, %v2937
    %v2939 = vpop.f32.mrf.mxu0
    %v2940 = vadd.f32 %v2771, %v2939
    %2941 = vdwg.mxu0
    %2942 = vmatpush.bf16.msra.mxu0 %v2322
    %2943 = vmatpush.bf16.msra.mxu0 %v2321
    %2944 = vmatpush.bf16.msra.mxu0 %v2320
    %2945 = vmatpush.bf16.msra.mxu0 %v2319
    %2946 = vmatpush.bf16.msra.mxu0 %v2318
    %2947 = vmatpush.bf16.msra.mxu0 %v2317
    %2948 = vmatpush.bf16.msra.mxu0 %v2316
    %2949 = vmatpush.bf16.msra.mxu0 %v2315
    %2950 = vmatmul.bf16.gmra.mxu0 %v1430
    %v2951 = vpop.f32.mrf.mxu0
    %v2952 = vadd.f32 %v2783, %v2951
    %v2953 = vpop.f32.mrf.mxu0
    %v2954 = vadd.f32 %v2785, %v2953
    %2955 = vmatmul.bf16.gmra.mxu0 %v1439
    %v2956 = vpop.f32.mrf.mxu0
    %v2957 = vadd.f32 %v2788, %v2956
    %v2958 = vpop.f32.mrf.mxu0
    %v2959 = vadd.f32 %v2790, %v2958
    %2960 = vmatmul.bf16.gmra.mxu0 %v1448
    %v2961 = vpop.f32.mrf.mxu0
    %v2962 = vadd.f32 %v2793, %v2961
    %v2963 = vpop.f32.mrf.mxu0
    %v2964 = vadd.f32 %v2795, %v2963
    %2965 = vmatmul.bf16.gmra.mxu0 %v1457
    %v2966 = vpop.f32.mrf.mxu0
    %v2967 = vadd.f32 %v2798, %v2966
    %v2968 = vpop.f32.mrf.mxu0
    %v2969 = vadd.f32 %v2800, %v2968
    %2970 = vmatmul.bf16.gmra.mxu0 %v1466
    %v2971 = vpop.f32.mrf.mxu0
    %v2972 = vadd.f32 %v2803, %v2971
    %v2973 = vpop.f32.mrf.mxu0
    %v2974 = vadd.f32 %v2805, %v2973
    %2975 = vmatmul.bf16.gmra.mxu0 %v1475
    %v2976 = vpop.f32.mrf.mxu0
    %v2977 = vadd.f32 %v2808, %v2976
    %v2978 = vpop.f32.mrf.mxu0
    %v2979 = vadd.f32 %v2810, %v2978
    %2980 = vmatmul.bf16.gmra.mxu0 %v1484
    %v2981 = vpop.f32.mrf.mxu0
    %v2982 = vadd.f32 %v2813, %v2981
    %v2983 = vpop.f32.mrf.mxu0
    %v2984 = vadd.f32 %v2815, %v2983
    %2985 = vmatmul.bf16.gmra.mxu0 %v1493
    %v2986 = vpop.f32.mrf.mxu0
    %v2987 = vadd.f32 %v2818, %v2986
    %v2988 = vpop.f32.mrf.mxu0
    %v2989 = vadd.f32 %v2820, %v2988
    %2990 = vmatmul.bf16.gmra.mxu0 %v1502
    %v2991 = vpop.f32.mrf.mxu0
    %v2992 = vadd.f32 %v2823, %v2991
    %v2993 = vpop.f32.mrf.mxu0
    %v2994 = vadd.f32 %v2825, %v2993
    %2995 = vmatmul.bf16.gmra.mxu0 %v1511
    %v2996 = vpop.f32.mrf.mxu0
    %v2997 = vadd.f32 %v2828, %v2996
    %v2998 = vpop.f32.mrf.mxu0
    %v2999 = vadd.f32 %v2830, %v2998
    %3000 = vmatmul.bf16.gmra.mxu0 %v1520
    %v3001 = vpop.f32.mrf.mxu0
    %v3002 = vadd.f32 %v2833, %v3001
    %v3003 = vpop.f32.mrf.mxu0
    %v3004 = vadd.f32 %v2835, %v3003
    %3005 = vmatmul.bf16.gmra.mxu0 %v1529
    %v3006 = vpop.f32.mrf.mxu0
    %v3007 = vadd.f32 %v2838, %v3006
    %v3008 = vpop.f32.mrf.mxu0
    %v3009 = vadd.f32 %v2840, %v3008
    %3010 = vmatmul.bf16.gmra.mxu0 %v1538
    %v3011 = vpop.f32.mrf.mxu0
    %v3012 = vadd.f32 %v2843, %v3011
    %v3013 = vpop.f32.mrf.mxu0
    %v3014 = vadd.f32 %v2845, %v3013
    %3015 = vmatmul.bf16.gmra.mxu0 %v1547
    %v3016 = vpop.f32.mrf.mxu0
    %v3017 = vadd.f32 %v2848, %v3016
    %v3018 = vpop.f32.mrf.mxu0
    %v3019 = vadd.f32 %v2850, %v3018
    %3020 = vmatmul.bf16.gmra.mxu0 %v1556
    %v3021 = vpop.f32.mrf.mxu0
    %v3022 = vadd.f32 %v2853, %v3021
    %v3023 = vpop.f32.mrf.mxu0
    %v3024 = vadd.f32 %v2855, %v3023
    %3025 = vmatmul.bf16.gmra.mxu0 %v1565
    %v3026 = vpop.f32.mrf.mxu0
    %v3027 = vadd.f32 %v2858, %v3026
    %v3028 = vpop.f32.mrf.mxu0
    %v3029 = vadd.f32 %v2860, %v3028
    %3030 = vmatmul.bf16.gmra.mxu0 %v1574
    %v3031 = vpop.f32.mrf.mxu0
    %v3032 = vadd.f32 %v2863, %v3031
    %v3033 = vpop.f32.mrf.mxu0
    %v3034 = vadd.f32 %v2865, %v3033
    %3035 = vmatmul.bf16.gmra.mxu0 %v1583
    %v3036 = vpop.f32.mrf.mxu0
    %v3037 = vadd.f32 %v2868, %v3036
    %v3038 = vpop.f32.mrf.mxu0
    %v3039 = vadd.f32 %v2870, %v3038
    %3040 = vmatmul.bf16.gmra.mxu0 %v1592
    %v3041 = vpop.f32.mrf.mxu0
    %v3042 = vadd.f32 %v2873, %v3041
    %v3043 = vpop.f32.mrf.mxu0
    %v3044 = vadd.f32 %v2875, %v3043
    %3045 = vmatmul.bf16.gmra.mxu0 %v1601
    %v3046 = vpop.f32.mrf.mxu0
    %v3047 = vadd.f32 %v2878, %v3046
    %v3048 = vpop.f32.mrf.mxu0
    %v3049 = vadd.f32 %v2880, %v3048
    %3050 = vmatmul.bf16.gmra.mxu0 %v1610
    %v3051 = vpop.f32.mrf.mxu0
    %v3052 = vadd.f32 %v2883, %v3051
    %v3053 = vpop.f32.mrf.mxu0
    %v3054 = vadd.f32 %v2885, %v3053
    %3055 = vmatmul.bf16.gmra.mxu0 %v1619
    %v3056 = vpop.f32.mrf.mxu0
    %v3057 = vadd.f32 %v2888, %v3056
    %v3058 = vpop.f32.mrf.mxu0
    %v3059 = vadd.f32 %v2890, %v3058
    %3060 = vmatmul.bf16.gmra.mxu0 %v1628
    %v3061 = vpop.f32.mrf.mxu0
    %v3062 = vadd.f32 %v2893, %v3061
    %v3063 = vpop.f32.mrf.mxu0
    %v3064 = vadd.f32 %v2895, %v3063
    %3065 = vmatmul.bf16.gmra.mxu0 %v1637
    %v3066 = vpop.f32.mrf.mxu0
    %v3067 = vadd.f32 %v2898, %v3066
    %v3068 = vpop.f32.mrf.mxu0
    %v3069 = vadd.f32 %v2900, %v3068
    %3070 = vmatmul.bf16.gmra.mxu0 %v1646
    %v3071 = vpop.f32.mrf.mxu0
    %v3072 = vadd.f32 %v2903, %v3071
    %v3073 = vpop.f32.mrf.mxu0
    %v3074 = vadd.f32 %v2905, %v3073
    %3075 = vmatmul.bf16.gmra.mxu0 %v1655
    %v3076 = vpop.f32.mrf.mxu0
    %v3077 = vadd.f32 %v2908, %v3076
    %v3078 = vpop.f32.mrf.mxu0
    %v3079 = vadd.f32 %v2910, %v3078
    %3080 = vmatmul.bf16.gmra.mxu0 %v1664
    %v3081 = vpop.f32.mrf.mxu0
    %v3082 = vadd.f32 %v2913, %v3081
    %v3083 = vpop.f32.mrf.mxu0
    %v3084 = vadd.f32 %v2915, %v3083
    %3085 = vmatmul.bf16.gmra.mxu0 %v1673
    %v3086 = vpop.f32.mrf.mxu0
    %v3087 = vadd.f32 %v2918, %v3086
    %v3088 = vpop.f32.mrf.mxu0
    %v3089 = vadd.f32 %v2920, %v3088
    %3090 = vmatmul.bf16.gmra.mxu0 %v1682
    %v3091 = vpop.f32.mrf.mxu0
    %v3092 = vadd.f32 %v2923, %v3091
    %v3093 = vpop.f32.mrf.mxu0
    %v3094 = vadd.f32 %v2925, %v3093
    %3095 = vmatmul.bf16.gmra.mxu0 %v1691
    %v3096 = vpop.f32.mrf.mxu0
    %v3097 = vadd.f32 %v2928, %v3096
    %v3098 = vpop.f32.mrf.mxu0
    %v3099 = vadd.f32 %v2930, %v3098
    %3100 = vmatmul.bf16.gmra.mxu0 %v1700
    %v3101 = vpop.f32.mrf.mxu0
    %v3102 = vadd.f32 %v2933, %v3101
    %v3103 = vpop.f32.mrf.mxu0
    %v3104 = vadd.f32 %v2935, %v3103
    %3105 = vmatmul.bf16.gmra.mxu0 %v1709
    %v3106 = vpop.f32.mrf.mxu0
    %v3107 = vadd.f32 %v2938, %v3106
    %v3108 = vpop.f32.mrf.mxu0
    %v3109 = vadd.f32 %v2940, %v3108
    %3110 = vdwg.mxu0
    %3111 = vmatpush.bf16.msra.mxu0 %v2330
    %3112 = vmatpush.bf16.msra.mxu0 %v2329
    %3113 = vmatpush.bf16.msra.mxu0 %v2328
    %3114 = vmatpush.bf16.msra.mxu0 %v2327
    %3115 = vmatpush.bf16.msra.mxu0 %v2326
    %3116 = vmatpush.bf16.msra.mxu0 %v2325
    %3117 = vmatpush.bf16.msra.mxu0 %v2324
    %3118 = vmatpush.bf16.msra.mxu0 %v2323
    %3119 = vmatmul.bf16.gmra.mxu0 %v1431
    %v3120 = vpop.f32.mrf.mxu0
    %v3121 = vadd.f32 %v2952, %v3120
    %v3122 = vpop.f32.mrf.mxu0
    %v3123 = vadd.f32 %v2954, %v3122
    %3124 = vmatmul.bf16.gmra.mxu0 %v1440
    %v3125 = vpop.f32.mrf.mxu0
    %v3126 = vadd.f32 %v2957, %v3125
    %v3127 = vpop.f32.mrf.mxu0
    %v3128 = vadd.f32 %v2959, %v3127
    %3129 = vmatmul.bf16.gmra.mxu0 %v1449
    %v3130 = vpop.f32.mrf.mxu0
    %v3131 = vadd.f32 %v2962, %v3130
    %v3132 = vpop.f32.mrf.mxu0
    %v3133 = vadd.f32 %v2964, %v3132
    %3134 = vmatmul.bf16.gmra.mxu0 %v1458
    %v3135 = vpop.f32.mrf.mxu0
    %v3136 = vadd.f32 %v2967, %v3135
    %v3137 = vpop.f32.mrf.mxu0
    %v3138 = vadd.f32 %v2969, %v3137
    %3139 = vmatmul.bf16.gmra.mxu0 %v1467
    %v3140 = vpop.f32.mrf.mxu0
    %v3141 = vadd.f32 %v2972, %v3140
    %v3142 = vpop.f32.mrf.mxu0
    %v3143 = vadd.f32 %v2974, %v3142
    %3144 = vmatmul.bf16.gmra.mxu0 %v1476
    %v3145 = vpop.f32.mrf.mxu0
    %v3146 = vadd.f32 %v2977, %v3145
    %v3147 = vpop.f32.mrf.mxu0
    %v3148 = vadd.f32 %v2979, %v3147
    %3149 = vmatmul.bf16.gmra.mxu0 %v1485
    %v3150 = vpop.f32.mrf.mxu0
    %v3151 = vadd.f32 %v2982, %v3150
    %v3152 = vpop.f32.mrf.mxu0
    %v3153 = vadd.f32 %v2984, %v3152
    %3154 = vmatmul.bf16.gmra.mxu0 %v1494
    %v3155 = vpop.f32.mrf.mxu0
    %v3156 = vadd.f32 %v2987, %v3155
    %v3157 = vpop.f32.mrf.mxu0
    %v3158 = vadd.f32 %v2989, %v3157
    %3159 = vmatmul.bf16.gmra.mxu0 %v1503
    %v3160 = vpop.f32.mrf.mxu0
    %v3161 = vadd.f32 %v2992, %v3160
    %v3162 = vpop.f32.mrf.mxu0
    %v3163 = vadd.f32 %v2994, %v3162
    %3164 = vmatmul.bf16.gmra.mxu0 %v1512
    %v3165 = vpop.f32.mrf.mxu0
    %v3166 = vadd.f32 %v2997, %v3165
    %v3167 = vpop.f32.mrf.mxu0
    %v3168 = vadd.f32 %v2999, %v3167
    %3169 = vmatmul.bf16.gmra.mxu0 %v1521
    %v3170 = vpop.f32.mrf.mxu0
    %v3171 = vadd.f32 %v3002, %v3170
    %v3172 = vpop.f32.mrf.mxu0
    %v3173 = vadd.f32 %v3004, %v3172
    %3174 = vmatmul.bf16.gmra.mxu0 %v1530
    %v3175 = vpop.f32.mrf.mxu0
    %v3176 = vadd.f32 %v3007, %v3175
    %v3177 = vpop.f32.mrf.mxu0
    %v3178 = vadd.f32 %v3009, %v3177
    %3179 = vmatmul.bf16.gmra.mxu0 %v1539
    %v3180 = vpop.f32.mrf.mxu0
    %v3181 = vadd.f32 %v3012, %v3180
    %v3182 = vpop.f32.mrf.mxu0
    %v3183 = vadd.f32 %v3014, %v3182
    %3184 = vmatmul.bf16.gmra.mxu0 %v1548
    %v3185 = vpop.f32.mrf.mxu0
    %v3186 = vadd.f32 %v3017, %v3185
    %v3187 = vpop.f32.mrf.mxu0
    %v3188 = vadd.f32 %v3019, %v3187
    %3189 = vmatmul.bf16.gmra.mxu0 %v1557
    %v3190 = vpop.f32.mrf.mxu0
    %v3191 = vadd.f32 %v3022, %v3190
    %v3192 = vpop.f32.mrf.mxu0
    %v3193 = vadd.f32 %v3024, %v3192
    %3194 = vmatmul.bf16.gmra.mxu0 %v1566
    %v3195 = vpop.f32.mrf.mxu0
    %v3196 = vadd.f32 %v3027, %v3195
    %v3197 = vpop.f32.mrf.mxu0
    %v3198 = vadd.f32 %v3029, %v3197
    %3199 = vmatmul.bf16.gmra.mxu0 %v1575
    %v3200 = vpop.f32.mrf.mxu0
    %v3201 = vadd.f32 %v3032, %v3200
    %v3202 = vpop.f32.mrf.mxu0
    %v3203 = vadd.f32 %v3034, %v3202
    %3204 = vmatmul.bf16.gmra.mxu0 %v1584
    %v3205 = vpop.f32.mrf.mxu0
    %v3206 = vadd.f32 %v3037, %v3205
    %v3207 = vpop.f32.mrf.mxu0
    %v3208 = vadd.f32 %v3039, %v3207
    %3209 = vmatmul.bf16.gmra.mxu0 %v1593
    %v3210 = vpop.f32.mrf.mxu0
    %v3211 = vadd.f32 %v3042, %v3210
    %v3212 = vpop.f32.mrf.mxu0
    %v3213 = vadd.f32 %v3044, %v3212
    %3214 = vmatmul.bf16.gmra.mxu0 %v1602
    %v3215 = vpop.f32.mrf.mxu0
    %v3216 = vadd.f32 %v3047, %v3215
    %v3217 = vpop.f32.mrf.mxu0
    %v3218 = vadd.f32 %v3049, %v3217
    %3219 = vmatmul.bf16.gmra.mxu0 %v1611
    %v3220 = vpop.f32.mrf.mxu0
    %v3221 = vadd.f32 %v3052, %v3220
    %v3222 = vpop.f32.mrf.mxu0
    %v3223 = vadd.f32 %v3054, %v3222
    %3224 = vmatmul.bf16.gmra.mxu0 %v1620
    %v3225 = vpop.f32.mrf.mxu0
    %v3226 = vadd.f32 %v3057, %v3225
    %v3227 = vpop.f32.mrf.mxu0
    %v3228 = vadd.f32 %v3059, %v3227
    %3229 = vmatmul.bf16.gmra.mxu0 %v1629
    %v3230 = vpop.f32.mrf.mxu0
    %v3231 = vadd.f32 %v3062, %v3230
    %v3232 = vpop.f32.mrf.mxu0
    %v3233 = vadd.f32 %v3064, %v3232
    %3234 = vmatmul.bf16.gmra.mxu0 %v1638
    %v3235 = vpop.f32.mrf.mxu0
    %v3236 = vadd.f32 %v3067, %v3235
    %v3237 = vpop.f32.mrf.mxu0
    %v3238 = vadd.f32 %v3069, %v3237
    %3239 = vmatmul.bf16.gmra.mxu0 %v1647
    %v3240 = vpop.f32.mrf.mxu0
    %v3241 = vadd.f32 %v3072, %v3240
    %v3242 = vpop.f32.mrf.mxu0
    %v3243 = vadd.f32 %v3074, %v3242
    %3244 = vmatmul.bf16.gmra.mxu0 %v1656
    %v3245 = vpop.f32.mrf.mxu0
    %v3246 = vadd.f32 %v3077, %v3245
    %v3247 = vpop.f32.mrf.mxu0
    %v3248 = vadd.f32 %v3079, %v3247
    %3249 = vmatmul.bf16.gmra.mxu0 %v1665
    %v3250 = vpop.f32.mrf.mxu0
    %v3251 = vadd.f32 %v3082, %v3250
    %v3252 = vpop.f32.mrf.mxu0
    %v3253 = vadd.f32 %v3084, %v3252
    %3254 = vmatmul.bf16.gmra.mxu0 %v1674
    %v3255 = vpop.f32.mrf.mxu0
    %v3256 = vadd.f32 %v3087, %v3255
    %v3257 = vpop.f32.mrf.mxu0
    %v3258 = vadd.f32 %v3089, %v3257
    %3259 = vmatmul.bf16.gmra.mxu0 %v1683
    %v3260 = vpop.f32.mrf.mxu0
    %v3261 = vadd.f32 %v3092, %v3260
    %v3262 = vpop.f32.mrf.mxu0
    %v3263 = vadd.f32 %v3094, %v3262
    %3264 = vmatmul.bf16.gmra.mxu0 %v1692
    %v3265 = vpop.f32.mrf.mxu0
    %v3266 = vadd.f32 %v3097, %v3265
    %v3267 = vpop.f32.mrf.mxu0
    %v3268 = vadd.f32 %v3099, %v3267
    %3269 = vmatmul.bf16.gmra.mxu0 %v1701
    %v3270 = vpop.f32.mrf.mxu0
    %v3271 = vadd.f32 %v3102, %v3270
    %v3272 = vpop.f32.mrf.mxu0
    %v3273 = vadd.f32 %v3104, %v3272
    %3274 = vmatmul.bf16.gmra.mxu0 %v1710
    %v3275 = vpop.f32.mrf.mxu0
    %v3276 = vadd.f32 %v3107, %v3275
    %v3277 = vpop.f32.mrf.mxu0
    %v3278 = vadd.f32 %v3109, %v3277
    %3279 = vdwg.mxu0
    %3280 = vmatpush.bf16.msra.mxu0 %v2338
    %3281 = vmatpush.bf16.msra.mxu0 %v2337
    %3282 = vmatpush.bf16.msra.mxu0 %v2336
    %3283 = vmatpush.bf16.msra.mxu0 %v2335
    %3284 = vmatpush.bf16.msra.mxu0 %v2334
    %3285 = vmatpush.bf16.msra.mxu0 %v2333
    %3286 = vmatpush.bf16.msra.mxu0 %v2332
    %3287 = vmatpush.bf16.msra.mxu0 %v2331
    %3288 = vmatmul.bf16.gmra.mxu0 %v1432
    %v3289 = vpop.f32.mrf.mxu0
    %v3290 = vadd.f32 %v3121, %v3289
    %v3291 = vpop.f32.mrf.mxu0
    %v3292 = vadd.f32 %v3123, %v3291
    %3293 = vmatmul.bf16.gmra.mxu0 %v1441
    %v3294 = vpop.f32.mrf.mxu0
    %v3295 = vadd.f32 %v3126, %v3294
    %v3296 = vpop.f32.mrf.mxu0
    %v3297 = vadd.f32 %v3128, %v3296
    %3298 = vmatmul.bf16.gmra.mxu0 %v1450
    %v3299 = vpop.f32.mrf.mxu0
    %v3300 = vadd.f32 %v3131, %v3299
    %v3301 = vpop.f32.mrf.mxu0
    %v3302 = vadd.f32 %v3133, %v3301
    %3303 = vmatmul.bf16.gmra.mxu0 %v1459
    %v3304 = vpop.f32.mrf.mxu0
    %v3305 = vadd.f32 %v3136, %v3304
    %v3306 = vpop.f32.mrf.mxu0
    %v3307 = vadd.f32 %v3138, %v3306
    %3308 = vmatmul.bf16.gmra.mxu0 %v1468
    %v3309 = vpop.f32.mrf.mxu0
    %v3310 = vadd.f32 %v3141, %v3309
    %v3311 = vpop.f32.mrf.mxu0
    %v3312 = vadd.f32 %v3143, %v3311
    %3313 = vmatmul.bf16.gmra.mxu0 %v1477
    %v3314 = vpop.f32.mrf.mxu0
    %v3315 = vadd.f32 %v3146, %v3314
    %v3316 = vpop.f32.mrf.mxu0
    %v3317 = vadd.f32 %v3148, %v3316
    %3318 = vmatmul.bf16.gmra.mxu0 %v1486
    %v3319 = vpop.f32.mrf.mxu0
    %v3320 = vadd.f32 %v3151, %v3319
    %v3321 = vpop.f32.mrf.mxu0
    %v3322 = vadd.f32 %v3153, %v3321
    %3323 = vmatmul.bf16.gmra.mxu0 %v1495
    %v3324 = vpop.f32.mrf.mxu0
    %v3325 = vadd.f32 %v3156, %v3324
    %v3326 = vpop.f32.mrf.mxu0
    %v3327 = vadd.f32 %v3158, %v3326
    %3328 = vmatmul.bf16.gmra.mxu0 %v1504
    %v3329 = vpop.f32.mrf.mxu0
    %v3330 = vadd.f32 %v3161, %v3329
    %v3331 = vpop.f32.mrf.mxu0
    %v3332 = vadd.f32 %v3163, %v3331
    %3333 = vmatmul.bf16.gmra.mxu0 %v1513
    %v3334 = vpop.f32.mrf.mxu0
    %v3335 = vadd.f32 %v3166, %v3334
    %v3336 = vpop.f32.mrf.mxu0
    %v3337 = vadd.f32 %v3168, %v3336
    %3338 = vmatmul.bf16.gmra.mxu0 %v1522
    %v3339 = vpop.f32.mrf.mxu0
    %v3340 = vadd.f32 %v3171, %v3339
    %v3341 = vpop.f32.mrf.mxu0
    %v3342 = vadd.f32 %v3173, %v3341
    %3343 = vmatmul.bf16.gmra.mxu0 %v1531
    %v3344 = vpop.f32.mrf.mxu0
    %v3345 = vadd.f32 %v3176, %v3344
    %v3346 = vpop.f32.mrf.mxu0
    %v3347 = vadd.f32 %v3178, %v3346
    %3348 = vmatmul.bf16.gmra.mxu0 %v1540
    %v3349 = vpop.f32.mrf.mxu0
    %v3350 = vadd.f32 %v3181, %v3349
    %v3351 = vpop.f32.mrf.mxu0
    %v3352 = vadd.f32 %v3183, %v3351
    %3353 = vmatmul.bf16.gmra.mxu0 %v1549
    %v3354 = vpop.f32.mrf.mxu0
    %v3355 = vadd.f32 %v3186, %v3354
    %v3356 = vpop.f32.mrf.mxu0
    %v3357 = vadd.f32 %v3188, %v3356
    %3358 = vmatmul.bf16.gmra.mxu0 %v1558
    %v3359 = vpop.f32.mrf.mxu0
    %v3360 = vadd.f32 %v3191, %v3359
    %v3361 = vpop.f32.mrf.mxu0
    %v3362 = vadd.f32 %v3193, %v3361
    %3363 = vmatmul.bf16.gmra.mxu0 %v1567
    %v3364 = vpop.f32.mrf.mxu0
    %v3365 = vadd.f32 %v3196, %v3364
    %v3366 = vpop.f32.mrf.mxu0
    %v3367 = vadd.f32 %v3198, %v3366
    %3368 = vmatmul.bf16.gmra.mxu0 %v1576
    %v3369 = vpop.f32.mrf.mxu0
    %v3370 = vadd.f32 %v3201, %v3369
    %v3371 = vpop.f32.mrf.mxu0
    %v3372 = vadd.f32 %v3203, %v3371
    %3373 = vmatmul.bf16.gmra.mxu0 %v1585
    %v3374 = vpop.f32.mrf.mxu0
    %v3375 = vadd.f32 %v3206, %v3374
    %v3376 = vpop.f32.mrf.mxu0
    %v3377 = vadd.f32 %v3208, %v3376
    %3378 = vmatmul.bf16.gmra.mxu0 %v1594
    %v3379 = vpop.f32.mrf.mxu0
    %v3380 = vadd.f32 %v3211, %v3379
    %v3381 = vpop.f32.mrf.mxu0
    %v3382 = vadd.f32 %v3213, %v3381
    %3383 = vmatmul.bf16.gmra.mxu0 %v1603
    %v3384 = vpop.f32.mrf.mxu0
    %v3385 = vadd.f32 %v3216, %v3384
    %v3386 = vpop.f32.mrf.mxu0
    %v3387 = vadd.f32 %v3218, %v3386
    %3388 = vmatmul.bf16.gmra.mxu0 %v1612
    %v3389 = vpop.f32.mrf.mxu0
    %v3390 = vadd.f32 %v3221, %v3389
    %v3391 = vpop.f32.mrf.mxu0
    %v3392 = vadd.f32 %v3223, %v3391
    %3393 = vmatmul.bf16.gmra.mxu0 %v1621
    %v3394 = vpop.f32.mrf.mxu0
    %v3395 = vadd.f32 %v3226, %v3394
    %v3396 = vpop.f32.mrf.mxu0
    %v3397 = vadd.f32 %v3228, %v3396
    %3398 = vmatmul.bf16.gmra.mxu0 %v1630
    %v3399 = vpop.f32.mrf.mxu0
    %v3400 = vadd.f32 %v3231, %v3399
    %v3401 = vpop.f32.mrf.mxu0
    %v3402 = vadd.f32 %v3233, %v3401
    %3403 = vmatmul.bf16.gmra.mxu0 %v1639
    %v3404 = vpop.f32.mrf.mxu0
    %v3405 = vadd.f32 %v3236, %v3404
    %v3406 = vpop.f32.mrf.mxu0
    %v3407 = vadd.f32 %v3238, %v3406
    %3408 = vmatmul.bf16.gmra.mxu0 %v1648
    %v3409 = vpop.f32.mrf.mxu0
    %v3410 = vadd.f32 %v3241, %v3409
    %v3411 = vpop.f32.mrf.mxu0
    %v3412 = vadd.f32 %v3243, %v3411
    %3413 = vmatmul.bf16.gmra.mxu0 %v1657
    %v3414 = vpop.f32.mrf.mxu0
    %v3415 = vadd.f32 %v3246, %v3414
    %v3416 = vpop.f32.mrf.mxu0
    %v3417 = vadd.f32 %v3248, %v3416
    %3418 = vmatmul.bf16.gmra.mxu0 %v1666
    %v3419 = vpop.f32.mrf.mxu0
    %v3420 = vadd.f32 %v3251, %v3419
    %v3421 = vpop.f32.mrf.mxu0
    %v3422 = vadd.f32 %v3253, %v3421
    %3423 = vmatmul.bf16.gmra.mxu0 %v1675
    %v3424 = vpop.f32.mrf.mxu0
    %v3425 = vadd.f32 %v3256, %v3424
    %v3426 = vpop.f32.mrf.mxu0
    %v3427 = vadd.f32 %v3258, %v3426
    %3428 = vmatmul.bf16.gmra.mxu0 %v1684
    %v3429 = vpop.f32.mrf.mxu0
    %v3430 = vadd.f32 %v3261, %v3429
    %v3431 = vpop.f32.mrf.mxu0
    %v3432 = vadd.f32 %v3263, %v3431
    %3433 = vmatmul.bf16.gmra.mxu0 %v1693
    %v3434 = vpop.f32.mrf.mxu0
    %v3435 = vadd.f32 %v3266, %v3434
    %v3436 = vpop.f32.mrf.mxu0
    %v3437 = vadd.f32 %v3268, %v3436
    %3438 = vmatmul.bf16.gmra.mxu0 %v1702
    %v3439 = vpop.f32.mrf.mxu0
    %v3440 = vadd.f32 %v3271, %v3439
    %v3441 = vpop.f32.mrf.mxu0
    %v3442 = vadd.f32 %v3273, %v3441
    %3443 = vmatmul.bf16.gmra.mxu0 %v1711
    %v3444 = vpop.f32.mrf.mxu0
    %v3445 = vadd.f32 %v3276, %v3444
    %v3446 = vpop.f32.mrf.mxu0
    %v3447 = vadd.f32 %v3278, %v3446
    %3448 = vdwg.mxu0
    %3449 = vmatpush.bf16.msra.mxu0 %v2346
    %3450 = vmatpush.bf16.msra.mxu0 %v2345
    %3451 = vmatpush.bf16.msra.mxu0 %v2344
    %3452 = vmatpush.bf16.msra.mxu0 %v2343
    %3453 = vmatpush.bf16.msra.mxu0 %v2342
    %3454 = vmatpush.bf16.msra.mxu0 %v2341
    %3455 = vmatpush.bf16.msra.mxu0 %v2340
    %3456 = vmatpush.bf16.msra.mxu0 %v2339
    %3457 = vmatmul.bf16.gmra.mxu0 %v1433
    %v3458 = vpop.f32.mrf.mxu0
    %v3459 = vadd.f32 %v3290, %v3458
    %v3460 = vpop.f32.mrf.mxu0
    %v3461 = vadd.f32 %v3292, %v3460
    %3462 = vmatmul.bf16.gmra.mxu0 %v1442
    %v3463 = vpop.f32.mrf.mxu0
    %v3464 = vadd.f32 %v3295, %v3463
    %v3465 = vpop.f32.mrf.mxu0
    %v3466 = vadd.f32 %v3297, %v3465
    %3467 = vmatmul.bf16.gmra.mxu0 %v1451
    %v3468 = vpop.f32.mrf.mxu0
    %v3469 = vadd.f32 %v3300, %v3468
    %v3470 = vpop.f32.mrf.mxu0
    %v3471 = vadd.f32 %v3302, %v3470
    %3472 = vmatmul.bf16.gmra.mxu0 %v1460
    %v3473 = vpop.f32.mrf.mxu0
    %v3474 = vadd.f32 %v3305, %v3473
    %v3475 = vpop.f32.mrf.mxu0
    %v3476 = vadd.f32 %v3307, %v3475
    %3477 = vmatmul.bf16.gmra.mxu0 %v1469
    %v3478 = vpop.f32.mrf.mxu0
    %v3479 = vadd.f32 %v3310, %v3478
    %v3480 = vpop.f32.mrf.mxu0
    %v3481 = vadd.f32 %v3312, %v3480
    %3482 = vmatmul.bf16.gmra.mxu0 %v1478
    %v3483 = vpop.f32.mrf.mxu0
    %v3484 = vadd.f32 %v3315, %v3483
    %v3485 = vpop.f32.mrf.mxu0
    %v3486 = vadd.f32 %v3317, %v3485
    %3487 = vmatmul.bf16.gmra.mxu0 %v1487
    %v3488 = vpop.f32.mrf.mxu0
    %v3489 = vadd.f32 %v3320, %v3488
    %v3490 = vpop.f32.mrf.mxu0
    %v3491 = vadd.f32 %v3322, %v3490
    %3492 = vmatmul.bf16.gmra.mxu0 %v1496
    %v3493 = vpop.f32.mrf.mxu0
    %v3494 = vadd.f32 %v3325, %v3493
    %v3495 = vpop.f32.mrf.mxu0
    %v3496 = vadd.f32 %v3327, %v3495
    %3497 = vmatmul.bf16.gmra.mxu0 %v1505
    %v3498 = vpop.f32.mrf.mxu0
    %v3499 = vadd.f32 %v3330, %v3498
    %v3500 = vpop.f32.mrf.mxu0
    %v3501 = vadd.f32 %v3332, %v3500
    %3502 = vmatmul.bf16.gmra.mxu0 %v1514
    %v3503 = vpop.f32.mrf.mxu0
    %v3504 = vadd.f32 %v3335, %v3503
    %v3505 = vpop.f32.mrf.mxu0
    %v3506 = vadd.f32 %v3337, %v3505
    %3507 = vmatmul.bf16.gmra.mxu0 %v1523
    %v3508 = vpop.f32.mrf.mxu0
    %v3509 = vadd.f32 %v3340, %v3508
    %v3510 = vpop.f32.mrf.mxu0
    %v3511 = vadd.f32 %v3342, %v3510
    %3512 = vmatmul.bf16.gmra.mxu0 %v1532
    %v3513 = vpop.f32.mrf.mxu0
    %v3514 = vadd.f32 %v3345, %v3513
    %v3515 = vpop.f32.mrf.mxu0
    %v3516 = vadd.f32 %v3347, %v3515
    %3517 = vmatmul.bf16.gmra.mxu0 %v1541
    %v3518 = vpop.f32.mrf.mxu0
    %v3519 = vadd.f32 %v3350, %v3518
    %v3520 = vpop.f32.mrf.mxu0
    %v3521 = vadd.f32 %v3352, %v3520
    %3522 = vmatmul.bf16.gmra.mxu0 %v1550
    %v3523 = vpop.f32.mrf.mxu0
    %v3524 = vadd.f32 %v3355, %v3523
    %v3525 = vpop.f32.mrf.mxu0
    %v3526 = vadd.f32 %v3357, %v3525
    %3527 = vmatmul.bf16.gmra.mxu0 %v1559
    %v3528 = vpop.f32.mrf.mxu0
    %v3529 = vadd.f32 %v3360, %v3528
    %v3530 = vpop.f32.mrf.mxu0
    %v3531 = vadd.f32 %v3362, %v3530
    %3532 = vmatmul.bf16.gmra.mxu0 %v1568
    %v3533 = vpop.f32.mrf.mxu0
    %v3534 = vadd.f32 %v3365, %v3533
    %v3535 = vpop.f32.mrf.mxu0
    %v3536 = vadd.f32 %v3367, %v3535
    %3537 = vmatmul.bf16.gmra.mxu0 %v1577
    %v3538 = vpop.f32.mrf.mxu0
    %v3539 = vadd.f32 %v3370, %v3538
    %v3540 = vpop.f32.mrf.mxu0
    %v3541 = vadd.f32 %v3372, %v3540
    %3542 = vmatmul.bf16.gmra.mxu0 %v1586
    %v3543 = vpop.f32.mrf.mxu0
    %v3544 = vadd.f32 %v3375, %v3543
    %v3545 = vpop.f32.mrf.mxu0
    %v3546 = vadd.f32 %v3377, %v3545
    %3547 = vmatmul.bf16.gmra.mxu0 %v1595
    %v3548 = vpop.f32.mrf.mxu0
    %v3549 = vadd.f32 %v3380, %v3548
    %v3550 = vpop.f32.mrf.mxu0
    %v3551 = vadd.f32 %v3382, %v3550
    %3552 = vmatmul.bf16.gmra.mxu0 %v1604
    %v3553 = vpop.f32.mrf.mxu0
    %v3554 = vadd.f32 %v3385, %v3553
    %v3555 = vpop.f32.mrf.mxu0
    %v3556 = vadd.f32 %v3387, %v3555
    %3557 = vmatmul.bf16.gmra.mxu0 %v1613
    %v3558 = vpop.f32.mrf.mxu0
    %v3559 = vadd.f32 %v3390, %v3558
    %v3560 = vpop.f32.mrf.mxu0
    %v3561 = vadd.f32 %v3392, %v3560
    %3562 = vmatmul.bf16.gmra.mxu0 %v1622
    %v3563 = vpop.f32.mrf.mxu0
    %v3564 = vadd.f32 %v3395, %v3563
    %v3565 = vpop.f32.mrf.mxu0
    %v3566 = vadd.f32 %v3397, %v3565
    %3567 = vmatmul.bf16.gmra.mxu0 %v1631
    %v3568 = vpop.f32.mrf.mxu0
    %v3569 = vadd.f32 %v3400, %v3568
    %v3570 = vpop.f32.mrf.mxu0
    %v3571 = vadd.f32 %v3402, %v3570
    %3572 = vmatmul.bf16.gmra.mxu0 %v1640
    %v3573 = vpop.f32.mrf.mxu0
    %v3574 = vadd.f32 %v3405, %v3573
    %v3575 = vpop.f32.mrf.mxu0
    %v3576 = vadd.f32 %v3407, %v3575
    %3577 = vmatmul.bf16.gmra.mxu0 %v1649
    %v3578 = vpop.f32.mrf.mxu0
    %v3579 = vadd.f32 %v3410, %v3578
    %v3580 = vpop.f32.mrf.mxu0
    %v3581 = vadd.f32 %v3412, %v3580
    %3582 = vmatmul.bf16.gmra.mxu0 %v1658
    %v3583 = vpop.f32.mrf.mxu0
    %v3584 = vadd.f32 %v3415, %v3583
    %v3585 = vpop.f32.mrf.mxu0
    %v3586 = vadd.f32 %v3417, %v3585
    %3587 = vmatmul.bf16.gmra.mxu0 %v1667
    %v3588 = vpop.f32.mrf.mxu0
    %v3589 = vadd.f32 %v3420, %v3588
    %v3590 = vpop.f32.mrf.mxu0
    %v3591 = vadd.f32 %v3422, %v3590
    %3592 = vmatmul.bf16.gmra.mxu0 %v1676
    %v3593 = vpop.f32.mrf.mxu0
    %v3594 = vadd.f32 %v3425, %v3593
    %v3595 = vpop.f32.mrf.mxu0
    %v3596 = vadd.f32 %v3427, %v3595
    %3597 = vmatmul.bf16.gmra.mxu0 %v1685
    %v3598 = vpop.f32.mrf.mxu0
    %v3599 = vadd.f32 %v3430, %v3598
    %v3600 = vpop.f32.mrf.mxu0
    %v3601 = vadd.f32 %v3432, %v3600
    %3602 = vmatmul.bf16.gmra.mxu0 %v1694
    %v3603 = vpop.f32.mrf.mxu0
    %v3604 = vadd.f32 %v3435, %v3603
    %v3605 = vpop.f32.mrf.mxu0
    %v3606 = vadd.f32 %v3437, %v3605
    %3607 = vmatmul.bf16.gmra.mxu0 %v1703
    %v3608 = vpop.f32.mrf.mxu0
    %v3609 = vadd.f32 %v3440, %v3608
    %v3610 = vpop.f32.mrf.mxu0
    %v3611 = vadd.f32 %v3442, %v3610
    %3612 = vmatmul.bf16.gmra.mxu0 %v1712
    %v3613 = vpop.f32.mrf.mxu0
    %v3614 = vadd.f32 %v3445, %v3613
    %v3615 = vpop.f32.mrf.mxu0
    %v3616 = vadd.f32 %v3447, %v3615
    %3617 = vdwg.mxu0
    %3618 = vmatpush.bf16.msra.mxu0 %v2354
    %3619 = vmatpush.bf16.msra.mxu0 %v2353
    %3620 = vmatpush.bf16.msra.mxu0 %v2352
    %3621 = vmatpush.bf16.msra.mxu0 %v2351
    %3622 = vmatpush.bf16.msra.mxu0 %v2350
    %3623 = vmatpush.bf16.msra.mxu0 %v2349
    %3624 = vmatpush.bf16.msra.mxu0 %v2348
    %3625 = vmatpush.bf16.msra.mxu0 %v2347
    %3626 = vmatmul.bf16.gmra.mxu0 %v1434
    %v3627 = vpop.f32.mrf.mxu0
    %v3628 = vadd.f32 %v3459, %v3627
    %v3629 = vpop.f32.mrf.mxu0
    %v3630 = vadd.f32 %v3461, %v3629
    %3631 = vmatmul.bf16.gmra.mxu0 %v1443
    %v3632 = vpop.f32.mrf.mxu0
    %v3633 = vadd.f32 %v3464, %v3632
    %v3634 = vpop.f32.mrf.mxu0
    %v3635 = vadd.f32 %v3466, %v3634
    %3636 = vmatmul.bf16.gmra.mxu0 %v1452
    %v3637 = vpop.f32.mrf.mxu0
    %v3638 = vadd.f32 %v3469, %v3637
    %v3639 = vpop.f32.mrf.mxu0
    %v3640 = vadd.f32 %v3471, %v3639
    %3641 = vmatmul.bf16.gmra.mxu0 %v1461
    %v3642 = vpop.f32.mrf.mxu0
    %v3643 = vadd.f32 %v3474, %v3642
    %v3644 = vpop.f32.mrf.mxu0
    %v3645 = vadd.f32 %v3476, %v3644
    %3646 = vmatmul.bf16.gmra.mxu0 %v1470
    %v3647 = vpop.f32.mrf.mxu0
    %v3648 = vadd.f32 %v3479, %v3647
    %v3649 = vpop.f32.mrf.mxu0
    %v3650 = vadd.f32 %v3481, %v3649
    %3651 = vmatmul.bf16.gmra.mxu0 %v1479
    %v3652 = vpop.f32.mrf.mxu0
    %v3653 = vadd.f32 %v3484, %v3652
    %v3654 = vpop.f32.mrf.mxu0
    %v3655 = vadd.f32 %v3486, %v3654
    %3656 = vmatmul.bf16.gmra.mxu0 %v1488
    %v3657 = vpop.f32.mrf.mxu0
    %v3658 = vadd.f32 %v3489, %v3657
    %v3659 = vpop.f32.mrf.mxu0
    %v3660 = vadd.f32 %v3491, %v3659
    %3661 = vmatmul.bf16.gmra.mxu0 %v1497
    %v3662 = vpop.f32.mrf.mxu0
    %v3663 = vadd.f32 %v3494, %v3662
    %v3664 = vpop.f32.mrf.mxu0
    %v3665 = vadd.f32 %v3496, %v3664
    %3666 = vmatmul.bf16.gmra.mxu0 %v1506
    %v3667 = vpop.f32.mrf.mxu0
    %v3668 = vadd.f32 %v3499, %v3667
    %v3669 = vpop.f32.mrf.mxu0
    %v3670 = vadd.f32 %v3501, %v3669
    %3671 = vmatmul.bf16.gmra.mxu0 %v1515
    %v3672 = vpop.f32.mrf.mxu0
    %v3673 = vadd.f32 %v3504, %v3672
    %v3674 = vpop.f32.mrf.mxu0
    %v3675 = vadd.f32 %v3506, %v3674
    %3676 = vmatmul.bf16.gmra.mxu0 %v1524
    %v3677 = vpop.f32.mrf.mxu0
    %v3678 = vadd.f32 %v3509, %v3677
    %v3679 = vpop.f32.mrf.mxu0
    %v3680 = vadd.f32 %v3511, %v3679
    %3681 = vmatmul.bf16.gmra.mxu0 %v1533
    %v3682 = vpop.f32.mrf.mxu0
    %v3683 = vadd.f32 %v3514, %v3682
    %v3684 = vpop.f32.mrf.mxu0
    %v3685 = vadd.f32 %v3516, %v3684
    %3686 = vmatmul.bf16.gmra.mxu0 %v1542
    %v3687 = vpop.f32.mrf.mxu0
    %v3688 = vadd.f32 %v3519, %v3687
    %v3689 = vpop.f32.mrf.mxu0
    %v3690 = vadd.f32 %v3521, %v3689
    %3691 = vmatmul.bf16.gmra.mxu0 %v1551
    %v3692 = vpop.f32.mrf.mxu0
    %v3693 = vadd.f32 %v3524, %v3692
    %v3694 = vpop.f32.mrf.mxu0
    %v3695 = vadd.f32 %v3526, %v3694
    %3696 = vmatmul.bf16.gmra.mxu0 %v1560
    %v3697 = vpop.f32.mrf.mxu0
    %v3698 = vadd.f32 %v3529, %v3697
    %v3699 = vpop.f32.mrf.mxu0
    %v3700 = vadd.f32 %v3531, %v3699
    %3701 = vmatmul.bf16.gmra.mxu0 %v1569
    %v3702 = vpop.f32.mrf.mxu0
    %v3703 = vadd.f32 %v3534, %v3702
    %v3704 = vpop.f32.mrf.mxu0
    %v3705 = vadd.f32 %v3536, %v3704
    %3706 = vmatmul.bf16.gmra.mxu0 %v1578
    %v3707 = vpop.f32.mrf.mxu0
    %v3708 = vadd.f32 %v3539, %v3707
    %v3709 = vpop.f32.mrf.mxu0
    %v3710 = vadd.f32 %v3541, %v3709
    %3711 = vmatmul.bf16.gmra.mxu0 %v1587
    %v3712 = vpop.f32.mrf.mxu0
    %v3713 = vadd.f32 %v3544, %v3712
    %v3714 = vpop.f32.mrf.mxu0
    %v3715 = vadd.f32 %v3546, %v3714
    %3716 = vmatmul.bf16.gmra.mxu0 %v1596
    %v3717 = vpop.f32.mrf.mxu0
    %v3718 = vadd.f32 %v3549, %v3717
    %v3719 = vpop.f32.mrf.mxu0
    %v3720 = vadd.f32 %v3551, %v3719
    %3721 = vmatmul.bf16.gmra.mxu0 %v1605
    %v3722 = vpop.f32.mrf.mxu0
    %v3723 = vadd.f32 %v3554, %v3722
    %v3724 = vpop.f32.mrf.mxu0
    %v3725 = vadd.f32 %v3556, %v3724
    %3726 = vmatmul.bf16.gmra.mxu0 %v1614
    %v3727 = vpop.f32.mrf.mxu0
    %v3728 = vadd.f32 %v3559, %v3727
    %v3729 = vpop.f32.mrf.mxu0
    %v3730 = vadd.f32 %v3561, %v3729
    %3731 = vmatmul.bf16.gmra.mxu0 %v1623
    %v3732 = vpop.f32.mrf.mxu0
    %v3733 = vadd.f32 %v3564, %v3732
    %v3734 = vpop.f32.mrf.mxu0
    %v3735 = vadd.f32 %v3566, %v3734
    %3736 = vmatmul.bf16.gmra.mxu0 %v1632
    %v3737 = vpop.f32.mrf.mxu0
    %v3738 = vadd.f32 %v3569, %v3737
    %v3739 = vpop.f32.mrf.mxu0
    %v3740 = vadd.f32 %v3571, %v3739
    %3741 = vmatmul.bf16.gmra.mxu0 %v1641
    %v3742 = vpop.f32.mrf.mxu0
    %v3743 = vadd.f32 %v3574, %v3742
    %v3744 = vpop.f32.mrf.mxu0
    %v3745 = vadd.f32 %v3576, %v3744
    %3746 = vmatmul.bf16.gmra.mxu0 %v1650
    %v3747 = vpop.f32.mrf.mxu0
    %v3748 = vadd.f32 %v3579, %v3747
    %v3749 = vpop.f32.mrf.mxu0
    %v3750 = vadd.f32 %v3581, %v3749
    %3751 = vmatmul.bf16.gmra.mxu0 %v1659
    %v3752 = vpop.f32.mrf.mxu0
    %v3753 = vadd.f32 %v3584, %v3752
    %v3754 = vpop.f32.mrf.mxu0
    %v3755 = vadd.f32 %v3586, %v3754
    %3756 = vmatmul.bf16.gmra.mxu0 %v1668
    %v3757 = vpop.f32.mrf.mxu0
    %v3758 = vadd.f32 %v3589, %v3757
    %v3759 = vpop.f32.mrf.mxu0
    %v3760 = vadd.f32 %v3591, %v3759
    %3761 = vmatmul.bf16.gmra.mxu0 %v1677
    %v3762 = vpop.f32.mrf.mxu0
    %v3763 = vadd.f32 %v3594, %v3762
    %v3764 = vpop.f32.mrf.mxu0
    %v3765 = vadd.f32 %v3596, %v3764
    %3766 = vmatmul.bf16.gmra.mxu0 %v1686
    %v3767 = vpop.f32.mrf.mxu0
    %v3768 = vadd.f32 %v3599, %v3767
    %v3769 = vpop.f32.mrf.mxu0
    %v3770 = vadd.f32 %v3601, %v3769
    %3771 = vmatmul.bf16.gmra.mxu0 %v1695
    %v3772 = vpop.f32.mrf.mxu0
    %v3773 = vadd.f32 %v3604, %v3772
    %v3774 = vpop.f32.mrf.mxu0
    %v3775 = vadd.f32 %v3606, %v3774
    %3776 = vmatmul.bf16.gmra.mxu0 %v1704
    %v3777 = vpop.f32.mrf.mxu0
    %v3778 = vadd.f32 %v3609, %v3777
    %v3779 = vpop.f32.mrf.mxu0
    %v3780 = vadd.f32 %v3611, %v3779
    %3781 = vmatmul.bf16.gmra.mxu0 %v1713
    %v3782 = vpop.f32.mrf.mxu0
    %v3783 = vadd.f32 %v3614, %v3782
    %v3784 = vpop.f32.mrf.mxu0
    %v3785 = vadd.f32 %v3616, %v3784
    %3786 = vdwg.mxu0
    %3787 = vmatpush.bf16.msra.mxu0 %v2362
    %3788 = vmatpush.bf16.msra.mxu0 %v2361
    %3789 = vmatpush.bf16.msra.mxu0 %v2360
    %3790 = vmatpush.bf16.msra.mxu0 %v2359
    %3791 = vmatpush.bf16.msra.mxu0 %v2358
    %3792 = vmatpush.bf16.msra.mxu0 %v2357
    %3793 = vmatpush.bf16.msra.mxu0 %v2356
    %3794 = vmatpush.bf16.msra.mxu0 %v2355
    %3795 = vmatmul.bf16.gmra.mxu0 %v1435
    %v3796 = vpop.f32.mrf.mxu0
    %v3797 = vadd.f32 %v3628, %v3796
    %v3798 = vpop.f32.mrf.mxu0
    %v3799 = vadd.f32 %v3630, %v3798
    %3800 = vmatmul.bf16.gmra.mxu0 %v1444
    %v3801 = vpop.f32.mrf.mxu0
    %v3802 = vadd.f32 %v3633, %v3801
    %v3803 = vpop.f32.mrf.mxu0
    %v3804 = vadd.f32 %v3635, %v3803
    %3805 = vmatmul.bf16.gmra.mxu0 %v1453
    %v3806 = vpop.f32.mrf.mxu0
    %v3807 = vadd.f32 %v3638, %v3806
    %v3808 = vpop.f32.mrf.mxu0
    %v3809 = vadd.f32 %v3640, %v3808
    %3810 = vmatmul.bf16.gmra.mxu0 %v1462
    %v3811 = vpop.f32.mrf.mxu0
    %v3812 = vadd.f32 %v3643, %v3811
    %v3813 = vpop.f32.mrf.mxu0
    %v3814 = vadd.f32 %v3645, %v3813
    %3815 = vmatmul.bf16.gmra.mxu0 %v1471
    %v3816 = vpop.f32.mrf.mxu0
    %v3817 = vadd.f32 %v3648, %v3816
    %v3818 = vpop.f32.mrf.mxu0
    %v3819 = vadd.f32 %v3650, %v3818
    %3820 = vmatmul.bf16.gmra.mxu0 %v1480
    %v3821 = vpop.f32.mrf.mxu0
    %v3822 = vadd.f32 %v3653, %v3821
    %v3823 = vpop.f32.mrf.mxu0
    %v3824 = vadd.f32 %v3655, %v3823
    %3825 = vmatmul.bf16.gmra.mxu0 %v1489
    %v3826 = vpop.f32.mrf.mxu0
    %v3827 = vadd.f32 %v3658, %v3826
    %v3828 = vpop.f32.mrf.mxu0
    %v3829 = vadd.f32 %v3660, %v3828
    %3830 = vmatmul.bf16.gmra.mxu0 %v1498
    %v3831 = vpop.f32.mrf.mxu0
    %v3832 = vadd.f32 %v3663, %v3831
    %v3833 = vpop.f32.mrf.mxu0
    %v3834 = vadd.f32 %v3665, %v3833
    %3835 = vmatmul.bf16.gmra.mxu0 %v1507
    %v3836 = vpop.f32.mrf.mxu0
    %v3837 = vadd.f32 %v3668, %v3836
    %v3838 = vpop.f32.mrf.mxu0
    %v3839 = vadd.f32 %v3670, %v3838
    %3840 = vmatmul.bf16.gmra.mxu0 %v1516
    %v3841 = vpop.f32.mrf.mxu0
    %v3842 = vadd.f32 %v3673, %v3841
    %v3843 = vpop.f32.mrf.mxu0
    %v3844 = vadd.f32 %v3675, %v3843
    %3845 = vmatmul.bf16.gmra.mxu0 %v1525
    %v3846 = vpop.f32.mrf.mxu0
    %v3847 = vadd.f32 %v3678, %v3846
    %v3848 = vpop.f32.mrf.mxu0
    %v3849 = vadd.f32 %v3680, %v3848
    %3850 = vmatmul.bf16.gmra.mxu0 %v1534
    %v3851 = vpop.f32.mrf.mxu0
    %v3852 = vadd.f32 %v3683, %v3851
    %v3853 = vpop.f32.mrf.mxu0
    %v3854 = vadd.f32 %v3685, %v3853
    %3855 = vmatmul.bf16.gmra.mxu0 %v1543
    %v3856 = vpop.f32.mrf.mxu0
    %v3857 = vadd.f32 %v3688, %v3856
    %v3858 = vpop.f32.mrf.mxu0
    %v3859 = vadd.f32 %v3690, %v3858
    %3860 = vmatmul.bf16.gmra.mxu0 %v1552
    %v3861 = vpop.f32.mrf.mxu0
    %v3862 = vadd.f32 %v3693, %v3861
    %v3863 = vpop.f32.mrf.mxu0
    %v3864 = vadd.f32 %v3695, %v3863
    %3865 = vmatmul.bf16.gmra.mxu0 %v1561
    %v3866 = vpop.f32.mrf.mxu0
    %v3867 = vadd.f32 %v3698, %v3866
    %v3868 = vpop.f32.mrf.mxu0
    %v3869 = vadd.f32 %v3700, %v3868
    %3870 = vmatmul.bf16.gmra.mxu0 %v1570
    %v3871 = vpop.f32.mrf.mxu0
    %v3872 = vadd.f32 %v3703, %v3871
    %v3873 = vpop.f32.mrf.mxu0
    %v3874 = vadd.f32 %v3705, %v3873
    %3875 = vmatmul.bf16.gmra.mxu0 %v1579
    %v3876 = vpop.f32.mrf.mxu0
    %v3877 = vadd.f32 %v3708, %v3876
    %v3878 = vpop.f32.mrf.mxu0
    %v3879 = vadd.f32 %v3710, %v3878
    %3880 = vmatmul.bf16.gmra.mxu0 %v1588
    %v3881 = vpop.f32.mrf.mxu0
    %v3882 = vadd.f32 %v3713, %v3881
    %v3883 = vpop.f32.mrf.mxu0
    %v3884 = vadd.f32 %v3715, %v3883
    %3885 = vmatmul.bf16.gmra.mxu0 %v1597
    %v3886 = vpop.f32.mrf.mxu0
    %v3887 = vadd.f32 %v3718, %v3886
    %v3888 = vpop.f32.mrf.mxu0
    %v3889 = vadd.f32 %v3720, %v3888
    %3890 = vmatmul.bf16.gmra.mxu0 %v1606
    %v3891 = vpop.f32.mrf.mxu0
    %v3892 = vadd.f32 %v3723, %v3891
    %v3893 = vpop.f32.mrf.mxu0
    %v3894 = vadd.f32 %v3725, %v3893
    %3895 = vmatmul.bf16.gmra.mxu0 %v1615
    %v3896 = vpop.f32.mrf.mxu0
    %v3897 = vadd.f32 %v3728, %v3896
    %v3898 = vpop.f32.mrf.mxu0
    %v3899 = vadd.f32 %v3730, %v3898
    %3900 = vmatmul.bf16.gmra.mxu0 %v1624
    %v3901 = vpop.f32.mrf.mxu0
    %v3902 = vadd.f32 %v3733, %v3901
    %v3903 = vpop.f32.mrf.mxu0
    %v3904 = vadd.f32 %v3735, %v3903
    %3905 = vmatmul.bf16.gmra.mxu0 %v1633
    %v3906 = vpop.f32.mrf.mxu0
    %v3907 = vadd.f32 %v3738, %v3906
    %v3908 = vpop.f32.mrf.mxu0
    %v3909 = vadd.f32 %v3740, %v3908
    %3910 = vmatmul.bf16.gmra.mxu0 %v1642
    %v3911 = vpop.f32.mrf.mxu0
    %v3912 = vadd.f32 %v3743, %v3911
    %v3913 = vpop.f32.mrf.mxu0
    %v3914 = vadd.f32 %v3745, %v3913
    %3915 = vmatmul.bf16.gmra.mxu0 %v1651
    %v3916 = vpop.f32.mrf.mxu0
    %v3917 = vadd.f32 %v3748, %v3916
    %v3918 = vpop.f32.mrf.mxu0
    %v3919 = vadd.f32 %v3750, %v3918
    %3920 = vmatmul.bf16.gmra.mxu0 %v1660
    %v3921 = vpop.f32.mrf.mxu0
    %v3922 = vadd.f32 %v3753, %v3921
    %v3923 = vpop.f32.mrf.mxu0
    %v3924 = vadd.f32 %v3755, %v3923
    %3925 = vmatmul.bf16.gmra.mxu0 %v1669
    %v3926 = vpop.f32.mrf.mxu0
    %v3927 = vadd.f32 %v3758, %v3926
    %v3928 = vpop.f32.mrf.mxu0
    %v3929 = vadd.f32 %v3760, %v3928
    %3930 = vmatmul.bf16.gmra.mxu0 %v1678
    %v3931 = vpop.f32.mrf.mxu0
    %v3932 = vadd.f32 %v3763, %v3931
    %v3933 = vpop.f32.mrf.mxu0
    %v3934 = vadd.f32 %v3765, %v3933
    %3935 = vmatmul.bf16.gmra.mxu0 %v1687
    %v3936 = vpop.f32.mrf.mxu0
    %v3937 = vadd.f32 %v3768, %v3936
    %v3938 = vpop.f32.mrf.mxu0
    %v3939 = vadd.f32 %v3770, %v3938
    %3940 = vmatmul.bf16.gmra.mxu0 %v1696
    %v3941 = vpop.f32.mrf.mxu0
    %v3942 = vadd.f32 %v3773, %v3941
    %v3943 = vpop.f32.mrf.mxu0
    %v3944 = vadd.f32 %v3775, %v3943
    %3945 = vmatmul.bf16.gmra.mxu0 %v1705
    %v3946 = vpop.f32.mrf.mxu0
    %v3947 = vadd.f32 %v3778, %v3946
    %v3948 = vpop.f32.mrf.mxu0
    %v3949 = vadd.f32 %v3780, %v3948
    %3950 = vmatmul.bf16.gmra.mxu0 %v1714
    %v3951 = vpop.f32.mrf.mxu0
    %v3952 = vadd.f32 %v3783, %v3951
    %v3953 = vpop.f32.mrf.mxu0
    %v3954 = vadd.f32 %v3785, %v3953
    %3955 = vdwg.mxu0
    %3956 = vst [vmem:[#allocation8] sm:$0xff] %v3797
    %3957 = vst [vmem:[#allocation8 + $0x8] sm:$0xff] %v3799
    %3958 = vst [vmem:[#allocation8 + $0x10] sm:$0xff] %v3802
    %3959 = vst [vmem:[#allocation8 + $0x18] sm:$0xff] %v3804
    %3960 = vst [vmem:[#allocation8 + $0x20] sm:$0xff] %v3807
    %3961 = vst [vmem:[#allocation8 + $0x28] sm:$0xff] %v3809
    %3962 = vst [vmem:[#allocation8 + $0x30] sm:$0xff] %v3812
    %3963 = vst [vmem:[#allocation8 + $0x38] sm:$0xff] %v3814
    %3964 = vst [vmem:[#allocation8 + $0x40] sm:$0xff] %v3817
    %3965 = vst [vmem:[#allocation8 + $0x48] sm:$0xff] %v3819
    %3966 = vst [vmem:[#allocation8 + $0x50] sm:$0xff] %v3822
    %3967 = vst [vmem:[#allocation8 + $0x58] sm:$0xff] %v3824
    %3968 = vst [vmem:[#allocation8 + $0x60] sm:$0xff] %v3827
    %3969 = vst [vmem:[#allocation8 + $0x68] sm:$0xff] %v3829
    %3970 = vst [vmem:[#allocation8 + $0x70] sm:$0xff] %v3832
    %3971 = vst [vmem:[#allocation8 + $0x78] sm:$0xff] %v3834
    %3972 = vst [vmem:[#allocation8 + $0x80] sm:$0xff] %v3837
    %3973 = vst [vmem:[#allocation8 + $0x88] sm:$0xff] %v3839
    %3974 = vst [vmem:[#allocation8 + $0x90] sm:$0xff] %v3842
    %3975 = vst [vmem:[#allocation8 + $0x98] sm:$0xff] %v3844
    %3976 = vst [vmem:[#allocation8 + $0xa0] sm:$0xff] %v3847
    %3977 = vst [vmem:[#allocation8 + $0xa8] sm:$0xff] %v3849
    %3978 = vst [vmem:[#allocation8 + $0xb0] sm:$0xff] %v3852
    %3979 = vst [vmem:[#allocation8 + $0xb8] sm:$0xff] %v3854
    %3980 = vst [vmem:[#allocation8 + $0xc0] sm:$0xff] %v3857
    %3981 = vst [vmem:[#allocation8 + $0xc8] sm:$0xff] %v3859
    %3982 = vst [vmem:[#allocation8 + $0xd0] sm:$0xff] %v3862
    %3983 = vst [vmem:[#allocation8 + $0xd8] sm:$0xff] %v3864
    %3984 = vst [vmem:[#allocation8 + $0xe0] sm:$0xff] %v3867
    %3985 = vst [vmem:[#allocation8 + $0xe8] sm:$0xff] %v3869
    %3986 = vst [vmem:[#allocation8 + $0xf0] sm:$0xff] %v3872
    %3987 = vst [vmem:[#allocation8 + $0xf8] sm:$0xff] %v3874
    %3988 = vst [vmem:[#allocation8 + $0x100] sm:$0xff] %v3877
    %3989 = vst [vmem:[#allocation8 + $0x108] sm:$0xff] %v3879
    %3990 = vst [vmem:[#allocation8 + $0x110] sm:$0xff] %v3882
    %3991 = vst [vmem:[#allocation8 + $0x118] sm:$0xff] %v3884
    %3992 = vst [vmem:[#allocation8 + $0x120] sm:$0xff] %v3887
    %3993 = vst [vmem:[#allocation8 + $0x128] sm:$0xff] %v3889
    %3994 = vst [vmem:[#allocation8 + $0x130] sm:$0xff] %v3892
    %3995 = vst [vmem:[#allocation8 + $0x138] sm:$0xff] %v3894
    %3996 = vst [vmem:[#allocation8 + $0x140] sm:$0xff] %v3897
    %3997 = vst [vmem:[#allocation8 + $0x148] sm:$0xff] %v3899
    %3998 = vst [vmem:[#allocation8 + $0x150] sm:$0xff] %v3902
    %3999 = vst [vmem:[#allocation8 + $0x158] sm:$0xff] %v3904
    %4000 = vst [vmem:[#allocation8 + $0x160] sm:$0xff] %v3907
    %4001 = vst [vmem:[#allocation8 + $0x168] sm:$0xff] %v3909
    %4002 = vst [vmem:[#allocation8 + $0x170] sm:$0xff] %v3912
    %4003 = vst [vmem:[#allocation8 + $0x178] sm:$0xff] %v3914
    %4004 = vst [vmem:[#allocation8 + $0x180] sm:$0xff] %v3917
    %4005 = vst [vmem:[#allocation8 + $0x188] sm:$0xff] %v3919
    %4006 = vst [vmem:[#allocation8 + $0x190] sm:$0xff] %v3922
    %4007 = vst [vmem:[#allocation8 + $0x198] sm:$0xff] %v3924
    %4008 = vst [vmem:[#allocation8 + $0x1a0] sm:$0xff] %v3927
    %4009 = vst [vmem:[#allocation8 + $0x1a8] sm:$0xff] %v3929
    %4010 = vst [vmem:[#allocation8 + $0x1b0] sm:$0xff] %v3932
    %4011 = vst [vmem:[#allocation8 + $0x1b8] sm:$0xff] %v3934
    %4012 = vst [vmem:[#allocation8 + $0x1c0] sm:$0xff] %v3937
    %4013 = vst [vmem:[#allocation8 + $0x1c8] sm:$0xff] %v3939
    %4014 = vst [vmem:[#allocation8 + $0x1d0] sm:$0xff] %v3942
    %4015 = vst [vmem:[#allocation8 + $0x1d8] sm:$0xff] %v3944
    %4016 = vst [vmem:[#allocation8 + $0x1e0] sm:$0xff] %v3947
    %4017 = vst [vmem:[#allocation8 + $0x1e8] sm:$0xff] %v3949
    %4018 = vst [vmem:[#allocation8 + $0x1f0] sm:$0xff] %v3952
    %4019 = vst [vmem:[#allocation8 + $0x1f8] sm:$0xff] %v3954
    %s4020 = smul.u32 0, 512
    %v4021 = vlaneseq
    %v4022 = vshrl.u32 %v4021, 7
    %v4023 = vadd.s32 %v4022, 8
    %v4024 = vadd.s32 %v4022, 16
    %v4025 = vadd.s32 %v4022, 24
    %v4026 = vadd.s32 %v4022, 32
    %v4027 = vadd.s32 %v4022, 40
    %v4028 = vadd.s32 %v4022, 48
    %v4029 = vadd.s32 %v4022, 56
    %v4030 = vadd.s32 %v4022, 64
    %v4031 = vadd.s32 %v4022, 72
    %v4032 = vadd.s32 %v4022, 80
    %v4033 = vadd.s32 %v4022, 88
    %v4034 = vadd.s32 %v4022, 96
    %v4035 = vadd.s32 %v4022, 104
    %v4036 = vadd.s32 %v4022, 112
    %v4037 = vadd.s32 %v4022, 120
    %v4038 = vadd.s32 %v4022, 128
    %v4039 = vadd.s32 %v4022, 136
    %v4040 = vadd.s32 %v4022, 144
    %v4041 = vadd.s32 %v4022, 152
    %v4042 = vadd.s32 %v4022, 160
    %v4043 = vadd.s32 %v4022, 168
    %v4044 = vadd.s32 %v4022, 176
    %v4045 = vadd.s32 %v4022, 184
    %v4046 = vadd.s32 %v4022, 192
    %v4047 = vadd.s32 %v4022, 200
    %v4048 = vadd.s32 %v4022, 208
    %v4049 = vadd.s32 %v4022, 216
    %v4050 = vadd.s32 %v4022, 224
    %v4051 = vadd.s32 %v4022, 232
    %v4052 = vadd.s32 %v4022, 240
    %v4053 = vadd.s32 %v4022, 248
    %v4054 = vadd.s32 %v4022, 256
    %v4055 = vadd.s32 %v4022, 264
    %v4056 = vadd.s32 %v4022, 272
    %v4057 = vadd.s32 %v4022, 280
    %v4058 = vadd.s32 %v4022, 288
    %v4059 = vadd.s32 %v4022, 296
    %v4060 = vadd.s32 %v4022, 304
    %v4061 = vadd.s32 %v4022, 312
    %v4062 = vadd.s32 %v4022, 320
    %v4063 = vadd.s32 %v4022, 328
    %v4064 = vadd.s32 %v4022, 336
    %v4065 = vadd.s32 %v4022, 344
    %v4066 = vadd.s32 %v4022, 352
    %v4067 = vadd.s32 %v4022, 360
    %v4068 = vadd.s32 %v4022, 368
    %v4069 = vadd.s32 %v4022, 376
    %v4070 = vadd.s32 %v4022, 384
    %v4071 = vadd.s32 %v4022, 392
    %v4072 = vadd.s32 %v4022, 400
    %v4073 = vadd.s32 %v4022, 408
    %v4074 = vadd.s32 %v4022, 416
    %v4075 = vadd.s32 %v4022, 424
    %v4076 = vadd.s32 %v4022, 432
    %v4077 = vadd.s32 %v4022, 440
    %v4078 = vadd.s32 %v4022, 448
    %v4079 = vadd.s32 %v4022, 456
    %v4080 = vadd.s32 %v4022, 464
    %v4081 = vadd.s32 %v4022, 472
    %v4082 = vadd.s32 %v4022, 480
    %v4083 = vadd.s32 %v4022, 488
    %v4084 = vadd.s32 %v4022, 496
    %v4085 = vadd.s32 %v4022, 504
    %v4086 = vstv %s4020
    %v4087 = vadd.s32 %v4086, %v4022
    %v4088 = vadd.s32 %v4086, %v4023
    %v4089 = vadd.s32 %v4086, %v4024
    %v4090 = vadd.s32 %v4086, %v4025
    %v4091 = vadd.s32 %v4086, %v4026
    %v4092 = vadd.s32 %v4086, %v4027
    %v4093 = vadd.s32 %v4086, %v4028
    %v4094 = vadd.s32 %v4086, %v4029
    %v4095 = vadd.s32 %v4086, %v4030
    %v4096 = vadd.s32 %v4086, %v4031
    %v4097 = vadd.s32 %v4086, %v4032
    %v4098 = vadd.s32 %v4086, %v4033
    %v4099 = vadd.s32 %v4086, %v4034
    %v4100 = vadd.s32 %v4086, %v4035
    %v4101 = vadd.s32 %v4086, %v4036
    %v4102 = vadd.s32 %v4086, %v4037
    %v4103 = vadd.s32 %v4086, %v4038
    %v4104 = vadd.s32 %v4086, %v4039
    %v4105 = vadd.s32 %v4086, %v4040
    %v4106 = vadd.s32 %v4086, %v4041
    %v4107 = vadd.s32 %v4086, %v4042
    %v4108 = vadd.s32 %v4086, %v4043
    %v4109 = vadd.s32 %v4086, %v4044
    %v4110 = vadd.s32 %v4086, %v4045
    %v4111 = vadd.s32 %v4086, %v4046
    %v4112 = vadd.s32 %v4086, %v4047
    %v4113 = vadd.s32 %v4086, %v4048
    %v4114 = vadd.s32 %v4086, %v4049
    %v4115 = vadd.s32 %v4086, %v4050
    %v4116 = vadd.s32 %v4086, %v4051
    %v4117 = vadd.s32 %v4086, %v4052
    %v4118 = vadd.s32 %v4086, %v4053
    %v4119 = vadd.s32 %v4086, %v4054
    %v4120 = vadd.s32 %v4086, %v4055
    %v4121 = vadd.s32 %v4086, %v4056
    %v4122 = vadd.s32 %v4086, %v4057
    %v4123 = vadd.s32 %v4086, %v4058
    %v4124 = vadd.s32 %v4086, %v4059
    %v4125 = vadd.s32 %v4086, %v4060
    %v4126 = vadd.s32 %v4086, %v4061
    %v4127 = vadd.s32 %v4086, %v4062
    %v4128 = vadd.s32 %v4086, %v4063
    %v4129 = vadd.s32 %v4086, %v4064
    %v4130 = vadd.s32 %v4086, %v4065
    %v4131 = vadd.s32 %v4086, %v4066
    %v4132 = vadd.s32 %v4086, %v4067
    %v4133 = vadd.s32 %v4086, %v4068
    %v4134 = vadd.s32 %v4086, %v4069
    %v4135 = vadd.s32 %v4086, %v4070
    %v4136 = vadd.s32 %v4086, %v4071
    %v4137 = vadd.s32 %v4086, %v4072
    %v4138 = vadd.s32 %v4086, %v4073
    %v4139 = vadd.s32 %v4086, %v4074
    %v4140 = vadd.s32 %v4086, %v4075
    %v4141 = vadd.s32 %v4086, %v4076
    %v4142 = vadd.s32 %v4086, %v4077
    %v4143 = vadd.s32 %v4086, %v4078
    %v4144 = vadd.s32 %v4086, %v4079
    %v4145 = vadd.s32 %v4086, %v4080
    %v4146 = vadd.s32 %v4086, %v4081
    %v4147 = vadd.s32 %v4086, %v4082
    %v4148 = vadd.s32 %v4086, %v4083
    %v4149 = vadd.s32 %v4086, %v4084
    %v4150 = vadd.s32 %v4086, %v4085
    %vm4151 = vcmp.lt.s32.totalorder %v4087, 512
    %vm4152 = vcmp.lt.s32.totalorder %v4088, 512
    %vm4153 = vcmp.lt.s32.totalorder %v4089, 512
    %vm4154 = vcmp.lt.s32.totalorder %v4090, 512
    %vm4155 = vcmp.lt.s32.totalorder %v4091, 512
    %vm4156 = vcmp.lt.s32.totalorder %v4092, 512
    %vm4157 = vcmp.lt.s32.totalorder %v4093, 512
    %vm4158 = vcmp.lt.s32.totalorder %v4094, 512
    %vm4159 = vcmp.lt.s32.totalorder %v4095, 512
    %vm4160 = vcmp.lt.s32.totalorder %v4096, 512
    %vm4161 = vcmp.lt.s32.totalorder %v4097, 512
    %vm4162 = vcmp.lt.s32.totalorder %v4098, 512
    %vm4163 = vcmp.lt.s32.totalorder %v4099, 512
    %vm4164 = vcmp.lt.s32.totalorder %v4100, 512
    %vm4165 = vcmp.lt.s32.totalorder %v4101, 512
    %vm4166 = vcmp.lt.s32.totalorder %v4102, 512
    %vm4167 = vcmp.lt.s32.totalorder %v4103, 512
    %vm4168 = vcmp.lt.s32.totalorder %v4104, 512
    %vm4169 = vcmp.lt.s32.totalorder %v4105, 512
    %vm4170 = vcmp.lt.s32.totalorder %v4106, 512
    %vm4171 = vcmp.lt.s32.totalorder %v4107, 512
    %vm4172 = vcmp.lt.s32.totalorder %v4108, 512
    %vm4173 = vcmp.lt.s32.totalorder %v4109, 512
    %vm4174 = vcmp.lt.s32.totalorder %v4110, 512
    %vm4175 = vcmp.lt.s32.totalorder %v4111, 512
    %vm4176 = vcmp.lt.s32.totalorder %v4112, 512
    %vm4177 = vcmp.lt.s32.totalorder %v4113, 512
    %vm4178 = vcmp.lt.s32.totalorder %v4114, 512
    %vm4179 = vcmp.lt.s32.totalorder %v4115, 512
    %vm4180 = vcmp.lt.s32.totalorder %v4116, 512
    %vm4181 = vcmp.lt.s32.totalorder %v4117, 512
    %vm4182 = vcmp.lt.s32.totalorder %v4118, 512
    %vm4183 = vcmp.lt.s32.totalorder %v4119, 512
    %vm4184 = vcmp.lt.s32.totalorder %v4120, 512
    %vm4185 = vcmp.lt.s32.totalorder %v4121, 512
    %vm4186 = vcmp.lt.s32.totalorder %v4122, 512
    %vm4187 = vcmp.lt.s32.totalorder %v4123, 512
    %vm4188 = vcmp.lt.s32.totalorder %v4124, 512
    %vm4189 = vcmp.lt.s32.totalorder %v4125, 512
    %vm4190 = vcmp.lt.s32.totalorder %v4126, 512
    %vm4191 = vcmp.lt.s32.totalorder %v4127, 512
    %vm4192 = vcmp.lt.s32.totalorder %v4128, 512
    %vm4193 = vcmp.lt.s32.totalorder %v4129, 512
    %vm4194 = vcmp.lt.s32.totalorder %v4130, 512
    %vm4195 = vcmp.lt.s32.totalorder %v4131, 512
    %vm4196 = vcmp.lt.s32.totalorder %v4132, 512
    %vm4197 = vcmp.lt.s32.totalorder %v4133, 512
    %vm4198 = vcmp.lt.s32.totalorder %v4134, 512
    %vm4199 = vcmp.lt.s32.totalorder %v4135, 512
    %vm4200 = vcmp.lt.s32.totalorder %v4136, 512
    %vm4201 = vcmp.lt.s32.totalorder %v4137, 512
    %vm4202 = vcmp.lt.s32.totalorder %v4138, 512
    %vm4203 = vcmp.lt.s32.totalorder %v4139, 512
    %vm4204 = vcmp.lt.s32.totalorder %v4140, 512
    %vm4205 = vcmp.lt.s32.totalorder %v4141, 512
    %vm4206 = vcmp.lt.s32.totalorder %v4142, 512
    %vm4207 = vcmp.lt.s32.totalorder %v4143, 512
    %vm4208 = vcmp.lt.s32.totalorder %v4144, 512
    %vm4209 = vcmp.lt.s32.totalorder %v4145, 512
    %vm4210 = vcmp.lt.s32.totalorder %v4146, 512
    %vm4211 = vcmp.lt.s32.totalorder %v4147, 512
    %vm4212 = vcmp.lt.s32.totalorder %v4148, 512
    %vm4213 = vcmp.lt.s32.totalorder %v4149, 512
    %vm4214 = vcmp.lt.s32.totalorder %v4150, 512
    %v4215 = vsel %vm4151, 1, 0
    %v4216 = vsel %vm4152, 1, 0
    %v4217 = vsel %vm4153, 1, 0
    %v4218 = vsel %vm4154, 1, 0
    %v4219 = vsel %vm4155, 1, 0
    %v4220 = vsel %vm4156, 1, 0
    %v4221 = vsel %vm4157, 1, 0
    %v4222 = vsel %vm4158, 1, 0
    %v4223 = vsel %vm4159, 1, 0
    %v4224 = vsel %vm4160, 1, 0
    %v4225 = vsel %vm4161, 1, 0
    %v4226 = vsel %vm4162, 1, 0
    %v4227 = vsel %vm4163, 1, 0
    %v4228 = vsel %vm4164, 1, 0
    %v4229 = vsel %vm4165, 1, 0
    %v4230 = vsel %vm4166, 1, 0
    %v4231 = vsel %vm4167, 1, 0
    %v4232 = vsel %vm4168, 1, 0
    %v4233 = vsel %vm4169, 1, 0
    %v4234 = vsel %vm4170, 1, 0
    %v4235 = vsel %vm4171, 1, 0
    %v4236 = vsel %vm4172, 1, 0
    %v4237 = vsel %vm4173, 1, 0
    %v4238 = vsel %vm4174, 1, 0
    %v4239 = vsel %vm4175, 1, 0
    %v4240 = vsel %vm4176, 1, 0
    %v4241 = vsel %vm4177, 1, 0
    %v4242 = vsel %vm4178, 1, 0
    %v4243 = vsel %vm4179, 1, 0
    %v4244 = vsel %vm4180, 1, 0
    %v4245 = vsel %vm4181, 1, 0
    %v4246 = vsel %vm4182, 1, 0
    %v4247 = vsel %vm4183, 1, 0
    %v4248 = vsel %vm4184, 1, 0
    %v4249 = vsel %vm4185, 1, 0
    %v4250 = vsel %vm4186, 1, 0
    %v4251 = vsel %vm4187, 1, 0
    %v4252 = vsel %vm4188, 1, 0
    %v4253 = vsel %vm4189, 1, 0
    %v4254 = vsel %vm4190, 1, 0
    %v4255 = vsel %vm4191, 1, 0
    %v4256 = vsel %vm4192, 1, 0
    %v4257 = vsel %vm4193, 1, 0
    %v4258 = vsel %vm4194, 1, 0
    %v4259 = vsel %vm4195, 1, 0
    %v4260 = vsel %vm4196, 1, 0
    %v4261 = vsel %vm4197, 1, 0
    %v4262 = vsel %vm4198, 1, 0
    %v4263 = vsel %vm4199, 1, 0
    %v4264 = vsel %vm4200, 1, 0
    %v4265 = vsel %vm4201, 1, 0
    %v4266 = vsel %vm4202, 1, 0
    %v4267 = vsel %vm4203, 1, 0
    %v4268 = vsel %vm4204, 1, 0
    %v4269 = vsel %vm4205, 1, 0
    %v4270 = vsel %vm4206, 1, 0
    %v4271 = vsel %vm4207, 1, 0
    %v4272 = vsel %vm4208, 1, 0
    %v4273 = vsel %vm4209, 1, 0
    %v4274 = vsel %vm4210, 1, 0
    %v4275 = vsel %vm4211, 1, 0
    %v4276 = vsel %vm4212, 1, 0
    %v4277 = vsel %vm4213, 1, 0
    %v4278 = vsel %vm4214, 1, 0
    %vm4279 = vcmp.eq.s32.totalorder %v4215, 1
    %vm4280 = vcmp.eq.s32.totalorder %v4216, 1
    %vm4281 = vcmp.eq.s32.totalorder %v4217, 1
    %vm4282 = vcmp.eq.s32.totalorder %v4218, 1
    %vm4283 = vcmp.eq.s32.totalorder %v4219, 1
    %vm4284 = vcmp.eq.s32.totalorder %v4220, 1
    %vm4285 = vcmp.eq.s32.totalorder %v4221, 1
    %vm4286 = vcmp.eq.s32.totalorder %v4222, 1
    %vm4287 = vcmp.eq.s32.totalorder %v4223, 1
    %vm4288 = vcmp.eq.s32.totalorder %v4224, 1
    %vm4289 = vcmp.eq.s32.totalorder %v4225, 1
    %vm4290 = vcmp.eq.s32.totalorder %v4226, 1
    %vm4291 = vcmp.eq.s32.totalorder %v4227, 1
    %vm4292 = vcmp.eq.s32.totalorder %v4228, 1
    %vm4293 = vcmp.eq.s32.totalorder %v4229, 1
    %vm4294 = vcmp.eq.s32.totalorder %v4230, 1
    %vm4295 = vcmp.eq.s32.totalorder %v4231, 1
    %vm4296 = vcmp.eq.s32.totalorder %v4232, 1
    %vm4297 = vcmp.eq.s32.totalorder %v4233, 1
    %vm4298 = vcmp.eq.s32.totalorder %v4234, 1
    %vm4299 = vcmp.eq.s32.totalorder %v4235, 1
    %vm4300 = vcmp.eq.s32.totalorder %v4236, 1
    %vm4301 = vcmp.eq.s32.totalorder %v4237, 1
    %vm4302 = vcmp.eq.s32.totalorder %v4238, 1
    %vm4303 = vcmp.eq.s32.totalorder %v4239, 1
    %vm4304 = vcmp.eq.s32.totalorder %v4240, 1
    %vm4305 = vcmp.eq.s32.totalorder %v4241, 1
    %vm4306 = vcmp.eq.s32.totalorder %v4242, 1
    %vm4307 = vcmp.eq.s32.totalorder %v4243, 1
    %vm4308 = vcmp.eq.s32.totalorder %v4244, 1
    %vm4309 = vcmp.eq.s32.totalorder %v4245, 1
    %vm4310 = vcmp.eq.s32.totalorder %v4246, 1
    %vm4311 = vcmp.eq.s32.totalorder %v4247, 1
    %vm4312 = vcmp.eq.s32.totalorder %v4248, 1
    %vm4313 = vcmp.eq.s32.totalorder %v4249, 1
    %vm4314 = vcmp.eq.s32.totalorder %v4250, 1
    %vm4315 = vcmp.eq.s32.totalorder %v4251, 1
    %vm4316 = vcmp.eq.s32.totalorder %v4252, 1
    %vm4317 = vcmp.eq.s32.totalorder %v4253, 1
    %vm4318 = vcmp.eq.s32.totalorder %v4254, 1
    %vm4319 = vcmp.eq.s32.totalorder %v4255, 1
    %vm4320 = vcmp.eq.s32.totalorder %v4256, 1
    %vm4321 = vcmp.eq.s32.totalorder %v4257, 1
    %vm4322 = vcmp.eq.s32.totalorder %v4258, 1
    %vm4323 = vcmp.eq.s32.totalorder %v4259, 1
    %vm4324 = vcmp.eq.s32.totalorder %v4260, 1
    %vm4325 = vcmp.eq.s32.totalorder %v4261, 1
    %vm4326 = vcmp.eq.s32.totalorder %v4262, 1
    %vm4327 = vcmp.eq.s32.totalorder %v4263, 1
    %vm4328 = vcmp.eq.s32.totalorder %v4264, 1
    %vm4329 = vcmp.eq.s32.totalorder %v4265, 1
    %vm4330 = vcmp.eq.s32.totalorder %v4266, 1
    %vm4331 = vcmp.eq.s32.totalorder %v4267, 1
    %vm4332 = vcmp.eq.s32.totalorder %v4268, 1
    %vm4333 = vcmp.eq.s32.totalorder %v4269, 1
    %vm4334 = vcmp.eq.s32.totalorder %v4270, 1
    %vm4335 = vcmp.eq.s32.totalorder %v4271, 1
    %vm4336 = vcmp.eq.s32.totalorder %v4272, 1
    %vm4337 = vcmp.eq.s32.totalorder %v4273, 1
    %vm4338 = vcmp.eq.s32.totalorder %v4274, 1
    %vm4339 = vcmp.eq.s32.totalorder %v4275, 1
    %vm4340 = vcmp.eq.s32.totalorder %v4276, 1
    %vm4341 = vcmp.eq.s32.totalorder %v4277, 1
    %vm4342 = vcmp.eq.s32.totalorder %v4278, 1
    %v4343 = vsel %vm4279, %v3797, 0.0
    %v4344 = vsel %vm4280, %v3799, 0.0
    %v4345 = vsel %vm4281, %v3802, 0.0
    %v4346 = vsel %vm4282, %v3804, 0.0
    %v4347 = vsel %vm4283, %v3807, 0.0
    %v4348 = vsel %vm4284, %v3809, 0.0
    %v4349 = vsel %vm4285, %v3812, 0.0
    %v4350 = vsel %vm4286, %v3814, 0.0
    %v4351 = vsel %vm4287, %v3817, 0.0
    %v4352 = vsel %vm4288, %v3819, 0.0
    %v4353 = vsel %vm4289, %v3822, 0.0
    %v4354 = vsel %vm4290, %v3824, 0.0
    %v4355 = vsel %vm4291, %v3827, 0.0
    %v4356 = vsel %vm4292, %v3829, 0.0
    %v4357 = vsel %vm4293, %v3832, 0.0
    %v4358 = vsel %vm4294, %v3834, 0.0
    %v4359 = vsel %vm4295, %v3837, 0.0
    %v4360 = vsel %vm4296, %v3839, 0.0
    %v4361 = vsel %vm4297, %v3842, 0.0
    %v4362 = vsel %vm4298, %v3844, 0.0
    %v4363 = vsel %vm4299, %v3847, 0.0
    %v4364 = vsel %vm4300, %v3849, 0.0
    %v4365 = vsel %vm4301, %v3852, 0.0
    %v4366 = vsel %vm4302, %v3854, 0.0
    %v4367 = vsel %vm4303, %v3857, 0.0
    %v4368 = vsel %vm4304, %v3859, 0.0
    %v4369 = vsel %vm4305, %v3862, 0.0
    %v4370 = vsel %vm4306, %v3864, 0.0
    %v4371 = vsel %vm4307, %v3867, 0.0
    %v4372 = vsel %vm4308, %v3869, 0.0
    %v4373 = vsel %vm4309, %v3872, 0.0
    %v4374 = vsel %vm4310, %v3874, 0.0
    %v4375 = vsel %vm4311, %v3877, 0.0
    %v4376 = vsel %vm4312, %v3879, 0.0
    %v4377 = vsel %vm4313, %v3882, 0.0
    %v4378 = vsel %vm4314, %v3884, 0.0
    %v4379 = vsel %vm4315, %v3887, 0.0
    %v4380 = vsel %vm4316, %v3889, 0.0
    %v4381 = vsel %vm4317, %v3892, 0.0
    %v4382 = vsel %vm4318, %v3894, 0.0
    %v4383 = vsel %vm4319, %v3897, 0.0
    %v4384 = vsel %vm4320, %v3899, 0.0
    %v4385 = vsel %vm4321, %v3902, 0.0
    %v4386 = vsel %vm4322, %v3904, 0.0
    %v4387 = vsel %vm4323, %v3907, 0.0
    %v4388 = vsel %vm4324, %v3909, 0.0
    %v4389 = vsel %vm4325, %v3912, 0.0
    %v4390 = vsel %vm4326, %v3914, 0.0
    %v4391 = vsel %vm4327, %v3917, 0.0
    %v4392 = vsel %vm4328, %v3919, 0.0
    %v4393 = vsel %vm4329, %v3922, 0.0
    %v4394 = vsel %vm4330, %v3924, 0.0
    %v4395 = vsel %vm4331, %v3927, 0.0
    %v4396 = vsel %vm4332, %v3929, 0.0
    %v4397 = vsel %vm4333, %v3932, 0.0
    %v4398 = vsel %vm4334, %v3934, 0.0
    %v4399 = vsel %vm4335, %v3937, 0.0
    %v4400 = vsel %vm4336, %v3939, 0.0
    %v4401 = vsel %vm4337, %v3942, 0.0
    %v4402 = vsel %vm4338, %v3944, 0.0
    %v4403 = vsel %vm4339, %v3947, 0.0
    %v4404 = vsel %vm4340, %v3949, 0.0
    %v4405 = vsel %vm4341, %v3952, 0.0
    %v4406 = vsel %vm4342, %v3954, 0.0
    %v4407 = vadd.f32 %v4343, %v4344
    %v4408 = vadd.f32 %v4407, %v4345
    %v4409 = vadd.f32 %v4408, %v4346
    %v4410 = vadd.f32 %v4409, %v4347
    %v4411 = vadd.f32 %v4410, %v4348
    %v4412 = vadd.f32 %v4411, %v4349
    %v4413 = vadd.f32 %v4412, %v4350
    %v4414 = vadd.f32 %v4413, %v4351
    %v4415 = vadd.f32 %v4414, %v4352
    %v4416 = vadd.f32 %v4415, %v4353
    %v4417 = vadd.f32 %v4416, %v4354
    %v4418 = vadd.f32 %v4417, %v4355
    %v4419 = vadd.f32 %v4418, %v4356
    %v4420 = vadd.f32 %v4419, %v4357
    %v4421 = vadd.f32 %v4420, %v4358
    %v4422 = vadd.f32 %v4421, %v4359
    %v4423 = vadd.f32 %v4422, %v4360
    %v4424 = vadd.f32 %v4423, %v4361
    %v4425 = vadd.f32 %v4424, %v4362
    %v4426 = vadd.f32 %v4425, %v4363
    %v4427 = vadd.f32 %v4426, %v4364
    %v4428 = vadd.f32 %v4427, %v4365
    %v4429 = vadd.f32 %v4428, %v4366
    %v4430 = vadd.f32 %v4429, %v4367
    %v4431 = vadd.f32 %v4430, %v4368
    %v4432 = vadd.f32 %v4431, %v4369
    %v4433 = vadd.f32 %v4432, %v4370
    %v4434 = vadd.f32 %v4433, %v4371
    %v4435 = vadd.f32 %v4434, %v4372
    %v4436 = vadd.f32 %v4435, %v4373
    %v4437 = vadd.f32 %v4436, %v4374
    %v4438 = vadd.f32 %v4437, %v4375
    %v4439 = vadd.f32 %v4438, %v4376
    %v4440 = vadd.f32 %v4439, %v4377
    %v4441 = vadd.f32 %v4440, %v4378
    %v4442 = vadd.f32 %v4441, %v4379
    %v4443 = vadd.f32 %v4442, %v4380
    %v4444 = vadd.f32 %v4443, %v4381
    %v4445 = vadd.f32 %v4444, %v4382
    %v4446 = vadd.f32 %v4445, %v4383
    %v4447 = vadd.f32 %v4446, %v4384
    %v4448 = vadd.f32 %v4447, %v4385
    %v4449 = vadd.f32 %v4448, %v4386
    %v4450 = vadd.f32 %v4449, %v4387
    %v4451 = vadd.f32 %v4450, %v4388
    %v4452 = vadd.f32 %v4451, %v4389
    %v4453 = vadd.f32 %v4452, %v4390
    %v4454 = vadd.f32 %v4453, %v4391
    %v4455 = vadd.f32 %v4454, %v4392
    %v4456 = vadd.f32 %v4455, %v4393
    %v4457 = vadd.f32 %v4456, %v4394
    %v4458 = vadd.f32 %v4457, %v4395
    %v4459 = vadd.f32 %v4458, %v4396
    %v4460 = vadd.f32 %v4459, %v4397
    %v4461 = vadd.f32 %v4460, %v4398
    %v4462 = vadd.f32 %v4461, %v4399
    %v4463 = vadd.f32 %v4462, %v4400
    %v4464 = vadd.f32 %v4463, %v4401
    %v4465 = vadd.f32 %v4464, %v4402
    %v4466 = vadd.f32 %v4465, %v4403
    %v4467 = vadd.f32 %v4466, %v4404
    %v4468 = vadd.f32 %v4467, %v4405
    %v4469 = vadd.f32 %v4468, %v4406
    %v4470 = vrot.slane %v4469, 4
    %v4471 = vadd.f32 %v4469, %v4470
    %v4472 = vrot.slane %v4471, 2
    %v4473 = vadd.f32 %v4471, %v4472
    %v4474 = vrot.slane %v4473, 1
    %v4475 = vadd.f32 %v4473, %v4474
    %v4476 = vmul.f32 %v4343, %v4343
    %v4477 = vmul.f32 %v4344, %v4344
    %v4478 = vmul.f32 %v4345, %v4345
    %v4479 = vmul.f32 %v4346, %v4346
    %v4480 = vmul.f32 %v4347, %v4347
    %v4481 = vmul.f32 %v4348, %v4348
    %v4482 = vmul.f32 %v4349, %v4349
    %v4483 = vmul.f32 %v4350, %v4350
    %v4484 = vmul.f32 %v4351, %v4351
    %v4485 = vmul.f32 %v4352, %v4352
    %v4486 = vmul.f32 %v4353, %v4353
    %v4487 = vmul.f32 %v4354, %v4354
    %v4488 = vmul.f32 %v4355, %v4355
    %v4489 = vmul.f32 %v4356, %v4356
    %v4490 = vmul.f32 %v4357, %v4357
    %v4491 = vmul.f32 %v4358, %v4358
    %v4492 = vmul.f32 %v4359, %v4359
    %v4493 = vmul.f32 %v4360, %v4360
    %v4494 = vmul.f32 %v4361, %v4361
    %v4495 = vmul.f32 %v4362, %v4362
    %v4496 = vmul.f32 %v4363, %v4363
    %v4497 = vmul.f32 %v4364, %v4364
    %v4498 = vmul.f32 %v4365, %v4365
    %v4499 = vmul.f32 %v4366, %v4366
    %v4500 = vmul.f32 %v4367, %v4367
    %v4501 = vmul.f32 %v4368, %v4368
    %v4502 = vmul.f32 %v4369, %v4369
    %v4503 = vmul.f32 %v4370, %v4370
    %v4504 = vmul.f32 %v4371, %v4371
    %v4505 = vmul.f32 %v4372, %v4372
    %v4506 = vmul.f32 %v4373, %v4373
    %v4507 = vmul.f32 %v4374, %v4374
    %v4508 = vmul.f32 %v4375, %v4375
    %v4509 = vmul.f32 %v4376, %v4376
    %v4510 = vmul.f32 %v4377, %v4377
    %v4511 = vmul.f32 %v4378, %v4378
    %v4512 = vmul.f32 %v4379, %v4379
    %v4513 = vmul.f32 %v4380, %v4380
    %v4514 = vmul.f32 %v4381, %v4381
    %v4515 = vmul.f32 %v4382, %v4382
    %v4516 = vmul.f32 %v4383, %v4383
    %v4517 = vmul.f32 %v4384, %v4384
    %v4518 = vmul.f32 %v4385, %v4385
    %v4519 = vmul.f32 %v4386, %v4386
    %v4520 = vmul.f32 %v4387, %v4387
    %v4521 = vmul.f32 %v4388, %v4388
    %v4522 = vmul.f32 %v4389, %v4389
    %v4523 = vmul.f32 %v4390, %v4390
    %v4524 = vmul.f32 %v4391, %v4391
    %v4525 = vmul.f32 %v4392, %v4392
    %v4526 = vmul.f32 %v4393, %v4393
    %v4527 = vmul.f32 %v4394, %v4394
    %v4528 = vmul.f32 %v4395, %v4395
    %v4529 = vmul.f32 %v4396, %v4396
    %v4530 = vmul.f32 %v4397, %v4397
    %v4531 = vmul.f32 %v4398, %v4398
    %v4532 = vmul.f32 %v4399, %v4399
    %v4533 = vmul.f32 %v4400, %v4400
    %v4534 = vmul.f32 %v4401, %v4401
    %v4535 = vmul.f32 %v4402, %v4402
    %v4536 = vmul.f32 %v4403, %v4403
    %v4537 = vmul.f32 %v4404, %v4404
    %v4538 = vmul.f32 %v4405, %v4405
    %v4539 = vmul.f32 %v4406, %v4406
    %v4540 = vadd.f32 %v4476, %v4477
    %v4541 = vadd.f32 %v4540, %v4478
    %v4542 = vadd.f32 %v4541, %v4479
    %v4543 = vadd.f32 %v4542, %v4480
    %v4544 = vadd.f32 %v4543, %v4481
    %v4545 = vadd.f32 %v4544, %v4482
    %v4546 = vadd.f32 %v4545, %v4483
    %v4547 = vadd.f32 %v4546, %v4484
    %v4548 = vadd.f32 %v4547, %v4485
    %v4549 = vadd.f32 %v4548, %v4486
    %v4550 = vadd.f32 %v4549, %v4487
    %v4551 = vadd.f32 %v4550, %v4488
    %v4552 = vadd.f32 %v4551, %v4489
    %v4553 = vadd.f32 %v4552, %v4490
    %v4554 = vadd.f32 %v4553, %v4491
    %v4555 = vadd.f32 %v4554, %v4492
    %v4556 = vadd.f32 %v4555, %v4493
    %v4557 = vadd.f32 %v4556, %v4494
    %v4558 = vadd.f32 %v4557, %v4495
    %v4559 = vadd.f32 %v4558, %v4496
    %v4560 = vadd.f32 %v4559, %v4497
    %v4561 = vadd.f32 %v4560, %v4498
    %v4562 = vadd.f32 %v4561, %v4499
    %v4563 = vadd.f32 %v4562, %v4500
    %v4564 = vadd.f32 %v4563, %v4501
    %v4565 = vadd.f32 %v4564, %v4502
    %v4566 = vadd.f32 %v4565, %v4503
    %v4567 = vadd.f32 %v4566, %v4504
    %v4568 = vadd.f32 %v4567, %v4505
    %v4569 = vadd.f32 %v4568, %v4506
    %v4570 = vadd.f32 %v4569, %v4507
    %v4571 = vadd.f32 %v4570, %v4508
    %v4572 = vadd.f32 %v4571, %v4509
    %v4573 = vadd.f32 %v4572, %v4510
    %v4574 = vadd.f32 %v4573, %v4511
    %v4575 = vadd.f32 %v4574, %v4512
    %v4576 = vadd.f32 %v4575, %v4513
    %v4577 = vadd.f32 %v4576, %v4514
    %v4578 = vadd.f32 %v4577, %v4515
    %v4579 = vadd.f32 %v4578, %v4516
    %v4580 = vadd.f32 %v4579, %v4517
    %v4581 = vadd.f32 %v4580, %v4518
    %v4582 = vadd.f32 %v4581, %v4519
    %v4583 = vadd.f32 %v4582, %v4520
    %v4584 = vadd.f32 %v4583, %v4521
    %v4585 = vadd.f32 %v4584, %v4522
    %v4586 = vadd.f32 %v4585, %v4523
    %v4587 = vadd.f32 %v4586, %v4524
    %v4588 = vadd.f32 %v4587, %v4525
    %v4589 = vadd.f32 %v4588, %v4526
    %v4590 = vadd.f32 %v4589, %v4527
    %v4591 = vadd.f32 %v4590, %v4528
    %v4592 = vadd.f32 %v4591, %v4529
    %v4593 = vadd.f32 %v4592, %v4530
    %v4594 = vadd.f32 %v4593, %v4531
    %v4595 = vadd.f32 %v4594, %v4532
    %v4596 = vadd.f32 %v4595, %v4533
    %v4597 = vadd.f32 %v4596, %v4534
    %v4598 = vadd.f32 %v4597, %v4535
    %v4599 = vadd.f32 %v4598, %v4536
    %v4600 = vadd.f32 %v4599, %v4537
    %v4601 = vadd.f32 %v4600, %v4538
    %v4602 = vadd.f32 %v4601, %v4539
    %v4603 = vrot.slane %v4602, 4
    %v4604 = vadd.f32 %v4602, %v4603
    %v4605 = vrot.slane %v4604, 2
    %v4606 = vadd.f32 %v4604, %v4605
    %v4607 = vrot.slane %v4606, 1
    %v4608 = vadd.f32 %v4606, %v4607
    %vm4609 = vcmask 1040384
    %v4610 = vsel %vm4609, %v4475, %v4608
    %vm4611 = vcmask 1041408
    %v4612 = vsel %vm4611, %v4610, 0.0
    %4613 = vst [vmem:[#allocation9] sm:$0xff] %v4612
    // Predicated region
    $region26: #{tpu_custom_call.1} parent=1 // pred_check
      _
    $region27: #{tpu_custom_call.1} parent=1 // pred_check_branch
      %4615 = sbr.rel (0) target = $region29
    $region28: #{tpu_custom_call.1} parent=1 // pred_region
      %4617 = vsyncadd [#allocation4], 0
      %s4618 = sshll.u32 [#allocation8], 4
      %s4619 = int_to_ptr.vmem [resolvable:$true] %s4618
      %s4620 = sshll.u32 %s3, 4
      %s4621 = int_to_ptr.hbm [resolvable:$true] %s4620
      %4626 = dma.vmem_to_hbm [thread:$0]  %s4619, 8192, %s4621, [#allocation4], 128, 128, 8
    $region29: #{tpu_custom_call.1} parent=1 // pred_fallthru
      _
    // Predicated region
    $region30: #{tpu_custom_call.1} parent=1 // pred_check
      _
    $region31: #{tpu_custom_call.1} parent=1 // pred_check_branch
      %4628 = sbr.rel (0) target = $region33
    $region32: #{tpu_custom_call.1} parent=1 // pred_region
      %4630 = vsyncadd [#allocation10], 0
      %s4632 = sshll.u32 [#allocation9], 4
      %s4633 = int_to_ptr.vmem [resolvable:$true] %s4632
      %s4634 = sshll.u32 %s4, 4
      %s4635 = int_to_ptr.hbm [resolvable:$true] %s4634
      %4637 = dma.vmem_to_hbm [thread:$0]  %s4633, 128, %s4635, [#allocation10]
    $region33: #{tpu_custom_call.1} parent=1 // pred_fallthru
      _
    // Predicated region
    $region34: #{tpu_custom_call.1} parent=1 // pred_check
      _
    $region35: #{tpu_custom_call.1} parent=1 // pred_check_branch
      %4639 = sbr.rel (0) target = $region37
    $region36: #{tpu_custom_call.1} parent=1 // pred_region
      %4641 = dma.done [#allocation4], 8192
    $region37: #{tpu_custom_call.1} parent=1 // pred_fallthru
      _
    // Predicated region
    $region38: #{tpu_custom_call.1} parent=1 // pred_check
      _
    $region39: #{tpu_custom_call.1} parent=1 // pred_check_branch
      %4643 = sbr.rel (0) target = $region41
    $region40: #{tpu_custom_call.1} parent=1 // pred_region
      %4645 = dma.done [#allocation10], 128
    $region41: #{tpu_custom_call.1} parent=1 // pred_fallthru
      _
    %4646 = vsyncpa [#allocation3], 1
    %4647 = vsyncpa [#allocation6], 1
    %4648 = vsyncpa [#allocation4], 1
    %4649 = vsyncpa [#allocation10], 1

</llo_original>
